<compile_context>
chip_gen: v7x
topology: tpu7x:2x2x1
jax: 0.10.0
libtpu: 0.0.40
codegen_flags: <defaults>
</compile_context>

<pallas_src>
import functools

import jax
import jax.numpy as jnp
from jax import lax
from jax.experimental import pallas as pl
from jax.experimental.pallas import tpu as pltpu

_BN_EPS = 1e-5


def _conv_stats_kernel(x_ref, w_ref, y_ref, stats_ref, *, th, out_w, cin, cout):
    """One (batch, row-tile) step of the 3x3 / stride-1 / pad-1 conv.

    x_ref    : (H+2, W+2, Cin)  padded NHWC image of this batch element (bf16)
    w_ref    : (9, Cin, Cout)   taps in (kh*3 + kw) order                (bf16)
    y_ref    : (Cout, th*W)     channel-major pre-BN conv tile           (bf16)
    stats_ref: (2, Cout)        per-tile [sum, sum_sq] BN partials       (f32)
    """
    t = pl.program_id(1)
    r0 = pl.multiple_of(t * th, th)          # first padded input row of tile

    # Per-tap accumulation: nine K=Cin MXU matmuls, f32 accumulation.  No
    # im2col patch is ever materialised (no lane concat, no 576-wide reshape).
    acc = jnp.zeros((th * out_w, cout), dtype=jnp.float32)
    for k in range(9):
        dh, dw = divmod(k, 3)
        xs = x_ref[pl.ds(r0 + dh, th), pl.ds(dw, out_w), :]       # (th, W, Cin)
        xs = xs.reshape(th * out_w, cin)     # leading-dim collapse (layout-free)
        acc = acc + jnp.dot(xs, w_ref[k], preferred_element_type=jnp.float32)

    # Per-tile BN partials in f32 (sublane reductions), before the bf16 cast.
    psum = jnp.sum(acc, axis=0, keepdims=True)
    psq = jnp.sum(acc * acc, axis=0, keepdims=True)
    stats_ref[...] = jnp.concatenate([psum, psq], axis=0)

    # Channel-major, lane-dense store (last dim th*W is a multiple of 128 or
    # the full H*W extent); bf16 halves inter-pass HBM traffic.
    y_ref[...] = jnp.transpose(acc).astype(y_ref.dtype)


def _bn_apply_kernel(y_ref, scale_ref, shift_ref, o_ref):
    """Lane-dense per-row affine: o = y * scale + shift (f32 math)."""
    o_ref[...] = y_ref[...].astype(jnp.float32) * scale_ref[...] + shift_ref[...]


def _pick_row_tile(h, w, target_rows=1024):
    """Output rows per conv step: the whole image when it fits the target,
    otherwise the largest divisor of h whose th*w is a multiple of 128."""
    if h * w <= target_rows:
        return h
    for th in range(h - 1, 0, -1):
        if h % th == 0 and th * w <= target_rows and (th * w) % 128 == 0:
            return th
    return h  # fallback: whole image per step (rely on the VMEM limit)


def _pick_bn_rows(total_rows, lane_width, *, budget_bytes=24 * 1024 * 1024,
                  min_steps=2):
    """Rows per BN step: as fat as a conservative VMEM byte budget allows
    (bf16 in + f32 out, double-buffered) while keeping >= min_steps grid
    steps (v7x has 2 TensorCores) and respecting the (8, 128) constraint."""
    per_row = lane_width * (2 + 4) * 2       # in(bf16)+out(f32), 2 buffers each
    cap = max(8, budget_bytes // per_row)
    cap = min(cap, total_rows)
    if total_rows >= 16:
        cap = min(cap, total_rows // min_steps)
    for r in range(cap, 0, -1):
        if total_rows % r == 0 and (r % 8 == 0 or r == total_rows):
            return r
    return total_rows


def post_residual_convolution(x_nchw, w, b, gamma, beta):
    """x_nchw: (N, Cin, H, W); w: (Cout, Cin, 3, 3); b/gamma/beta: (Cout,).

    Forward-equivalent to nn.BatchNorm2d(nn.Conv2d(x)) in training mode.
    The conv bias is a per-channel constant added before training-mode BN and
    therefore cancels exactly in the mean subtraction; it is not computed."""
    del b  # provably a no-op under training-mode BatchNorm
    N, Cin, H, W = x_nchw.shape
    Cout = w.shape[0]
    HW = H * W

    # Layout glue (one fused XLA copy): NCHW -> NHWC, zero-pad halo, cast the
    # MXU operands to bf16 (accumulation stays f32), pack taps as (9,Cin,Cout).
    x_nhwc = jnp.transpose(x_nchw, (0, 2, 3, 1))
    x_pad = jnp.pad(x_nhwc, ((0, 0), (1, 1), (1, 1), (0, 0))).astype(jnp.bfloat16)
    w_taps = jnp.transpose(w, (2, 3, 1, 0)).reshape(9, Cin, Cout).astype(jnp.bfloat16)

    TH = _pick_row_tile(H, W)                # output rows per grid step
    HT = H // TH

    # ---------------- Pass 1: conv + per-tile BN partial sums ---------------
    conv_cm, stats = pl.pallas_call(
        functools.partial(_conv_stats_kernel, th=TH, out_w=W, cin=Cin, cout=Cout),
        out_shape=(
            jax.ShapeDtypeStruct((N, Cout, HW), jnp.bfloat16),
            jax.ShapeDtypeStruct((N, HT, 2, Cout), jnp.float32),
        ),
        grid_spec=pltpu.PrefetchScalarGridSpec(
            num_scalar_prefetch=0,
            grid=(N, HT),
            in_specs=[
                # TODO(synk): for very large H*W*Cin on v7x (64 MiB VMEM), switch
                # this to a halo row-tile (manual make_async_copy of TH+2 rows);
                # at these sizes one padded image is tens of KiB and
                # double-buffers comfortably.
                pl.BlockSpec((None, H + 2, W + 2, Cin), lambda n, t: (n, 0, 0, 0)),
                pl.BlockSpec((9, Cin, Cout), lambda n, t: (0, 0, 0)),
            ],
            out_specs=(
                pl.BlockSpec((None, Cout, TH * W), lambda n, t: (n, 0, t)),
                pl.BlockSpec((None, None, 2, Cout), lambda n, t: (n, t, 0, 0)),
            ),
        ),
        compiler_params=pltpu.CompilerParams(
            dimension_semantics=("parallel", "parallel"),
            vmem_limit_bytes=32 * 1024 * 1024,
        ),
    )(x_pad, w_taps)

    # Global BN statistics (tiny: N*HT*2*Cout elements) and folded affine.
    count = jnp.float32(N * HW)
    sums = jnp.sum(stats, axis=(0, 1))                      # (2, Cout)
    mean = sums[0] / count
    var = jnp.maximum(sums[1] / count - mean * mean, 0.0)   # clamp before rsqrt
    inv = lax.rsqrt(var + _BN_EPS)
    scale = gamma.astype(jnp.float32) * inv
    shift = beta.astype(jnp.float32) - mean * scale

    # ---------------- Pass 2: lane-dense normalize, writes NCHW -------------
    rows = N * Cout
    conv_flat = conv_cm.reshape(rows, HW)                   # free reshape
    scale_col = jnp.tile(scale, N).reshape(rows, 1)
    shift_col = jnp.tile(shift, N).reshape(rows, 1)

    TR = _pick_bn_rows(rows, HW)
    out_flat = pl.pallas_call(
        _bn_apply_kernel,
        out_shape=jax.ShapeDtypeStruct((rows, HW), jnp.float32),
        grid_spec=pltpu.PrefetchScalarGridSpec(
            num_scalar_prefetch=0,
            grid=(rows // TR,),
            in_specs=[
                pl.BlockSpec((TR, HW), lambda i: (i, 0)),
                pl.BlockSpec((TR, 1), lambda i: (i, 0)),
                pl.BlockSpec((TR, 1), lambda i: (i, 0)),
            ],
            out_specs=pl.BlockSpec((TR, HW), lambda i: (i, 0)),
        ),
        compiler_params=pltpu.CompilerParams(
            dimension_semantics=("parallel",),
            vmem_limit_bytes=32 * 1024 * 1024,
        ),
    )(conv_flat, scale_col, shift_col)

    # (N*Cout, H*W) is already NCHW order — no output transpose pass.
    return out_flat.reshape(N, Cout, H, W)


def _reference(x_nchw, w, b, gamma, beta, *, conv_dtype=jnp.float32,
               use_bias=True, bf16_intermediate=False):
    """Pure-JAX reference: conv2d (NCHW) + BatchNorm2d in training mode."""
    y = lax.conv_general_dilated(
        x_nchw.astype(conv_dtype), w.astype(conv_dtype),
        window_strides=(1, 1), padding=((1, 1), (1, 1)),
        dimension_numbers=("NCHW", "OIHW", "NCHW"),
        preferred_element_type=jnp.float32)
    if use_bias:
        y = y + b.reshape(1, -1, 1, 1)
    mean = jnp.mean(y, axis=(0, 2, 3), keepdims=True)
    var = jnp.mean((y - mean) ** 2, axis=(0, 2, 3), keepdims=True)
    sc = gamma.reshape(1, -1, 1, 1) * lax.rsqrt(var + _BN_EPS)
    sh = beta.reshape(1, -1, 1, 1) - mean * sc
    if bf16_intermediate:
        y = y.astype(jnp.bfloat16).astype(jnp.float32)
    return y * sc + sh


if __name__ == "__main__":
    key = jax.random.PRNGKey(0)
    N, C, H, W = 2, 64, 16, 16          # module default in_channels=64

    kx, kw, kb, kg, kbe = jax.random.split(key, 5)
    x = jax.random.normal(kx, (N, C, H, W), dtype=jnp.float32)
    fan_in = C * 3 * 3
    bound = 1.0 / (fan_in ** 0.5)
    w = jax.random.uniform(kw, (C, C, 3, 3), minval=-bound, maxval=bound,
                           dtype=jnp.float32)
    b = jax.random.uniform(kb, (C,), minval=-bound, maxval=bound,
                           dtype=jnp.float32)
    gamma = 1.0 + 0.1 * jax.random.normal(kg, (C,), dtype=jnp.float32)
    beta = 0.1 * jax.random.normal(kbe, (C,), dtype=jnp.float32)

    out = jax.jit(post_residual_convolution)(x, w, b, gamma, beta)
    out = jax.block_until_ready(out)
    assert out.shape == (N, C, H, W)

    # Tight check vs a reference with matched precision choices (bf16 conv
    # operands, f32 stats, bf16 inter-pass intermediate, bias dropped — the
    # bias cancels exactly under training-mode BN).
    ref_matched = _reference(x, w, b, gamma, beta, conv_dtype=jnp.bfloat16,
                             use_bias=False, bf16_intermediate=True)
    err_matched = float(jnp.max(jnp.abs(out - ref_matched)))
    # Loose check vs the full-f32 PyTorch-equivalent reference (difference is
    # the intentional bf16 operand / intermediate rounding).
    ref_f32 = _reference(x, w, b, gamma, beta, conv_dtype=jnp.float32)
    err_f32 = float(jnp.max(jnp.abs(out - ref_f32)))

    assert err_matched < 1e-2, f"mismatch vs matched-precision reference: {err_matched}"
    assert err_f32 < 1e-1, f"mismatch vs f32 reference: {err_f32}"

    print("KERNEL_OK")
</pallas_src>

<mosaic_0001>
module attributes {stable_mosaic.version = 11 : i64} {
  func.func @_conv_stats_kernel(%arg0: i32, %arg1: i32, %arg2: memref<1x18x18x64xbf16, #tpu.memory_space<vmem>>, %arg3: memref<9x64x64xbf16, #tpu.memory_space<vmem>>, %arg4: memref<1x64x256xbf16, #tpu.memory_space<vmem>>, %arg5: memref<1x1x2x64xf32, #tpu.memory_space<vmem>>) attributes {dimension_semantics = [#tpu.dimension_semantics<parallel>, #tpu.dimension_semantics<parallel>], iteration_bounds = array<i64: 2, 1>, scalar_prefetch = 0 : i64, scratch_operands = 0 : i64, tpu.core_type = #tpu.core_type<tc>, window_params = [{transform_indices = @transform_0, window_bounds = array<i64: 1, 18, 18, 64>}, {pipeline_mode = #tpu.pipeline_mode<synchronous>, transform_indices = @transform_1, window_bounds = array<i64: 9, 64, 64>}, {transform_indices = @transform_2, window_bounds = array<i64: 1, 64, 256>}, {transform_indices = @transform_3, window_bounds = array<i64: 1, 1, 2, 64>}]} {
    %c16_i32 = arith.constant 16 : i32
    %0 = arith.muli %arg1, %c16_i32 : i32
    %1 = tpu.assume_multiple %0, 16 : i32
    %cst = arith.constant 0.000000e+00 : f32
    %2 = vector.broadcast %cst : f32 to vector<256x64xf32>
    %c0_i32 = arith.constant 0 : i32
    %3 = arith.addi %1, %c0_i32 : i32
    %c0 = arith.constant 0 : index
    %4 = arith.index_cast %3 : i32 to index
    %c0_0 = arith.constant 0 : index
    %c0_1 = arith.constant 0 : index
    %5 = vector.load %arg2[%c0, %4, %c0_0, %c0_1] : memref<1x18x18x64xbf16, #tpu.memory_space<vmem>>, vector<1x16x16x64xbf16>
    %6 = vector.shape_cast %5 : vector<1x16x16x64xbf16> to vector<16x16x64xbf16>
    %7 = vector.shape_cast %6 : vector<16x16x64xbf16> to vector<256x64xbf16>
    %c0_2 = arith.constant 0 : index
    %c0_3 = arith.constant 0 : index
    %c0_4 = arith.constant 0 : index
    %8 = vector.load %arg3[%c0_2, %c0_3, %c0_4] : memref<9x64x64xbf16, #tpu.memory_space<vmem>>, vector<1x64x64xbf16>
    %9 = vector.shape_cast %8 : vector<1x64x64xbf16> to vector<64x64xbf16>
    %cst_5 = arith.constant dense<0.000000e+00> : vector<256x64xf32>
    %10 = tpu.matmul %7, %9, %cst_5 {dimension_numbers = #tpu.dot_dimension_numbers<[1], [0], [0], [1], [0, 0, 1, 1], [], []>} : vector<256x64xbf16>, vector<64x64xbf16>, vector<256x64xf32> -> vector<256x64xf32>
    %11 = arith.addf %2, %10 : vector<256x64xf32>
    %c0_i32_6 = arith.constant 0 : i32
    %12 = arith.addi %1, %c0_i32_6 : i32
    %c0_7 = arith.constant 0 : index
    %13 = arith.index_cast %12 : i32 to index
    %c1 = arith.constant 1 : index
    %c0_8 = arith.constant 0 : index
    %14 = vector.load %arg2[%c0_7, %13, %c1, %c0_8] : memref<1x18x18x64xbf16, #tpu.memory_space<vmem>>, vector<1x16x16x64xbf16>
    %15 = vector.shape_cast %14 : vector<1x16x16x64xbf16> to vector<16x16x64xbf16>
    %16 = vector.shape_cast %15 : vector<16x16x64xbf16> to vector<256x64xbf16>
    %c1_9 = arith.constant 1 : index
    %c0_10 = arith.constant 0 : index
    %c0_11 = arith.constant 0 : index
    %17 = vector.load %arg3[%c1_9, %c0_10, %c0_11] : memref<9x64x64xbf16, #tpu.memory_space<vmem>>, vector<1x64x64xbf16>
    %18 = vector.shape_cast %17 : vector<1x64x64xbf16> to vector<64x64xbf16>
    %cst_12 = arith.constant dense<0.000000e+00> : vector<256x64xf32>
    %19 = tpu.matmul %16, %18, %cst_12 {dimension_numbers = #tpu.dot_dimension_numbers<[1], [0], [0], [1], [0, 0, 1, 1], [], []>} : vector<256x64xbf16>, vector<64x64xbf16>, vector<256x64xf32> -> vector<256x64xf32>
    %20 = arith.addf %11, %19 : vector<256x64xf32>
    %c0_i32_13 = arith.constant 0 : i32
    %21 = arith.addi %1, %c0_i32_13 : i32
    %c0_14 = arith.constant 0 : index
    %22 = arith.index_cast %21 : i32 to index
    %c2 = arith.constant 2 : index
    %c0_15 = arith.constant 0 : index
    %23 = vector.load %arg2[%c0_14, %22, %c2, %c0_15] : memref<1x18x18x64xbf16, #tpu.memory_space<vmem>>, vector<1x16x16x64xbf16>
    %24 = vector.shape_cast %23 : vector<1x16x16x64xbf16> to vector<16x16x64xbf16>
    %25 = vector.shape_cast %24 : vector<16x16x64xbf16> to vector<256x64xbf16>
    %c2_16 = arith.constant 2 : index
    %c0_17 = arith.constant 0 : index
    %c0_18 = arith.constant 0 : index
    %26 = vector.load %arg3[%c2_16, %c0_17, %c0_18] : memref<9x64x64xbf16, #tpu.memory_space<vmem>>, vector<1x64x64xbf16>
    %27 = vector.shape_cast %26 : vector<1x64x64xbf16> to vector<64x64xbf16>
    %cst_19 = arith.constant dense<0.000000e+00> : vector<256x64xf32>
    %28 = tpu.matmul %25, %27, %cst_19 {dimension_numbers = #tpu.dot_dimension_numbers<[1], [0], [0], [1], [0, 0, 1, 1], [], []>} : vector<256x64xbf16>, vector<64x64xbf16>, vector<256x64xf32> -> vector<256x64xf32>
    %29 = arith.addf %20, %28 : vector<256x64xf32>
    %c1_i32 = arith.constant 1 : i32
    %30 = arith.addi %1, %c1_i32 : i32
    %c0_20 = arith.constant 0 : index
    %31 = arith.index_cast %30 : i32 to index
    %c0_21 = arith.constant 0 : index
    %c0_22 = arith.constant 0 : index
    %32 = vector.load %arg2[%c0_20, %31, %c0_21, %c0_22] : memref<1x18x18x64xbf16, #tpu.memory_space<vmem>>, vector<1x16x16x64xbf16>
    %33 = vector.shape_cast %32 : vector<1x16x16x64xbf16> to vector<16x16x64xbf16>
    %34 = vector.shape_cast %33 : vector<16x16x64xbf16> to vector<256x64xbf16>
    %c3 = arith.constant 3 : index
    %c0_23 = arith.constant 0 : index
    %c0_24 = arith.constant 0 : index
    %35 = vector.load %arg3[%c3, %c0_23, %c0_24] : memref<9x64x64xbf16, #tpu.memory_space<vmem>>, vector<1x64x64xbf16>
    %36 = vector.shape_cast %35 : vector<1x64x64xbf16> to vector<64x64xbf16>
    %cst_25 = arith.constant dense<0.000000e+00> : vector<256x64xf32>
    %37 = tpu.matmul %34, %36, %cst_25 {dimension_numbers = #tpu.dot_dimension_numbers<[1], [0], [0], [1], [0, 0, 1, 1], [], []>} : vector<256x64xbf16>, vector<64x64xbf16>, vector<256x64xf32> -> vector<256x64xf32>
    %38 = arith.addf %29, %37 : vector<256x64xf32>
    %c1_i32_26 = arith.constant 1 : i32
    %39 = arith.addi %1, %c1_i32_26 : i32
    %c0_27 = arith.constant 0 : index
    %40 = arith.index_cast %39 : i32 to index
    %c1_28 = arith.constant 1 : index
    %c0_29 = arith.constant 0 : index
    %41 = vector.load %arg2[%c0_27, %40, %c1_28, %c0_29] : memref<1x18x18x64xbf16, #tpu.memory_space<vmem>>, vector<1x16x16x64xbf16>
    %42 = vector.shape_cast %41 : vector<1x16x16x64xbf16> to vector<16x16x64xbf16>
    %43 = vector.shape_cast %42 : vector<16x16x64xbf16> to vector<256x64xbf16>
    %c4 = arith.constant 4 : index
    %c0_30 = arith.constant 0 : index
    %c0_31 = arith.constant 0 : index
    %44 = vector.load %arg3[%c4, %c0_30, %c0_31] : memref<9x64x64xbf16, #tpu.memory_space<vmem>>, vector<1x64x64xbf16>
    %45 = vector.shape_cast %44 : vector<1x64x64xbf16> to vector<64x64xbf16>
    %cst_32 = arith.constant dense<0.000000e+00> : vector<256x64xf32>
    %46 = tpu.matmul %43, %45, %cst_32 {dimension_numbers = #tpu.dot_dimension_numbers<[1], [0], [0], [1], [0, 0, 1, 1], [], []>} : vector<256x64xbf16>, vector<64x64xbf16>, vector<256x64xf32> -> vector<256x64xf32>
    %47 = arith.addf %38, %46 : vector<256x64xf32>
    %c1_i32_33 = arith.constant 1 : i32
    %48 = arith.addi %1, %c1_i32_33 : i32
    %c0_34 = arith.constant 0 : index
    %49 = arith.index_cast %48 : i32 to index
    %c2_35 = arith.constant 2 : index
    %c0_36 = arith.constant 0 : index
    %50 = vector.load %arg2[%c0_34, %49, %c2_35, %c0_36] : memref<1x18x18x64xbf16, #tpu.memory_space<vmem>>, vector<1x16x16x64xbf16>
    %51 = vector.shape_cast %50 : vector<1x16x16x64xbf16> to vector<16x16x64xbf16>
    %52 = vector.shape_cast %51 : vector<16x16x64xbf16> to vector<256x64xbf16>
    %c5 = arith.constant 5 : index
    %c0_37 = arith.constant 0 : index
    %c0_38 = arith.constant 0 : index
    %53 = vector.load %arg3[%c5, %c0_37, %c0_38] : memref<9x64x64xbf16, #tpu.memory_space<vmem>>, vector<1x64x64xbf16>
    %54 = vector.shape_cast %53 : vector<1x64x64xbf16> to vector<64x64xbf16>
    %cst_39 = arith.constant dense<0.000000e+00> : vector<256x64xf32>
    %55 = tpu.matmul %52, %54, %cst_39 {dimension_numbers = #tpu.dot_dimension_numbers<[1], [0], [0], [1], [0, 0, 1, 1], [], []>} : vector<256x64xbf16>, vector<64x64xbf16>, vector<256x64xf32> -> vector<256x64xf32>
    %56 = arith.addf %47, %55 : vector<256x64xf32>
    %c2_i32 = arith.constant 2 : i32
    %57 = arith.addi %1, %c2_i32 : i32
    %c0_40 = arith.constant 0 : index
    %58 = arith.index_cast %57 : i32 to index
    %c0_41 = arith.constant 0 : index
    %c0_42 = arith.constant 0 : index
    %59 = vector.load %arg2[%c0_40, %58, %c0_41, %c0_42] : memref<1x18x18x64xbf16, #tpu.memory_space<vmem>>, vector<1x16x16x64xbf16>
    %60 = vector.shape_cast %59 : vector<1x16x16x64xbf16> to vector<16x16x64xbf16>
    %61 = vector.shape_cast %60 : vector<16x16x64xbf16> to vector<256x64xbf16>
    %c6 = arith.constant 6 : index
    %c0_43 = arith.constant 0 : index
    %c0_44 = arith.constant 0 : index
    %62 = vector.load %arg3[%c6, %c0_43, %c0_44] : memref<9x64x64xbf16, #tpu.memory_space<vmem>>, vector<1x64x64xbf16>
    %63 = vector.shape_cast %62 : vector<1x64x64xbf16> to vector<64x64xbf16>
    %cst_45 = arith.constant dense<0.000000e+00> : vector<256x64xf32>
    %64 = tpu.matmul %61, %63, %cst_45 {dimension_numbers = #tpu.dot_dimension_numbers<[1], [0], [0], [1], [0, 0, 1, 1], [], []>} : vector<256x64xbf16>, vector<64x64xbf16>, vector<256x64xf32> -> vector<256x64xf32>
    %65 = arith.addf %56, %64 : vector<256x64xf32>
    %c2_i32_46 = arith.constant 2 : i32
    %66 = arith.addi %1, %c2_i32_46 : i32
    %c0_47 = arith.constant 0 : index
    %67 = arith.index_cast %66 : i32 to index
    %c1_48 = arith.constant 1 : index
    %c0_49 = arith.constant 0 : index
    %68 = vector.load %arg2[%c0_47, %67, %c1_48, %c0_49] : memref<1x18x18x64xbf16, #tpu.memory_space<vmem>>, vector<1x16x16x64xbf16>
    %69 = vector.shape_cast %68 : vector<1x16x16x64xbf16> to vector<16x16x64xbf16>
    %70 = vector.shape_cast %69 : vector<16x16x64xbf16> to vector<256x64xbf16>
    %c7 = arith.constant 7 : index
    %c0_50 = arith.constant 0 : index
    %c0_51 = arith.constant 0 : index
    %71 = vector.load %arg3[%c7, %c0_50, %c0_51] : memref<9x64x64xbf16, #tpu.memory_space<vmem>>, vector<1x64x64xbf16>
    %72 = vector.shape_cast %71 : vector<1x64x64xbf16> to vector<64x64xbf16>
    %cst_52 = arith.constant dense<0.000000e+00> : vector<256x64xf32>
    %73 = tpu.matmul %70, %72, %cst_52 {dimension_numbers = #tpu.dot_dimension_numbers<[1], [0], [0], [1], [0, 0, 1, 1], [], []>} : vector<256x64xbf16>, vector<64x64xbf16>, vector<256x64xf32> -> vector<256x64xf32>
    %74 = arith.addf %65, %73 : vector<256x64xf32>
    %c2_i32_53 = arith.constant 2 : i32
    %75 = arith.addi %1, %c2_i32_53 : i32
    %c0_54 = arith.constant 0 : index
    %76 = arith.index_cast %75 : i32 to index
    %c2_55 = arith.constant 2 : index
    %c0_56 = arith.constant 0 : index
    %77 = vector.load %arg2[%c0_54, %76, %c2_55, %c0_56] : memref<1x18x18x64xbf16, #tpu.memory_space<vmem>>, vector<1x16x16x64xbf16>
    %78 = vector.shape_cast %77 : vector<1x16x16x64xbf16> to vector<16x16x64xbf16>
    %79 = vector.shape_cast %78 : vector<16x16x64xbf16> to vector<256x64xbf16>
    %c8 = arith.constant 8 : index
    %c0_57 = arith.constant 0 : index
    %c0_58 = arith.constant 0 : index
    %80 = vector.load %arg3[%c8, %c0_57, %c0_58] : memref<9x64x64xbf16, #tpu.memory_space<vmem>>, vector<1x64x64xbf16>
    %81 = vector.shape_cast %80 : vector<1x64x64xbf16> to vector<64x64xbf16>
    %cst_59 = arith.constant dense<0.000000e+00> : vector<256x64xf32>
    %82 = tpu.matmul %79, %81, %cst_59 {dimension_numbers = #tpu.dot_dimension_numbers<[1], [0], [0], [1], [0, 0, 1, 1], [], []>} : vector<256x64xbf16>, vector<64x64xbf16>, vector<256x64xf32> -> vector<256x64xf32>
    %83 = arith.addf %74, %82 : vector<256x64xf32>
    %cst_60 = arith.constant dense<0.000000e+00> : vector<64xf32>
    %84 = vector.multi_reduction <add>, %83, %cst_60 [0] : vector<256x64xf32> to vector<64xf32>
    %85 = vector.shape_cast %84 : vector<64xf32> to vector<1x64xf32>
    %86 = arith.mulf %83, %83 : vector<256x64xf32>
    %cst_61 = arith.constant dense<0.000000e+00> : vector<64xf32>
    %87 = vector.multi_reduction <add>, %86, %cst_61 [0] : vector<256x64xf32> to vector<64xf32>
    %88 = vector.shape_cast %87 : vector<64xf32> to vector<1x64xf32>
    %89 = tpu.concatenate %85, %88 in 0 : vector<1x64xf32>, vector<1x64xf32> -> vector<2x64xf32>
    %c0_62 = arith.constant 0 : index
    %c0_63 = arith.constant 0 : index
    %c0_64 = arith.constant 0 : index
    %c0_65 = arith.constant 0 : index
    %90 = vector.load %arg5[%c0_62, %c0_63, %c0_64, %c0_65] : memref<1x1x2x64xf32, #tpu.memory_space<vmem>>, vector<1x1x2x64xf32>
    %91 = vector.shape_cast %90 : vector<1x1x2x64xf32> to vector<2x64xf32>
    %92 = vector.shape_cast %89 : vector<2x64xf32> to vector<1x1x2x64xf32>
    tpu.vector_store %arg5[%c0_62, %c0_63, %c0_64, %c0_65], %92 {strides = array<i32>} : memref<1x1x2x64xf32, #tpu.memory_space<vmem>>, vector<1x1x2x64xf32>,
    %93 = tpu.transpose %83, [1, 0] : vector<256x64xf32> -> vector<64x256xf32>
    %94 = arith.truncf %93 : vector<64x256xf32> to vector<64x256xbf16>
    %c0_66 = arith.constant 0 : index
    %c0_67 = arith.constant 0 : index
    %c0_68 = arith.constant 0 : index
    %95 = vector.load %arg4[%c0_66, %c0_67, %c0_68] : memref<1x64x256xbf16, #tpu.memory_space<vmem>>, vector<1x64x256xbf16>
    %96 = vector.shape_cast %95 : vector<1x64x256xbf16> to vector<64x256xbf16>
    %97 = vector.shape_cast %94 : vector<64x256xbf16> to vector<1x64x256xbf16>
    tpu.vector_store %arg4[%c0_66, %c0_67, %c0_68], %97 {strides = array<i32>} : memref<1x64x256xbf16, #tpu.memory_space<vmem>>, vector<1x64x256xbf16>,
    return
  }
  func.func @transform_0(%arg0: i32, %arg1: i32) -> (i32, i32, i32, i32) {
    %c0_i32 = arith.constant 0 : i32
    %c0_i32_0 = arith.constant 0 : i32
    %c0_i32_1 = arith.constant 0 : i32
    %c0_i32_2 = arith.constant 0 : i32
    return %arg0, %c0_i32, %c0_i32_0, %c0_i32_1 : i32, i32, i32, i32
  }
  func.func @transform_1(%arg0: i32, %arg1: i32) -> (i32, i32, i32) {
    %c0_i32 = arith.constant 0 : i32
    %c0_i32_0 = arith.constant 0 : i32
    %c0_i32_1 = arith.constant 0 : i32
    %c0_i32_2 = arith.constant 0 : i32
    return %c0_i32, %c0_i32_0, %c0_i32_1 : i32, i32, i32
  }
  func.func @transform_2(%arg0: i32, %arg1: i32) -> (i32, i32, i32) {
    %c0_i32 = arith.constant 0 : i32
    %c0_i32_0 = arith.constant 0 : i32
    return %arg0, %c0_i32, %arg1 : i32, i32, i32
  }
  func.func @transform_3(%arg0: i32, %arg1: i32) -> (i32, i32, i32, i32) {
    %c0_i32 = arith.constant 0 : i32
    %c0_i32_0 = arith.constant 0 : i32
    %c0_i32_1 = arith.constant 0 : i32
    return %arg0, %arg1, %c0_i32, %c0_i32_0 : i32, i32, i32, i32
  }
}

module attributes {stable_mosaic.version = 11 : i64} {
  func.func @_bn_apply_kernel(%arg0: i32, %arg1: memref<64x256xbf16, #tpu.memory_space<vmem>>, %arg2: memref<64x1xf32, #tpu.memory_space<vmem>>, %arg3: memref<64x1xf32, #tpu.memory_space<vmem>>, %arg4: memref<64x256xf32, #tpu.memory_space<vmem>>) attributes {dimension_semantics = [#tpu.dimension_semantics<parallel>], iteration_bounds = array<i64: 2>, scalar_prefetch = 0 : i64, scratch_operands = 0 : i64, tpu.core_type = #tpu.core_type<tc>, window_params = [{transform_indices = @transform_0, window_bounds = array<i64: 64, 256>}, {transform_indices = @transform_1, window_bounds = array<i64: 64, 1>}, {transform_indices = @transform_2, window_bounds = array<i64: 64, 1>}, {transform_indices = @transform_3, window_bounds = array<i64: 64, 256>}]} {
    %c0 = arith.constant 0 : index
    %c0_0 = arith.constant 0 : index
    %0 = vector.load %arg1[%c0, %c0_0] : memref<64x256xbf16, #tpu.memory_space<vmem>>, vector<64x256xbf16>
    %1 = arith.extf %0 : vector<64x256xbf16> to vector<64x256xf32>
    %c0_1 = arith.constant 0 : index
    %c0_2 = arith.constant 0 : index
    %2 = vector.load %arg2[%c0_1, %c0_2] : memref<64x1xf32, #tpu.memory_space<vmem>>, vector<64x1xf32>
    %3 = vector.broadcast %2 : vector<64x1xf32> to vector<64x256xf32>
    %4 = arith.mulf %1, %3 : vector<64x256xf32>
    %c0_3 = arith.constant 0 : index
    %c0_4 = arith.constant 0 : index
    %5 = vector.load %arg3[%c0_3, %c0_4] : memref<64x1xf32, #tpu.memory_space<vmem>>, vector<64x1xf32>
    %6 = vector.broadcast %5 : vector<64x1xf32> to vector<64x256xf32>
    %7 = arith.addf %4, %6 : vector<64x256xf32>
    %c0_5 = arith.constant 0 : index
    %c0_6 = arith.constant 0 : index
    %8 = vector.load %arg4[%c0_5, %c0_6] : memref<64x256xf32, #tpu.memory_space<vmem>>, vector<64x256xf32>
    tpu.vector_store %arg4[%c0_5, %c0_6], %7 {strides = array<i32>} : memref<64x256xf32, #tpu.memory_space<vmem>>, vector<64x256xf32>,
    return
  }
  func.func @transform_0(%arg0: i32) -> (i32, i32) {
    %c0_i32 = arith.constant 0 : i32
    %c0_i32_0 = arith.constant 0 : i32
    return %arg0, %c0_i32 : i32, i32
  }
  func.func @transform_1(%arg0: i32) -> (i32, i32) {
    %c0_i32 = arith.constant 0 : i32
    %c0_i32_0 = arith.constant 0 : i32
    return %arg0, %c0_i32 : i32, i32
  }
  func.func @transform_2(%arg0: i32) -> (i32, i32) {
    %c0_i32 = arith.constant 0 : i32
    %c0_i32_0 = arith.constant 0 : i32
    return %arg0, %c0_i32 : i32, i32
  }
  func.func @transform_3(%arg0: i32) -> (i32, i32) {
    %c0_i32 = arith.constant 0 : i32
    %c0_i32_0 = arith.constant 0 : i32
    return %arg0, %c0_i32 : i32, i32
  }
}

</mosaic_0001>

<llo_original>
// kernel: tile.18
$region0: #{tile.18}
  #allocation0 [shape = 's32[1]{0}', space=sflag, size = 0x4, scoped, tag = 'scoped memory for tile.18']
  %s0 = inlined_call_operand.vmem [shape: f32[64], index: 0, kind: input, shape index: {}]
  %s1 = inlined_call_operand.vmem [shape: f32[2,64], index: 1, kind: output, shape index: {}]
  // Predicated region
  $region2: #{tile.18} parent=0 // pred_check
    _
  $region3: #{tile.18} parent=0 // pred_check_branch
    %3 = sbr.rel (0) target = $region5
  $region4: #{tile.18} parent=0 // pred_region
    _
  $region5: #{tile.18} parent=0 // pred_fallthru
    _
  %v4 = vld [vmem:[%s0] ss:$0 sm:$0xff]
  %5 = vst [vmem:[%s1] sm:$0x3] %v4

// kernel: tile.0
$region0: #{tile.0}
  %s0 = inlined_call_operand.vmem [shape: f32[2,64], index: 0, kind: input, shape index: {}]
  %s1 = inlined_call_operand.vmem [shape: f32[128,1], index: 1, kind: output, shape index: {}]
  $region1: #{tile.0} parent=0
    #allocation0 [shape = 'u8[4096]{0}', space=vmem, size = 0x1000, scoped, tag = 'scoped mem for input reshape']
    %s3 = sshllo.u32 0, 2
    %v4 = vld [vmem:[%s0] sm:%s3]
    %5 = vst [vmem:[#allocation0] sm:%s3] %v4
    %v6 = vld [vmem:[#allocation0] sm:$0x3]
    %vm7 = vcmask 7168
    %8 = vst.msk [vmem:[%s1] sm:$0x1] %vm7, %v6
    %s9 = scalar_lea.vmem %s1, 63
    %10 = vst.msk [vmem:[%s9] sm:$0x2] %vm7, %v6
    %v11 = vld [vmem:[#allocation0] sm:$0x3]
    %12 = vrot.lane.b32.xlu0 %v11, 127
    %v13 = vpop.permute.xlu0 %12
    %vm14 = vcmask 7168
    %s15 = scalar_lea.vmem %s1, 1
    %16 = vst.msk [vmem:[%s15] sm:$0x1] %vm14, %v13
    %s17 = scalar_lea.vmem %s1, 64
    %18 = vst.msk [vmem:[%s17] sm:$0x2] %vm14, %v13
    %v19 = vld [vmem:[#allocation0] sm:$0x3]
    %20 = vrot.lane.b32.xlu0 %v19, 126
    %v21 = vpop.permute.xlu0 %20
    %vm22 = vcmask 7168
    %s23 = scalar_lea.vmem %s1, 2
    %24 = vst.msk [vmem:[%s23] sm:$0x1] %vm22, %v21
    %s25 = scalar_lea.vmem %s1, 65
    %26 = vst.msk [vmem:[%s25] sm:$0x2] %vm22, %v21
    %v27 = vld [vmem:[#allocation0] sm:$0x3]
    %28 = vrot.lane.b32.xlu0 %v27, 125
    %v29 = vpop.permute.xlu0 %28
    %vm30 = vcmask 7168
    %s31 = scalar_lea.vmem %s1, 3
    %32 = vst.msk [vmem:[%s31] sm:$0x1] %vm30, %v29
    %s33 = scalar_lea.vmem %s1, 66
    %34 = vst.msk [vmem:[%s33] sm:$0x2] %vm30, %v29
    %v35 = vld [vmem:[#allocation0] sm:$0x3]
    %36 = vrot.lane.b32.xlu0 %v35, 124
    %v37 = vpop.permute.xlu0 %36
    %vm38 = vcmask 7168
    %s39 = scalar_lea.vmem %s1, 4
    %40 = vst.msk [vmem:[%s39] sm:$0x1] %vm38, %v37
    %s41 = scalar_lea.vmem %s1, 67
    %42 = vst.msk [vmem:[%s41] sm:$0x2] %vm38, %v37
    %v43 = vld [vmem:[#allocation0] sm:$0x3]
    %44 = vrot.lane.b32.xlu0 %v43, 123
    %v45 = vpop.permute.xlu0 %44
    %vm46 = vcmask 7168
    %s47 = scalar_lea.vmem %s1, 5
    %48 = vst.msk [vmem:[%s47] sm:$0x1] %vm46, %v45
    %s49 = scalar_lea.vmem %s1, 68
    %50 = vst.msk [vmem:[%s49] sm:$0x2] %vm46, %v45
    %v51 = vld [vmem:[#allocation0] sm:$0x3]
    %52 = vrot.lane.b32.xlu0 %v51, 122
    %v53 = vpop.permute.xlu0 %52
    %vm54 = vcmask 7168
    %s55 = scalar_lea.vmem %s1, 6
    %56 = vst.msk [vmem:[%s55] sm:$0x1] %vm54, %v53
    %s57 = scalar_lea.vmem %s1, 69
    %58 = vst.msk [vmem:[%s57] sm:$0x2] %vm54, %v53
    %v59 = vld [vmem:[#allocation0] sm:$0x3]
    %60 = vrot.lane.b32.xlu0 %v59, 121
    %v61 = vpop.permute.xlu0 %60
    %vm62 = vcmask 7168
    %s63 = scalar_lea.vmem %s1, 7
    %64 = vst.msk [vmem:[%s63] sm:$0x1] %vm62, %v61
    %s65 = scalar_lea.vmem %s1, 70
    %66 = vst.msk [vmem:[%s65] sm:$0x2] %vm62, %v61
    %v67 = vld [vmem:[#allocation0] sm:$0x3]
    %68 = vrot.lane.b32.xlu0 %v67, 120
    %v69 = vpop.permute.xlu0 %68
    %vm70 = vcmask 7168
    %s71 = scalar_lea.vmem %s1, 8
    %72 = vst.msk [vmem:[%s71] sm:$0x1] %vm70, %v69
    %s73 = scalar_lea.vmem %s1, 71
    %74 = vst.msk [vmem:[%s73] sm:$0x2] %vm70, %v69
    %v75 = vld [vmem:[#allocation0] sm:$0x3]
    %76 = vrot.lane.b32.xlu0 %v75, 119
    %v77 = vpop.permute.xlu0 %76
    %vm78 = vcmask 7168
    %s79 = scalar_lea.vmem %s1, 9
    %80 = vst.msk [vmem:[%s79] sm:$0x1] %vm78, %v77
    %s81 = scalar_lea.vmem %s1, 72
    %82 = vst.msk [vmem:[%s81] sm:$0x2] %vm78, %v77
    %v83 = vld [vmem:[#allocation0] sm:$0x3]
    %84 = vrot.lane.b32.xlu0 %v83, 118
    %v85 = vpop.permute.xlu0 %84
    %vm86 = vcmask 7168
    %s87 = scalar_lea.vmem %s1, 10
    %88 = vst.msk [vmem:[%s87] sm:$0x1] %vm86, %v85
    %s89 = scalar_lea.vmem %s1, 73
    %90 = vst.msk [vmem:[%s89] sm:$0x2] %vm86, %v85
    %v91 = vld [vmem:[#allocation0] sm:$0x3]
    %92 = vrot.lane.b32.xlu0 %v91, 117
    %v93 = vpop.permute.xlu0 %92
    %vm94 = vcmask 7168
    %s95 = scalar_lea.vmem %s1, 11
    %96 = vst.msk [vmem:[%s95] sm:$0x1] %vm94, %v93
    %s97 = scalar_lea.vmem %s1, 74
    %98 = vst.msk [vmem:[%s97] sm:$0x2] %vm94, %v93
    %v99 = vld [vmem:[#allocation0] sm:$0x3]
    %100 = vrot.lane.b32.xlu0 %v99, 116
    %v101 = vpop.permute.xlu0 %100
    %vm102 = vcmask 7168
    %s103 = scalar_lea.vmem %s1, 12
    %104 = vst.msk [vmem:[%s103] sm:$0x1] %vm102, %v101
    %s105 = scalar_lea.vmem %s1, 75
    %106 = vst.msk [vmem:[%s105] sm:$0x2] %vm102, %v101
    %v107 = vld [vmem:[#allocation0] sm:$0x3]
    %108 = vrot.lane.b32.xlu0 %v107, 115
    %v109 = vpop.permute.xlu0 %108
    %vm110 = vcmask 7168
    %s111 = scalar_lea.vmem %s1, 13
    %112 = vst.msk [vmem:[%s111] sm:$0x1] %vm110, %v109
    %s113 = scalar_lea.vmem %s1, 76
    %114 = vst.msk [vmem:[%s113] sm:$0x2] %vm110, %v109
    %v115 = vld [vmem:[#allocation0] sm:$0x3]
    %116 = vrot.lane.b32.xlu0 %v115, 114
    %v117 = vpop.permute.xlu0 %116
    %vm118 = vcmask 7168
    %s119 = scalar_lea.vmem %s1, 14
    %120 = vst.msk [vmem:[%s119] sm:$0x1] %vm118, %v117
    %s121 = scalar_lea.vmem %s1, 77
    %122 = vst.msk [vmem:[%s121] sm:$0x2] %vm118, %v117
    %v123 = vld [vmem:[#allocation0] sm:$0x3]
    %124 = vrot.lane.b32.xlu0 %v123, 113
    %v125 = vpop.permute.xlu0 %124
    %vm126 = vcmask 7168
    %s127 = scalar_lea.vmem %s1, 15
    %128 = vst.msk [vmem:[%s127] sm:$0x1] %vm126, %v125
    %s129 = scalar_lea.vmem %s1, 78
    %130 = vst.msk [vmem:[%s129] sm:$0x2] %vm126, %v125
    %v131 = vld [vmem:[#allocation0] sm:$0x3]
    %132 = vrot.lane.b32.xlu0 %v131, 112
    %v133 = vpop.permute.xlu0 %132
    %vm134 = vcmask 7168
    %s135 = scalar_lea.vmem %s1, 16
    %136 = vst.msk [vmem:[%s135] sm:$0x1] %vm134, %v133
    %s137 = scalar_lea.vmem %s1, 79
    %138 = vst.msk [vmem:[%s137] sm:$0x2] %vm134, %v133
    %v139 = vld [vmem:[#allocation0] sm:$0x3]
    %140 = vrot.lane.b32.xlu0 %v139, 111
    %v141 = vpop.permute.xlu0 %140
    %vm142 = vcmask 7168
    %s143 = scalar_lea.vmem %s1, 17
    %144 = vst.msk [vmem:[%s143] sm:$0x1] %vm142, %v141
    %s145 = scalar_lea.vmem %s1, 80
    %146 = vst.msk [vmem:[%s145] sm:$0x2] %vm142, %v141
    %v147 = vld [vmem:[#allocation0] sm:$0x3]
    %148 = vrot.lane.b32.xlu0 %v147, 110
    %v149 = vpop.permute.xlu0 %148
    %vm150 = vcmask 7168
    %s151 = scalar_lea.vmem %s1, 18
    %152 = vst.msk [vmem:[%s151] sm:$0x1] %vm150, %v149
    %s153 = scalar_lea.vmem %s1, 81
    %154 = vst.msk [vmem:[%s153] sm:$0x2] %vm150, %v149
    %v155 = vld [vmem:[#allocation0] sm:$0x3]
    %156 = vrot.lane.b32.xlu0 %v155, 109
    %v157 = vpop.permute.xlu0 %156
    %vm158 = vcmask 7168
    %s159 = scalar_lea.vmem %s1, 19
    %160 = vst.msk [vmem:[%s159] sm:$0x1] %vm158, %v157
    %s161 = scalar_lea.vmem %s1, 82
    %162 = vst.msk [vmem:[%s161] sm:$0x2] %vm158, %v157
    %v163 = vld [vmem:[#allocation0] sm:$0x3]
    %164 = vrot.lane.b32.xlu0 %v163, 108
    %v165 = vpop.permute.xlu0 %164
    %vm166 = vcmask 7168
    %s167 = scalar_lea.vmem %s1, 20
    %168 = vst.msk [vmem:[%s167] sm:$0x1] %vm166, %v165
    %s169 = scalar_lea.vmem %s1, 83
    %170 = vst.msk [vmem:[%s169] sm:$0x2] %vm166, %v165
    %v171 = vld [vmem:[#allocation0] sm:$0x3]
    %172 = vrot.lane.b32.xlu0 %v171, 107
    %v173 = vpop.permute.xlu0 %172
    %vm174 = vcmask 7168
    %s175 = scalar_lea.vmem %s1, 21
    %176 = vst.msk [vmem:[%s175] sm:$0x1] %vm174, %v173
    %s177 = scalar_lea.vmem %s1, 84
    %178 = vst.msk [vmem:[%s177] sm:$0x2] %vm174, %v173
    %v179 = vld [vmem:[#allocation0] sm:$0x3]
    %180 = vrot.lane.b32.xlu0 %v179, 106
    %v181 = vpop.permute.xlu0 %180
    %vm182 = vcmask 7168
    %s183 = scalar_lea.vmem %s1, 22
    %184 = vst.msk [vmem:[%s183] sm:$0x1] %vm182, %v181
    %s185 = scalar_lea.vmem %s1, 85
    %186 = vst.msk [vmem:[%s185] sm:$0x2] %vm182, %v181
    %v187 = vld [vmem:[#allocation0] sm:$0x3]
    %188 = vrot.lane.b32.xlu0 %v187, 105
    %v189 = vpop.permute.xlu0 %188
    %vm190 = vcmask 7168
    %s191 = scalar_lea.vmem %s1, 23
    %192 = vst.msk [vmem:[%s191] sm:$0x1] %vm190, %v189
    %s193 = scalar_lea.vmem %s1, 86
    %194 = vst.msk [vmem:[%s193] sm:$0x2] %vm190, %v189
    %v195 = vld [vmem:[#allocation0] sm:$0x3]
    %196 = vrot.lane.b32.xlu0 %v195, 104
    %v197 = vpop.permute.xlu0 %196
    %vm198 = vcmask 7168
    %s199 = scalar_lea.vmem %s1, 24
    %200 = vst.msk [vmem:[%s199] sm:$0x1] %vm198, %v197
    %s201 = scalar_lea.vmem %s1, 87
    %202 = vst.msk [vmem:[%s201] sm:$0x2] %vm198, %v197
    %v203 = vld [vmem:[#allocation0] sm:$0x3]
    %204 = vrot.lane.b32.xlu0 %v203, 103
    %v205 = vpop.permute.xlu0 %204
    %vm206 = vcmask 7168
    %s207 = scalar_lea.vmem %s1, 25
    %208 = vst.msk [vmem:[%s207] sm:$0x1] %vm206, %v205
    %s209 = scalar_lea.vmem %s1, 88
    %210 = vst.msk [vmem:[%s209] sm:$0x2] %vm206, %v205
    %v211 = vld [vmem:[#allocation0] sm:$0x3]
    %212 = vrot.lane.b32.xlu0 %v211, 102
    %v213 = vpop.permute.xlu0 %212
    %vm214 = vcmask 7168
    %s215 = scalar_lea.vmem %s1, 26
    %216 = vst.msk [vmem:[%s215] sm:$0x1] %vm214, %v213
    %s217 = scalar_lea.vmem %s1, 89
    %218 = vst.msk [vmem:[%s217] sm:$0x2] %vm214, %v213
    %v219 = vld [vmem:[#allocation0] sm:$0x3]
    %220 = vrot.lane.b32.xlu0 %v219, 101
    %v221 = vpop.permute.xlu0 %220
    %vm222 = vcmask 7168
    %s223 = scalar_lea.vmem %s1, 27
    %224 = vst.msk [vmem:[%s223] sm:$0x1] %vm222, %v221
    %s225 = scalar_lea.vmem %s1, 90
    %226 = vst.msk [vmem:[%s225] sm:$0x2] %vm222, %v221
    %v227 = vld [vmem:[#allocation0] sm:$0x3]
    %228 = vrot.lane.b32.xlu0 %v227, 100
    %v229 = vpop.permute.xlu0 %228
    %vm230 = vcmask 7168
    %s231 = scalar_lea.vmem %s1, 28
    %232 = vst.msk [vmem:[%s231] sm:$0x1] %vm230, %v229
    %s233 = scalar_lea.vmem %s1, 91
    %234 = vst.msk [vmem:[%s233] sm:$0x2] %vm230, %v229
    %v235 = vld [vmem:[#allocation0] sm:$0x3]
    %236 = vrot.lane.b32.xlu0 %v235, 99
    %v237 = vpop.permute.xlu0 %236
    %vm238 = vcmask 7168
    %s239 = scalar_lea.vmem %s1, 29
    %240 = vst.msk [vmem:[%s239] sm:$0x1] %vm238, %v237
    %s241 = scalar_lea.vmem %s1, 92
    %242 = vst.msk [vmem:[%s241] sm:$0x2] %vm238, %v237
    %v243 = vld [vmem:[#allocation0] sm:$0x3]
    %244 = vrot.lane.b32.xlu0 %v243, 98
    %v245 = vpop.permute.xlu0 %244
    %vm246 = vcmask 7168
    %s247 = scalar_lea.vmem %s1, 30
    %248 = vst.msk [vmem:[%s247] sm:$0x1] %vm246, %v245
    %s249 = scalar_lea.vmem %s1, 93
    %250 = vst.msk [vmem:[%s249] sm:$0x2] %vm246, %v245
    %v251 = vld [vmem:[#allocation0] sm:$0x3]
    %252 = vrot.lane.b32.xlu0 %v251, 97
    %v253 = vpop.permute.xlu0 %252
    %vm254 = vcmask 7168
    %s255 = scalar_lea.vmem %s1, 31
    %256 = vst.msk [vmem:[%s255] sm:$0x1] %vm254, %v253
    %s257 = scalar_lea.vmem %s1, 94
    %258 = vst.msk [vmem:[%s257] sm:$0x2] %vm254, %v253
    %v259 = vld [vmem:[#allocation0] sm:$0x3]
    %260 = vrot.lane.b32.xlu0 %v259, 96
    %v261 = vpop.permute.xlu0 %260
    %vm262 = vcmask 7168
    %s263 = scalar_lea.vmem %s1, 32
    %264 = vst.msk [vmem:[%s263] sm:$0x1] %vm262, %v261
    %s265 = scalar_lea.vmem %s1, 95
    %266 = vst.msk [vmem:[%s265] sm:$0x2] %vm262, %v261
    %v267 = vld [vmem:[#allocation0] sm:$0x3]
    %268 = vrot.lane.b32.xlu0 %v267, 95
    %v269 = vpop.permute.xlu0 %268
    %vm270 = vcmask 7168
    %s271 = scalar_lea.vmem %s1, 33
    %272 = vst.msk [vmem:[%s271] sm:$0x1] %vm270, %v269
    %s273 = scalar_lea.vmem %s1, 96
    %274 = vst.msk [vmem:[%s273] sm:$0x2] %vm270, %v269
    %v275 = vld [vmem:[#allocation0] sm:$0x3]
    %276 = vrot.lane.b32.xlu0 %v275, 94
    %v277 = vpop.permute.xlu0 %276
    %vm278 = vcmask 7168
    %s279 = scalar_lea.vmem %s1, 34
    %280 = vst.msk [vmem:[%s279] sm:$0x1] %vm278, %v277
    %s281 = scalar_lea.vmem %s1, 97
    %282 = vst.msk [vmem:[%s281] sm:$0x2] %vm278, %v277
    %v283 = vld [vmem:[#allocation0] sm:$0x3]
    %284 = vrot.lane.b32.xlu0 %v283, 93
    %v285 = vpop.permute.xlu0 %284
    %vm286 = vcmask 7168
    %s287 = scalar_lea.vmem %s1, 35
    %288 = vst.msk [vmem:[%s287] sm:$0x1] %vm286, %v285
    %s289 = scalar_lea.vmem %s1, 98
    %290 = vst.msk [vmem:[%s289] sm:$0x2] %vm286, %v285
    %v291 = vld [vmem:[#allocation0] sm:$0x3]
    %292 = vrot.lane.b32.xlu0 %v291, 92
    %v293 = vpop.permute.xlu0 %292
    %vm294 = vcmask 7168
    %s295 = scalar_lea.vmem %s1, 36
    %296 = vst.msk [vmem:[%s295] sm:$0x1] %vm294, %v293
    %s297 = scalar_lea.vmem %s1, 99
    %298 = vst.msk [vmem:[%s297] sm:$0x2] %vm294, %v293
    %v299 = vld [vmem:[#allocation0] sm:$0x3]
    %300 = vrot.lane.b32.xlu0 %v299, 91
    %v301 = vpop.permute.xlu0 %300
    %vm302 = vcmask 7168
    %s303 = scalar_lea.vmem %s1, 37
    %304 = vst.msk [vmem:[%s303] sm:$0x1] %vm302, %v301
    %s305 = scalar_lea.vmem %s1, 100
    %306 = vst.msk [vmem:[%s305] sm:$0x2] %vm302, %v301
    %v307 = vld [vmem:[#allocation0] sm:$0x3]
    %308 = vrot.lane.b32.xlu0 %v307, 90
    %v309 = vpop.permute.xlu0 %308
    %vm310 = vcmask 7168
    %s311 = scalar_lea.vmem %s1, 38
    %312 = vst.msk [vmem:[%s311] sm:$0x1] %vm310, %v309
    %s313 = scalar_lea.vmem %s1, 101
    %314 = vst.msk [vmem:[%s313] sm:$0x2] %vm310, %v309
    %v315 = vld [vmem:[#allocation0] sm:$0x3]
    %316 = vrot.lane.b32.xlu0 %v315, 89
    %v317 = vpop.permute.xlu0 %316
    %vm318 = vcmask 7168
    %s319 = scalar_lea.vmem %s1, 39
    %320 = vst.msk [vmem:[%s319] sm:$0x1] %vm318, %v317
    %s321 = scalar_lea.vmem %s1, 102
    %322 = vst.msk [vmem:[%s321] sm:$0x2] %vm318, %v317
    %v323 = vld [vmem:[#allocation0] sm:$0x3]
    %324 = vrot.lane.b32.xlu0 %v323, 88
    %v325 = vpop.permute.xlu0 %324
    %vm326 = vcmask 7168
    %s327 = scalar_lea.vmem %s1, 40
    %328 = vst.msk [vmem:[%s327] sm:$0x1] %vm326, %v325
    %s329 = scalar_lea.vmem %s1, 103
    %330 = vst.msk [vmem:[%s329] sm:$0x2] %vm326, %v325
    %v331 = vld [vmem:[#allocation0] sm:$0x3]
    %332 = vrot.lane.b32.xlu0 %v331, 87
    %v333 = vpop.permute.xlu0 %332
    %vm334 = vcmask 7168
    %s335 = scalar_lea.vmem %s1, 41
    %336 = vst.msk [vmem:[%s335] sm:$0x1] %vm334, %v333
    %s337 = scalar_lea.vmem %s1, 104
    %338 = vst.msk [vmem:[%s337] sm:$0x2] %vm334, %v333
    %v339 = vld [vmem:[#allocation0] sm:$0x3]
    %340 = vrot.lane.b32.xlu0 %v339, 86
    %v341 = vpop.permute.xlu0 %340
    %vm342 = vcmask 7168
    %s343 = scalar_lea.vmem %s1, 42
    %344 = vst.msk [vmem:[%s343] sm:$0x1] %vm342, %v341
    %s345 = scalar_lea.vmem %s1, 105
    %346 = vst.msk [vmem:[%s345] sm:$0x2] %vm342, %v341
    %v347 = vld [vmem:[#allocation0] sm:$0x3]
    %348 = vrot.lane.b32.xlu0 %v347, 85
    %v349 = vpop.permute.xlu0 %348
    %vm350 = vcmask 7168
    %s351 = scalar_lea.vmem %s1, 43
    %352 = vst.msk [vmem:[%s351] sm:$0x1] %vm350, %v349
    %s353 = scalar_lea.vmem %s1, 106
    %354 = vst.msk [vmem:[%s353] sm:$0x2] %vm350, %v349
    %v355 = vld [vmem:[#allocation0] sm:$0x3]
    %356 = vrot.lane.b32.xlu0 %v355, 84
    %v357 = vpop.permute.xlu0 %356
    %vm358 = vcmask 7168
    %s359 = scalar_lea.vmem %s1, 44
    %360 = vst.msk [vmem:[%s359] sm:$0x1] %vm358, %v357
    %s361 = scalar_lea.vmem %s1, 107
    %362 = vst.msk [vmem:[%s361] sm:$0x2] %vm358, %v357
    %v363 = vld [vmem:[#allocation0] sm:$0x3]
    %364 = vrot.lane.b32.xlu0 %v363, 83
    %v365 = vpop.permute.xlu0 %364
    %vm366 = vcmask 7168
    %s367 = scalar_lea.vmem %s1, 45
    %368 = vst.msk [vmem:[%s367] sm:$0x1] %vm366, %v365
    %s369 = scalar_lea.vmem %s1, 108
    %370 = vst.msk [vmem:[%s369] sm:$0x2] %vm366, %v365
    %v371 = vld [vmem:[#allocation0] sm:$0x3]
    %372 = vrot.lane.b32.xlu0 %v371, 82
    %v373 = vpop.permute.xlu0 %372
    %vm374 = vcmask 7168
    %s375 = scalar_lea.vmem %s1, 46
    %376 = vst.msk [vmem:[%s375] sm:$0x1] %vm374, %v373
    %s377 = scalar_lea.vmem %s1, 109
    %378 = vst.msk [vmem:[%s377] sm:$0x2] %vm374, %v373
    %v379 = vld [vmem:[#allocation0] sm:$0x3]
    %380 = vrot.lane.b32.xlu0 %v379, 81
    %v381 = vpop.permute.xlu0 %380
    %vm382 = vcmask 7168
    %s383 = scalar_lea.vmem %s1, 47
    %384 = vst.msk [vmem:[%s383] sm:$0x1] %vm382, %v381
    %s385 = scalar_lea.vmem %s1, 110
    %386 = vst.msk [vmem:[%s385] sm:$0x2] %vm382, %v381
    %v387 = vld [vmem:[#allocation0] sm:$0x3]
    %388 = vrot.lane.b32.xlu0 %v387, 80
    %v389 = vpop.permute.xlu0 %388
    %vm390 = vcmask 7168
    %s391 = scalar_lea.vmem %s1, 48
    %392 = vst.msk [vmem:[%s391] sm:$0x1] %vm390, %v389
    %s393 = scalar_lea.vmem %s1, 111
    %394 = vst.msk [vmem:[%s393] sm:$0x2] %vm390, %v389
    %v395 = vld [vmem:[#allocation0] sm:$0x3]
    %396 = vrot.lane.b32.xlu0 %v395, 79
    %v397 = vpop.permute.xlu0 %396
    %vm398 = vcmask 7168
    %s399 = scalar_lea.vmem %s1, 49
    %400 = vst.msk [vmem:[%s399] sm:$0x1] %vm398, %v397
    %s401 = scalar_lea.vmem %s1, 112
    %402 = vst.msk [vmem:[%s401] sm:$0x2] %vm398, %v397
    %v403 = vld [vmem:[#allocation0] sm:$0x3]
    %404 = vrot.lane.b32.xlu0 %v403, 78
    %v405 = vpop.permute.xlu0 %404
    %vm406 = vcmask 7168
    %s407 = scalar_lea.vmem %s1, 50
    %408 = vst.msk [vmem:[%s407] sm:$0x1] %vm406, %v405
    %s409 = scalar_lea.vmem %s1, 113
    %410 = vst.msk [vmem:[%s409] sm:$0x2] %vm406, %v405
    %v411 = vld [vmem:[#allocation0] sm:$0x3]
    %412 = vrot.lane.b32.xlu0 %v411, 77
    %v413 = vpop.permute.xlu0 %412
    %vm414 = vcmask 7168
    %s415 = scalar_lea.vmem %s1, 51
    %416 = vst.msk [vmem:[%s415] sm:$0x1] %vm414, %v413
    %s417 = scalar_lea.vmem %s1, 114
    %418 = vst.msk [vmem:[%s417] sm:$0x2] %vm414, %v413
    %v419 = vld [vmem:[#allocation0] sm:$0x3]
    %420 = vrot.lane.b32.xlu0 %v419, 76
    %v421 = vpop.permute.xlu0 %420
    %vm422 = vcmask 7168
    %s423 = scalar_lea.vmem %s1, 52
    %424 = vst.msk [vmem:[%s423] sm:$0x1] %vm422, %v421
    %s425 = scalar_lea.vmem %s1, 115
    %426 = vst.msk [vmem:[%s425] sm:$0x2] %vm422, %v421
    %v427 = vld [vmem:[#allocation0] sm:$0x3]
    %428 = vrot.lane.b32.xlu0 %v427, 75
    %v429 = vpop.permute.xlu0 %428
    %vm430 = vcmask 7168
    %s431 = scalar_lea.vmem %s1, 53
    %432 = vst.msk [vmem:[%s431] sm:$0x1] %vm430, %v429
    %s433 = scalar_lea.vmem %s1, 116
    %434 = vst.msk [vmem:[%s433] sm:$0x2] %vm430, %v429
    %v435 = vld [vmem:[#allocation0] sm:$0x3]
    %436 = vrot.lane.b32.xlu0 %v435, 74
    %v437 = vpop.permute.xlu0 %436
    %vm438 = vcmask 7168
    %s439 = scalar_lea.vmem %s1, 54
    %440 = vst.msk [vmem:[%s439] sm:$0x1] %vm438, %v437
    %s441 = scalar_lea.vmem %s1, 117
    %442 = vst.msk [vmem:[%s441] sm:$0x2] %vm438, %v437
    %v443 = vld [vmem:[#allocation0] sm:$0x3]
    %444 = vrot.lane.b32.xlu0 %v443, 73
    %v445 = vpop.permute.xlu0 %444
    %vm446 = vcmask 7168
    %s447 = scalar_lea.vmem %s1, 55
    %448 = vst.msk [vmem:[%s447] sm:$0x1] %vm446, %v445
    %s449 = scalar_lea.vmem %s1, 118
    %450 = vst.msk [vmem:[%s449] sm:$0x2] %vm446, %v445
    %v451 = vld [vmem:[#allocation0] sm:$0x3]
    %452 = vrot.lane.b32.xlu0 %v451, 72
    %v453 = vpop.permute.xlu0 %452
    %vm454 = vcmask 7168
    %s455 = scalar_lea.vmem %s1, 56
    %456 = vst.msk [vmem:[%s455] sm:$0x1] %vm454, %v453
    %s457 = scalar_lea.vmem %s1, 119
    %458 = vst.msk [vmem:[%s457] sm:$0x2] %vm454, %v453
    %v459 = vld [vmem:[#allocation0] sm:$0x3]
    %460 = vrot.lane.b32.xlu0 %v459, 71
    %v461 = vpop.permute.xlu0 %460
    %vm462 = vcmask 7168
    %s463 = scalar_lea.vmem %s1, 57
    %464 = vst.msk [vmem:[%s463] sm:$0x1] %vm462, %v461
    %s465 = scalar_lea.vmem %s1, 120
    %466 = vst.msk [vmem:[%s465] sm:$0x2] %vm462, %v461
    %v467 = vld [vmem:[#allocation0] sm:$0x3]
    %468 = vrot.lane.b32.xlu0 %v467, 70
    %v469 = vpop.permute.xlu0 %468
    %vm470 = vcmask 7168
    %s471 = scalar_lea.vmem %s1, 58
    %472 = vst.msk [vmem:[%s471] sm:$0x1] %vm470, %v469
    %s473 = scalar_lea.vmem %s1, 121
    %474 = vst.msk [vmem:[%s473] sm:$0x2] %vm470, %v469
    %v475 = vld [vmem:[#allocation0] sm:$0x3]
    %476 = vrot.lane.b32.xlu0 %v475, 69
    %v477 = vpop.permute.xlu0 %476
    %vm478 = vcmask 7168
    %s479 = scalar_lea.vmem %s1, 59
    %480 = vst.msk [vmem:[%s479] sm:$0x1] %vm478, %v477
    %s481 = scalar_lea.vmem %s1, 122
    %482 = vst.msk [vmem:[%s481] sm:$0x2] %vm478, %v477
    %v483 = vld [vmem:[#allocation0] sm:$0x3]
    %484 = vrot.lane.b32.xlu0 %v483, 68
    %v485 = vpop.permute.xlu0 %484
    %vm486 = vcmask 7168
    %s487 = scalar_lea.vmem %s1, 60
    %488 = vst.msk [vmem:[%s487] sm:$0x1] %vm486, %v485
    %s489 = scalar_lea.vmem %s1, 123
    %490 = vst.msk [vmem:[%s489] sm:$0x2] %vm486, %v485
    %v491 = vld [vmem:[#allocation0] sm:$0x3]
    %492 = vrot.lane.b32.xlu0 %v491, 67
    %v493 = vpop.permute.xlu0 %492
    %vm494 = vcmask 7168
    %s495 = scalar_lea.vmem %s1, 61
    %496 = vst.msk [vmem:[%s495] sm:$0x1] %vm494, %v493
    %s497 = scalar_lea.vmem %s1, 124
    %498 = vst.msk [vmem:[%s497] sm:$0x2] %vm494, %v493
    %v499 = vld [vmem:[#allocation0] sm:$0x3]
    %500 = vrot.lane.b32.xlu0 %v499, 66
    %v501 = vpop.permute.xlu0 %500
    %vm502 = vcmask 7168
    %s503 = scalar_lea.vmem %s1, 62
    %504 = vst.msk [vmem:[%s503] sm:$0x1] %vm502, %v501
    %s505 = scalar_lea.vmem %s1, 125
    %506 = vst.msk [vmem:[%s505] sm:$0x2] %vm502, %v501
    %v507 = vld [vmem:[#allocation0] sm:$0x3]
    %508 = vrot.lane.b32.xlu0 %v507, 65
    %v509 = vpop.permute.xlu0 %508
    %vm510 = vcmask 7168
    %s511 = scalar_lea.vmem %s1, 63
    %512 = vst.msk [vmem:[%s511] sm:$0x1] %vm510, %v509
    %s513 = scalar_lea.vmem %s1, 126
    %514 = vst.msk [vmem:[%s513] sm:$0x2] %vm510, %v509

// kernel: post_residual_convolution.3
$region0: #{post_residual_convolution.3}
  #allocation0 [shape = 'u32[]', space=smem, size = 0x4, offset = 0x4, fixed_abs, tag = 'smem constant byte address 0x4 - core index']
  #allocation1 [shape = 'u32[144,128]{1,0:T(1,128)}', space=vmem, size = 0x12000, scoped, tag = 'internal scratch']
  %s0 = inlined_call_operand.vmem [shape: bf16[128,256], index: 0, kind: input, shape index: {}]
  %s1 = inlined_call_operand.vmem [shape: f32[128,1], index: 1, kind: input, shape index: {}]
  %s2 = inlined_call_operand.vmem [shape: f32[128,1], index: 2, kind: input, shape index: {}]
  %s3 = inlined_call_operand.vmem [shape: f32[128,256], index: 3, kind: output, shape index: {}]
  %s4 = sld [smem:[#allocation0]]
  $region45: #{post_residual_convolution.3} parent=0
    _
  %s6 = ssub.s32 1, %s4
  %s7 = scalar_select 0, %s6, %s4
  loop: start=0, step=1, limit=4
  $region2: #{post_residual_convolution.3} parent=0 // loop_pre_header
    _
  $region3: #{post_residual_convolution.3} parent=0 // loop_header
    %s9 = sphi 0, %s13
    %p10 = scmp.ge.s32.totalorder %s9, 4
    %s19 = sphi 0, %s21
    %s22 = sphi 0, %s19
    %s23 = sphi 0, %s22
    %s39 = sphi 0, %s23
    %s45 = sphi 0, %s47
    %s48 = sphi 0, %s45
    %s49 = sphi 0, %s48
    %s65 = sphi 0, %s49
    %s71 = sphi 0, %s73
    %s74 = sphi 0, %s71
    %s75 = sphi 0, %s74
    %s91 = sphi 0, %s75
    %s97 = sphi 0, %s99
    %s100 = sphi 0, %s97
    %s101 = sphi 0, %s100
    %s117 = sphi 0, %s101
  $region4: #{post_residual_convolution.3} parent=0 // loop_header_branch
    %12 = sbr.rel (%p10) target = $region8
  $region5: #{post_residual_convolution.3} parent=0 // loop_body
    %s14 = ssub.s32 %s9, 1
    %s15 = ssub.s32 %s9, 2
    %s16 = sadd.s32 %s9, 1
    %s17 = ssub.s32 %s9, %s16
    %p18 = scmp.eq.s32.totalorder %s17, 0
    %s20 = sadd.s32 %s19, 1
    %s21 = scalar_select %p18, %s19, %s20
    %p24 = pneg %p18
    %p25 = scmp.eq.s32.totalorder %s9, 1
    %p26 = por %p24, %p25
    %p27 = scmp.ne.s32.totalorder %s19, %s22
    %p28 = scmp.eq.s32.totalorder %s9, 0
    %p29 = por %p27, %p28
    %p30 = scmp.ne.s32.totalorder %s19, %s22
    %p31 = scmp.eq.s32.totalorder %s14, 1
    %p32 = por %p30, %p31
    %p33 = scmp.ne.s32.totalorder %s22, %s23
    %p34 = scmp.eq.s32.totalorder %s14, 0
    %p35 = por %p33, %p34
    %p36 = scmp.ne.s32.totalorder %s22, %s23
    %p37 = scmp.eq.s32.totalorder %s15, 1
    %p38 = por %p36, %p37
    %p40 = scmp.ne.s32.totalorder %s23, %s39
    %p41 = scmp.eq.s32.totalorder %s15, 0
    %p42 = por %p40, %p41
    %s43 = ssub.s32 %s9, %s16
    %p44 = scmp.eq.s32.totalorder %s43, 0
    %s46 = sadd.s32 %s45, 1
    %s47 = scalar_select %p44, %s45, %s46
    %p50 = pneg %p44
    %p51 = scmp.eq.s32.totalorder %s9, 1
    %p52 = por %p50, %p51
    %p53 = scmp.ne.s32.totalorder %s45, %s48
    %p54 = scmp.eq.s32.totalorder %s9, 0
    %p55 = por %p53, %p54
    %p56 = scmp.ne.s32.totalorder %s45, %s48
    %p57 = scmp.eq.s32.totalorder %s14, 1
    %p58 = por %p56, %p57
    %p59 = scmp.ne.s32.totalorder %s48, %s49
    %p60 = scmp.eq.s32.totalorder %s14, 0
    %p61 = por %p59, %p60
    %p62 = scmp.ne.s32.totalorder %s48, %s49
    %p63 = scmp.eq.s32.totalorder %s15, 1
    %p64 = por %p62, %p63
    %p66 = scmp.ne.s32.totalorder %s49, %s65
    %p67 = scmp.eq.s32.totalorder %s15, 0
    %p68 = por %p66, %p67
    %s69 = ssub.s32 %s9, %s16
    %p70 = scmp.eq.s32.totalorder %s69, 0
    %s72 = sadd.s32 %s71, 1
    %s73 = scalar_select %p70, %s71, %s72
    %p76 = pneg %p70
    %p77 = scmp.eq.s32.totalorder %s9, 1
    %p78 = por %p76, %p77
    %p79 = scmp.ne.s32.totalorder %s71, %s74
    %p80 = scmp.eq.s32.totalorder %s9, 0
    %p81 = por %p79, %p80
    %p82 = scmp.ne.s32.totalorder %s71, %s74
    %p83 = scmp.eq.s32.totalorder %s14, 1
    %p84 = por %p82, %p83
    %p85 = scmp.ne.s32.totalorder %s74, %s75
    %p86 = scmp.eq.s32.totalorder %s14, 0
    %p87 = por %p85, %p86
    %p88 = scmp.ne.s32.totalorder %s74, %s75
    %p89 = scmp.eq.s32.totalorder %s15, 1
    %p90 = por %p88, %p89
    %p92 = scmp.ne.s32.totalorder %s75, %s91
    %p93 = scmp.eq.s32.totalorder %s15, 0
    %p94 = por %p92, %p93
    %s95 = ssub.s32 %s9, %s16
    %p96 = scmp.eq.s32.totalorder %s95, 0
    %s98 = sadd.s32 %s97, 1
    %s99 = scalar_select %p96, %s97, %s98
    %p102 = pneg %p96
    %p103 = scmp.eq.s32.totalorder %s9, 1
    %p104 = por %p102, %p103
    %p105 = scmp.ne.s32.totalorder %s97, %s100
    %p106 = scmp.eq.s32.totalorder %s9, 0
    %p107 = por %p105, %p106
    %p108 = scmp.ne.s32.totalorder %s97, %s100
    %p109 = scmp.eq.s32.totalorder %s14, 1
    %p110 = por %p108, %p109
    %p111 = scmp.ne.s32.totalorder %s100, %s101
    %p112 = scmp.eq.s32.totalorder %s14, 0
    %p113 = por %p111, %p112
    %p114 = scmp.ne.s32.totalorder %s100, %s101
    %p115 = scmp.eq.s32.totalorder %s15, 1
    %p116 = por %p114, %p115
    %p118 = scmp.ne.s32.totalorder %s101, %s117
    %p119 = scmp.eq.s32.totalorder %s15, 0
    %p120 = por %p118, %p119
    %p121 = scmp.le.s32.totalorder 1, %s9
    %p122 = scmp.lt.s32.totalorder %s9, 3
    %p123 = pnand %p121, %p122
    %p124 = pneg %p123
    // Predicated region
    $region9: #{post_residual_convolution.3} parent=5 // pred_check
      _
    $region10: #{post_residual_convolution.3} parent=5 // pred_check_branch
      %126 = sbr.rel (%p123) target = $region12
    $region11: #{post_residual_convolution.3} parent=5 // pred_region
      %s127 = ssub.s32 %s9, 1
    $region12: #{post_residual_convolution.3} parent=5 // pred_fallthru
      _
    %p128 = scmp.lt.s32.totalorder %s9, 2
    // Predicated region
    $region13: #{post_residual_convolution.3} parent=5 // pred_check
      %p129 = pneg %p128
    $region14: #{post_residual_convolution.3} parent=5 // pred_check_branch
      %131 = sbr.rel (%p129) target = $region16
    $region15: #{post_residual_convolution.3} parent=5 // pred_region
      // Predicated region
      $region17: #{post_residual_convolution.3} parent=15 // pred_check
        %p132 = pneg %p29
      $region18: #{post_residual_convolution.3} parent=15 // pred_check_branch
        %134 = sbr.rel (%p132) target = $region20
      $region19: #{post_residual_convolution.3} parent=15 // pred_region
        %s135 = smul.u32 8, %s9
        %p136 = scmp.lt.s32.totalorder %s135, 15
        %s137 = scalar_select %p136, %s135, 15
        %s138 = smul.addr %s137, 2
        %s139 = smul.addr %s138, 4
        %s140 = scalar_lea.vmem %s0, %s139
        %s141 = smul.u32 8, %s9
      $region20: #{post_residual_convolution.3} parent=15 // pred_fallthru
        _
      // Predicated region
      $region21: #{post_residual_convolution.3} parent=15 // pred_check
        %p142 = pneg %p55
      $region22: #{post_residual_convolution.3} parent=15 // pred_check_branch
        %144 = sbr.rel (%p142) target = $region24
      $region23: #{post_residual_convolution.3} parent=15 // pred_region
        %s145 = smul.u32 8, %s9
        %p146 = scmp.lt.s32.totalorder %s145, 15
        %s147 = scalar_select %p146, %s145, 15
        %s148 = smul.addr %s147, 8
        %s149 = scalar_lea.vmem %s1, %s148
        %s150 = smul.u32 8, %s9
      $region24: #{post_residual_convolution.3} parent=15 // pred_fallthru
        _
      // Predicated region
      $region25: #{post_residual_convolution.3} parent=15 // pred_check
        %p151 = pneg %p81
      $region26: #{post_residual_convolution.3} parent=15 // pred_check_branch
        %153 = sbr.rel (%p151) target = $region28
      $region27: #{post_residual_convolution.3} parent=15 // pred_region
        %s154 = smul.u32 8, %s9
        %p155 = scmp.lt.s32.totalorder %s154, 15
        %s156 = scalar_select %p155, %s154, 15
        %s157 = smul.addr %s156, 8
        %s158 = scalar_lea.vmem %s2, %s157
        %s159 = smul.u32 8, %s9
      $region28: #{post_residual_convolution.3} parent=15 // pred_fallthru
        _
    $region16: #{post_residual_convolution.3} parent=5 // pred_fallthru
      _
    %p160 = scmp.le.s32.totalorder 1, %s9
    %p161 = scmp.lt.s32.totalorder %s9, 3
    %p162 = pnand %p160, %p161
    %p163 = pneg %p162
    // Predicated region
    $region29: #{post_residual_convolution.3} parent=5 // pred_check
      _
    $region30: #{post_residual_convolution.3} parent=5 // pred_check_branch
      %165 = sbr.rel (%p162) target = $region32
    $region31: #{post_residual_convolution.3} parent=5 // pred_region
      %s166 = ssub.s32 %s9, 1
      %s167 = smul.u32 8, %s14
      %p168 = scmp.lt.s32.totalorder %s167, 15
      %s169 = scalar_select %p168, %s167, 15
      %s170 = smul.addr %s169, 2
      %s171 = smul.addr %s170, 4
      %s172 = scalar_lea.vmem %s0, %s171
      %p173 = pneg %p35
      %p174 = pneg %p32
      %s175 = smul.u32 8, %s14
      %p176 = scmp.lt.s32.totalorder %s175, 15
      %s177 = scalar_select %p176, %s175, 15
      %s178 = smul.addr %s177, 8
      %s179 = scalar_lea.vmem %s1, %s178
      %p180 = pneg %p61
      %p181 = pneg %p58
      %s182 = smul.u32 8, %s14
      %p183 = scmp.lt.s32.totalorder %s182, 15
      %s184 = scalar_select %p183, %s182, 15
      %s185 = smul.addr %s184, 8
      %s186 = scalar_lea.vmem %s2, %s185
      %p187 = pneg %p87
      %p188 = pneg %p84
      %p189 = pneg %p113
      %p190 = pneg %p110
      %s191 = smul.u32 8, %s14
      %p192 = scmp.lt.s32.totalorder %s191, 15
      %s193 = scalar_select %p192, %s191, 15
      %s194 = smul.addr %s193, 2
      %s195 = smul.addr %s194, 8
      %s196 = scalar_lea.vmem %s3, %s195
      %s197 = smul.u32 8, %s14
      %p198 = scmp.lt.s32.totalorder %s197, 15
      %s199 = scalar_select %p198, %s197, 15
      %s200 = smul.addr %s199, 2
      %s201 = smul.addr %s200, 4
      %s202 = scalar_lea.vmem %s0, %s201
      %s203 = smul.u32 8, %s14
      %s204 = smul.u32 8, %s14
      %p205 = scmp.lt.s32.totalorder %s204, 15
      %s206 = scalar_select %p205, %s204, 15
      %s207 = smul.addr %s206, 8
      %s208 = scalar_lea.vmem %s1, %s207
      %s209 = smul.u32 8, %s14
      %s210 = smul.u32 8, %s14
      %p211 = scmp.lt.s32.totalorder %s210, 15
      %s212 = scalar_select %p211, %s210, 15
      %s213 = smul.addr %s212, 8
      %s214 = scalar_lea.vmem %s2, %s213
      %s215 = smul.u32 8, %s14
      %s216 = smul.u32 8, %s14
      %p217 = scmp.lt.s32.totalorder %s216, 15
      %s218 = scalar_select %p217, %s216, 15
      %s219 = smul.addr %s218, 2
      %s220 = smul.addr %s219, 8
      %s221 = scalar_lea.vmem %s3, %s220
      %s222 = smul.u32 8, %s14
      %v223 = vld [vmem:[%s202] sm:$0xff]
      %v224 = vld [vmem:[%s202 + $0x8] sm:$0xff]
      %v225 = vld [vmem:[%s202 + $0x10] sm:$0xff]
      %v226 = vld [vmem:[%s202 + $0x18] sm:$0xff]
      %v227 = vld [vmem:[%s202 + $0x20] sm:$0xff]
      %v228 = vld [vmem:[%s202 + $0x28] sm:$0xff]
      %v229 = vld [vmem:[%s202 + $0x30] sm:$0xff]
      %v230 = vld [vmem:[%s202 + $0x38] sm:$0xff]
      %v231 = vunpack.c.l.bf16 %v223
      %v232 = vunpack.c.h.bf16 %v223
      %v233 = vunpack.c.l.bf16 %v224
      %v234 = vunpack.c.h.bf16 %v224
      %v235 = vunpack.c.l.bf16 %v225
      %v236 = vunpack.c.h.bf16 %v225
      %v237 = vunpack.c.l.bf16 %v226
      %v238 = vunpack.c.h.bf16 %v226
      %v239 = vunpack.c.l.bf16 %v227
      %v240 = vunpack.c.h.bf16 %v227
      %v241 = vunpack.c.l.bf16 %v228
      %v242 = vunpack.c.h.bf16 %v228
      %v243 = vunpack.c.l.bf16 %v229
      %v244 = vunpack.c.h.bf16 %v229
      %v245 = vunpack.c.l.bf16 %v230
      %v246 = vunpack.c.h.bf16 %v230
      %v247 = vld [vmem:[%s208] sm:$0xff]
      %v248 = vld [vmem:[%s208 + $0x8] sm:$0xff]
      %v249 = vld [vmem:[%s208 + $0x10] sm:$0xff]
      %v250 = vld [vmem:[%s208 + $0x18] sm:$0xff]
      %v251 = vld [vmem:[%s208 + $0x20] sm:$0xff]
      %v252 = vld [vmem:[%s208 + $0x28] sm:$0xff]
      %v253 = vld [vmem:[%s208 + $0x30] sm:$0xff]
      %v254 = vld [vmem:[%s208 + $0x38] sm:$0xff]
      %256 = vset.pattern.permute.xlu0 0
      %257 = vperm.xlu0 %256, %v247
      %v258 = vpop.permute.xlu0 %257
      %261 = vset.pattern.permute.xlu0 0
      %262 = vperm.xlu0 %261, %v248
      %v263 = vpop.permute.xlu0 %262
      %266 = vset.pattern.permute.xlu0 0
      %267 = vperm.xlu0 %266, %v249
      %v268 = vpop.permute.xlu0 %267
      %271 = vset.pattern.permute.xlu0 0
      %272 = vperm.xlu0 %271, %v250
      %v273 = vpop.permute.xlu0 %272
      %276 = vset.pattern.permute.xlu0 0
      %277 = vperm.xlu0 %276, %v251
      %v278 = vpop.permute.xlu0 %277
      %281 = vset.pattern.permute.xlu0 0
      %282 = vperm.xlu0 %281, %v252
      %v283 = vpop.permute.xlu0 %282
      %286 = vset.pattern.permute.xlu0 0
      %287 = vperm.xlu0 %286, %v253
      %v288 = vpop.permute.xlu0 %287
      %291 = vset.pattern.permute.xlu0 0
      %292 = vperm.xlu0 %291, %v254
      %v293 = vpop.permute.xlu0 %292
      %v295 = vmul.f32 %v231, %v258
      %v296 = vmul.f32 %v232, %v258
      %v297 = vmul.f32 %v233, %v263
      %v298 = vmul.f32 %v234, %v263
      %v299 = vmul.f32 %v235, %v268
      %v300 = vmul.f32 %v236, %v268
      %v301 = vmul.f32 %v237, %v273
      %v302 = vmul.f32 %v238, %v273
      %v303 = vmul.f32 %v239, %v278
      %v304 = vmul.f32 %v240, %v278
      %v305 = vmul.f32 %v241, %v283
      %v306 = vmul.f32 %v242, %v283
      %v307 = vmul.f32 %v243, %v288
      %v308 = vmul.f32 %v244, %v288
      %v309 = vmul.f32 %v245, %v293
      %v310 = vmul.f32 %v246, %v293
      %v311 = vld [vmem:[%s214] sm:$0xff]
      %v312 = vld [vmem:[%s214 + $0x8] sm:$0xff]
      %v313 = vld [vmem:[%s214 + $0x10] sm:$0xff]
      %v314 = vld [vmem:[%s214 + $0x18] sm:$0xff]
      %v315 = vld [vmem:[%s214 + $0x20] sm:$0xff]
      %v316 = vld [vmem:[%s214 + $0x28] sm:$0xff]
      %v317 = vld [vmem:[%s214 + $0x30] sm:$0xff]
      %v318 = vld [vmem:[%s214 + $0x38] sm:$0xff]
      %320 = vset.pattern.permute.xlu0 0
      %321 = vperm.xlu0 %320, %v311
      %v322 = vpop.permute.xlu0 %321
      %325 = vset.pattern.permute.xlu0 0
      %326 = vperm.xlu0 %325, %v312
      %v327 = vpop.permute.xlu0 %326
      %330 = vset.pattern.permute.xlu0 0
      %331 = vperm.xlu0 %330, %v313
      %v332 = vpop.permute.xlu0 %331
      %335 = vset.pattern.permute.xlu0 0
      %336 = vperm.xlu0 %335, %v314
      %v337 = vpop.permute.xlu0 %336
      %340 = vset.pattern.permute.xlu0 0
      %341 = vperm.xlu0 %340, %v315
      %v342 = vpop.permute.xlu0 %341
      %345 = vset.pattern.permute.xlu0 0
      %346 = vperm.xlu0 %345, %v316
      %v347 = vpop.permute.xlu0 %346
      %350 = vset.pattern.permute.xlu0 0
      %351 = vperm.xlu0 %350, %v317
      %v352 = vpop.permute.xlu0 %351
      %355 = vset.pattern.permute.xlu0 0
      %356 = vperm.xlu0 %355, %v318
      %v357 = vpop.permute.xlu0 %356
      %v359 = vadd.f32 %v295, %v322
      %v360 = vadd.f32 %v296, %v322
      %v361 = vadd.f32 %v297, %v327
      %v362 = vadd.f32 %v298, %v327
      %v363 = vadd.f32 %v299, %v332
      %v364 = vadd.f32 %v300, %v332
      %v365 = vadd.f32 %v301, %v337
      %v366 = vadd.f32 %v302, %v337
      %v367 = vadd.f32 %v303, %v342
      %v368 = vadd.f32 %v304, %v342
      %v369 = vadd.f32 %v305, %v347
      %v370 = vadd.f32 %v306, %v347
      %v371 = vadd.f32 %v307, %v352
      %v372 = vadd.f32 %v308, %v352
      %v373 = vadd.f32 %v309, %v357
      %v374 = vadd.f32 %v310, %v357
      %375 = vst [vmem:[%s221] sm:$0xff] %v359
      %376 = vst [vmem:[%s221 + $0x8] sm:$0xff] %v360
      %377 = vst [vmem:[%s221 + $0x10] sm:$0xff] %v361
      %378 = vst [vmem:[%s221 + $0x18] sm:$0xff] %v362
      %379 = vst [vmem:[%s221 + $0x20] sm:$0xff] %v363
      %380 = vst [vmem:[%s221 + $0x28] sm:$0xff] %v364
      %381 = vst [vmem:[%s221 + $0x30] sm:$0xff] %v365
      %382 = vst [vmem:[%s221 + $0x38] sm:$0xff] %v366
      %383 = vst [vmem:[%s221 + $0x40] sm:$0xff] %v367
      %384 = vst [vmem:[%s221 + $0x48] sm:$0xff] %v368
      %385 = vst [vmem:[%s221 + $0x50] sm:$0xff] %v369
      %386 = vst [vmem:[%s221 + $0x58] sm:$0xff] %v370
      %387 = vst [vmem:[%s221 + $0x60] sm:$0xff] %v371
      %388 = vst [vmem:[%s221 + $0x68] sm:$0xff] %v372
      %389 = vst [vmem:[%s221 + $0x70] sm:$0xff] %v373
      %390 = vst [vmem:[%s221 + $0x78] sm:$0xff] %v374
      %s391 = smul.u32 8, %s14
      %p392 = scmp.lt.s32.totalorder %s391, 15
      %s393 = scalar_select %p392, %s391, 15
      %s394 = smul.addr %s393, 2
      %s395 = smul.addr %s394, 8
      %s396 = scalar_lea.vmem %s3, %s395
      // Predicated region
      $region33: #{post_residual_convolution.3} parent=31 // pred_check
        %p397 = pneg %p110
      $region34: #{post_residual_convolution.3} parent=31 // pred_check_branch
        %399 = sbr.rel (%p397) target = $region36
      $region35: #{post_residual_convolution.3} parent=31 // pred_region
        %s400 = smul.u32 8, %s14
      $region36: #{post_residual_convolution.3} parent=31 // pred_fallthru
        _
    $region32: #{post_residual_convolution.3} parent=5 // pred_fallthru
      _
    %p401 = scmp.le.s32.totalorder 2, %s9
    // Predicated region
    $region37: #{post_residual_convolution.3} parent=5 // pred_check
      %p402 = pneg %p401
    $region38: #{post_residual_convolution.3} parent=5 // pred_check_branch
      %404 = sbr.rel (%p402) target = $region40
    $region39: #{post_residual_convolution.3} parent=5 // pred_region
      %s405 = ssub.s32 %s9, 2
      // Predicated region
      $region41: #{post_residual_convolution.3} parent=39 // pred_check
        %p406 = pneg %p116
      $region42: #{post_residual_convolution.3} parent=39 // pred_check_branch
        %408 = sbr.rel (%p406) target = $region44
      $region43: #{post_residual_convolution.3} parent=39 // pred_region
        %s409 = smul.u32 8, %s15
        %p410 = scmp.lt.s32.totalorder %s409, 15
        %s411 = scalar_select %p410, %s409, 15
        %s412 = smul.addr %s411, 2
        %s413 = smul.addr %s412, 8
        %s414 = scalar_lea.vmem %s3, %s413
      $region44: #{post_residual_convolution.3} parent=39 // pred_fallthru
        _
    $region40: #{post_residual_convolution.3} parent=5 // pred_fallthru
      _
  $region6: #{post_residual_convolution.3} parent=0 // loop_footer
    %s13 = sadd.s32 1, %s9
  $region7: #{post_residual_convolution.3} parent=0 // loop_footer_branch
    %8 = sbr.rel target = $region3
  $region8: #{post_residual_convolution.3} parent=0 // loop_exit
    _

// kernel: post_residual_convolution.2
$region0: #{post_residual_convolution.2}
  #allocation0 [shape = 'u32[]', space=smem, size = 0x4, offset = 0x4, fixed_abs, tag = 'smem constant byte address 0x4 - core index']
  #allocation1 [shape = 'u32[144,128]{1,0:T(1,128)}', space=vmem, size = 0x12000, scoped, tag = 'internal scratch']
  %s0 = inlined_call_operand.vmem [shape: bf16[2,18,18,64], index: 0, kind: input, shape index: {}]
  %s1 = inlined_call_operand.vmem [shape: bf16[9,64,64], index: 1, kind: input, shape index: {}]
  %s2 = inlined_call_operand.vmem [shape: bf16[2,64,256], index: 2, kind: output, shape index: {0}]
  %s3 = inlined_call_operand.vmem [shape: f32[2,1,2,64], index: 3, kind: output, shape index: {1}]
  %4 = xla_tuple %s2, %s3
  %s5 = sld [smem:[#allocation0]]
  $region49: #{post_residual_convolution.2} parent=0
    _
  %s7 = ssub.s32 1, %s5
  %s8 = scalar_select 0, %s7, %s5
  loop: start=0, step=1, limit=4
  $region2: #{post_residual_convolution.2} parent=0 // loop_pre_header
    _
  $region3: #{post_residual_convolution.2} parent=0 // loop_header
    %s10 = sphi 0, %s14
    %p11 = scmp.ge.s32.totalorder %s10, 4
    %s17 = sphi 0, %s29
    %s18 = sphi 0, %s25
    %s19 = sphi 0, %s17
    %s20 = sphi 0, %s18
    %s21 = sphi 0, %s19
    %s22 = sphi 0, %s20
    %s32 = sphi 0, %s34
    %s35 = sphi 0, %s32
    %s36 = sphi 0, %s35
    %s52 = sphi 0, %s36
    %s56 = sphi 0, %s56
    %s58 = sphi 0, %s56
    %s59 = sphi 0, %s58
    %s73 = sphi 0, %s59
    %s81 = sphi 0, %s83
    %s84 = sphi 0, %s81
    %s85 = sphi 0, %s84
    %s101 = sphi 0, %s85
    %s109 = sphi 0, %s111
    %s112 = sphi 0, %s109
    %s113 = sphi 0, %s112
    %s129 = sphi 0, %s113
  $region4: #{post_residual_convolution.2} parent=0 // loop_header_branch
    %13 = sbr.rel (%p11) target = $region8
  $region5: #{post_residual_convolution.2} parent=0 // loop_body
    %s15 = ssub.s32 %s10, 1
    %s16 = ssub.s32 %s10, 2
    %s23 = sadd.s32 1, %s18
    %p24 = scmp.ge.s32.totalorder %s23, 1
    %s25 = scalar_select %p24, 0, %s23
    %s26 = sadd.s32 1, %s17
    %s27 = scalar_select %p24, %s26, %s17
    %p28 = scmp.ge.s32.totalorder %s27, 2
    %s29 = scalar_select %p28, 0, %s27
    %s30 = ssub.s32 %s17, %s29
    %p31 = scmp.eq.s32.totalorder %s30, 0
    %s33 = sadd.s32 %s32, 1
    %s34 = scalar_select %p31, %s32, %s33
    %p37 = pneg %p31
    %p38 = scmp.eq.s32.totalorder %s10, 1
    %p39 = por %p37, %p38
    %p40 = scmp.ne.s32.totalorder %s32, %s35
    %p41 = scmp.eq.s32.totalorder %s10, 0
    %p42 = por %p40, %p41
    %p43 = scmp.ne.s32.totalorder %s32, %s35
    %p44 = scmp.eq.s32.totalorder %s15, 1
    %p45 = por %p43, %p44
    %p46 = scmp.ne.s32.totalorder %s35, %s36
    %p47 = scmp.eq.s32.totalorder %s15, 0
    %p48 = por %p46, %p47
    %p49 = scmp.ne.s32.totalorder %s35, %s36
    %p50 = scmp.eq.s32.totalorder %s16, 1
    %p51 = por %p49, %p50
    %p53 = scmp.ne.s32.totalorder %s36, %s52
    %p54 = scmp.eq.s32.totalorder %s16, 0
    %p55 = por %p53, %p54
    %s57 = sadd.s32 %s56, 1
    %p60 = scmp.eq.s32.totalorder %s10, 1
    %p61 = scmp.ne.s32.totalorder %s56, %s58
    %p62 = scmp.eq.s32.totalorder %s10, 0
    %p63 = por %p61, %p62
    %p64 = scmp.ne.s32.totalorder %s56, %s58
    %p65 = scmp.eq.s32.totalorder %s15, 1
    %p66 = por %p64, %p65
    %p67 = scmp.ne.s32.totalorder %s58, %s59
    %p68 = scmp.eq.s32.totalorder %s15, 0
    %p69 = por %p67, %p68
    %p70 = scmp.ne.s32.totalorder %s58, %s59
    %p71 = scmp.eq.s32.totalorder %s16, 1
    %p72 = por %p70, %p71
    %p74 = scmp.ne.s32.totalorder %s59, %s73
    %p75 = scmp.eq.s32.totalorder %s16, 0
    %p76 = por %p74, %p75
    %s77 = ssub.s32 %s17, %s29
    %s78 = ssub.s32 %s18, %s25
    %s79 = sor.u32 %s77, %s78
    %p80 = scmp.eq.s32.totalorder %s79, 0
    %s82 = sadd.s32 %s81, 1
    %s83 = scalar_select %p80, %s81, %s82
    %p86 = pneg %p80
    %p87 = scmp.eq.s32.totalorder %s10, 1
    %p88 = por %p86, %p87
    %p89 = scmp.ne.s32.totalorder %s81, %s84
    %p90 = scmp.eq.s32.totalorder %s10, 0
    %p91 = por %p89, %p90
    %p92 = scmp.ne.s32.totalorder %s81, %s84
    %p93 = scmp.eq.s32.totalorder %s15, 1
    %p94 = por %p92, %p93
    %p95 = scmp.ne.s32.totalorder %s84, %s85
    %p96 = scmp.eq.s32.totalorder %s15, 0
    %p97 = por %p95, %p96
    %p98 = scmp.ne.s32.totalorder %s84, %s85
    %p99 = scmp.eq.s32.totalorder %s16, 1
    %p100 = por %p98, %p99
    %p102 = scmp.ne.s32.totalorder %s85, %s101
    %p103 = scmp.eq.s32.totalorder %s16, 0
    %p104 = por %p102, %p103
    %s105 = ssub.s32 %s17, %s29
    %s106 = ssub.s32 %s18, %s25
    %s107 = sor.u32 %s105, %s106
    %p108 = scmp.eq.s32.totalorder %s107, 0
    %s110 = sadd.s32 %s109, 1
    %s111 = scalar_select %p108, %s109, %s110
    %p114 = pneg %p108
    %p115 = scmp.eq.s32.totalorder %s10, 1
    %p116 = por %p114, %p115
    %p117 = scmp.ne.s32.totalorder %s109, %s112
    %p118 = scmp.eq.s32.totalorder %s10, 0
    %p119 = por %p117, %p118
    %p120 = scmp.ne.s32.totalorder %s109, %s112
    %p121 = scmp.eq.s32.totalorder %s15, 1
    %p122 = por %p120, %p121
    %p123 = scmp.ne.s32.totalorder %s112, %s113
    %p124 = scmp.eq.s32.totalorder %s15, 0
    %p125 = por %p123, %p124
    %p126 = scmp.ne.s32.totalorder %s112, %s113
    %p127 = scmp.eq.s32.totalorder %s16, 1
    %p128 = por %p126, %p127
    %p130 = scmp.ne.s32.totalorder %s113, %s129
    %p131 = scmp.eq.s32.totalorder %s16, 0
    %p132 = por %p130, %p131
    %p133 = scmp.le.s32.totalorder 1, %s10
    %p134 = scmp.lt.s32.totalorder %s10, 3
    %p135 = pnand %p133, %p134
    %p136 = pneg %p135
    // Predicated region
    $region9: #{post_residual_convolution.2} parent=5 // pred_check
      _
    $region10: #{post_residual_convolution.2} parent=5 // pred_check_branch
      %138 = sbr.rel (%p135) target = $region12
    $region11: #{post_residual_convolution.2} parent=5 // pred_region
      %s139 = ssub.s32 %s10, 1
      // Predicated region
      $region13: #{post_residual_convolution.2} parent=11 // pred_check
        %p140 = pneg %p69
      $region14: #{post_residual_convolution.2} parent=11 // pred_check_branch
        %142 = sbr.rel (%p140) target = $region16
      $region15: #{post_residual_convolution.2} parent=11 // pred_region
        _
      $region16: #{post_residual_convolution.2} parent=11 // pred_fallthru
        _
    $region12: #{post_residual_convolution.2} parent=5 // pred_fallthru
      _
    %p143 = scmp.lt.s32.totalorder %s10, 2
    // Predicated region
    $region17: #{post_residual_convolution.2} parent=5 // pred_check
      %p144 = pneg %p143
    $region18: #{post_residual_convolution.2} parent=5 // pred_check_branch
      %146 = sbr.rel (%p144) target = $region20
    $region19: #{post_residual_convolution.2} parent=5 // pred_region
      // Predicated region
      $region21: #{post_residual_convolution.2} parent=19 // pred_check
        %p147 = pneg %p42
      $region22: #{post_residual_convolution.2} parent=19 // pred_check_branch
        %149 = sbr.rel (%p147) target = $region24
      $region23: #{post_residual_convolution.2} parent=19 // pred_region
        %p150 = scmp.lt.s32.totalorder %s17, 1
        %s151 = scalar_select %p150, %s17, 1
        %s152 = smul.addr %s151, 54
        %s153 = smul.addr %s152, 4
        %s154 = scalar_lea.vmem %s0, %s153
      $region24: #{post_residual_convolution.2} parent=19 // pred_fallthru
        _
    $region20: #{post_residual_convolution.2} parent=5 // pred_fallthru
      _
    %p155 = scmp.le.s32.totalorder 1, %s10
    %p156 = scmp.lt.s32.totalorder %s10, 3
    %p157 = pnand %p155, %p156
    %p158 = pneg %p157
    // Predicated region
    $region25: #{post_residual_convolution.2} parent=5 // pred_check
      _
    $region26: #{post_residual_convolution.2} parent=5 // pred_check_branch
      %160 = sbr.rel (%p157) target = $region28
    $region27: #{post_residual_convolution.2} parent=5 // pred_region
      %s161 = ssub.s32 %s10, 1
      %p162 = scmp.lt.s32.totalorder %s19, 1
      %s163 = scalar_select %p162, %s19, 1
      %s164 = smul.addr %s163, 54
      %s165 = smul.addr %s164, 4
      %s166 = scalar_lea.vmem %s0, %s165
      %p167 = pneg %p48
      %p168 = pneg %p45
      %p169 = pneg %p69
      %p170 = pneg %p66
      %p171 = pneg %p97
      %p172 = pneg %p94
      %s173 = smul.u32 2, %s20
      %p174 = scmp.lt.s32.totalorder %s19, 1
      %s175 = scalar_select %p174, %s19, 1
      %p176 = scmp.lt.s32.totalorder %s173, 1
      %s177 = scalar_select %p176, %s173, 1
      %s178 = smul.addr %s175, 16
      %s179 = sadd.s32 %s177, %s178
      %s180 = smul.addr %s179, 4
      %s181 = scalar_lea.vmem %s2, %s180
      %p182 = pneg %p125
      %p183 = pneg %p122
      %p184 = scmp.lt.s32.totalorder %s19, 1
      %s185 = scalar_select %p184, %s19, 1
      %p186 = scmp.lt.s32.totalorder %s20, 0
      %s187 = scalar_select %p186, %s20, 0
      %s188 = sadd.s32 %s187, %s185
      %s189 = smul.addr %s188, 2
      %s190 = scalar_lea.vmem %s3, %s189
      %p191 = scmp.lt.s32.totalorder %s19, 1
      %s192 = scalar_select %p191, %s19, 1
      %s193 = smul.addr %s192, 54
      %s194 = smul.addr %s193, 4
      %s195 = scalar_lea.vmem %s0, %s194
      %s196 = smul.u32 2, %s20
      %p197 = scmp.lt.s32.totalorder %s19, 1
      %s198 = scalar_select %p197, %s19, 1
      %p199 = scmp.lt.s32.totalorder %s196, 1
      %s200 = scalar_select %p199, %s196, 1
      %s201 = smul.addr %s198, 16
      %s202 = sadd.s32 %s200, %s201
      %s203 = smul.addr %s202, 4
      %s204 = scalar_lea.vmem %s2, %s203
      %s205 = smul.u32 2, %s20
      %p206 = scmp.lt.s32.totalorder %s19, 1
      %s207 = scalar_select %p206, %s19, 1
      %p208 = scmp.lt.s32.totalorder %s20, 0
      %s209 = scalar_select %p208, %s20, 0
      %s210 = sadd.s32 %s209, %s207
      %s211 = smul.addr %s210, 2
      %s212 = scalar_lea.vmem %s3, %s211
      %s214 = smul.u32 %s20, 16
      %s215 = smul.u32 %s214, 3
      %s216 = smul.addr %s215, 4
      %s217 = scalar_lea.vmem %s195, %s216
      %v218 = vld [vmem:[%s217] sm:$0xf]
      %v219 = vld [vmem:[%s217 + $0x4] sm:$0xf]
      %v220 = vld [vmem:[%s217 + $0xc] sm:$0xf]
      %v221 = vld [vmem:[%s217 + $0x10] sm:$0xf]
      %v222 = vld [vmem:[%s217 + $0x18] sm:$0xf]
      %v223 = vld [vmem:[%s217 + $0x1c] sm:$0xf]
      %v224 = vld [vmem:[%s217 + $0x24] sm:$0xf]
      %v225 = vld [vmem:[%s217 + $0x28] sm:$0xf]
      %v226 = vld [vmem:[%s217 + $0x30] sm:$0xf]
      %v227 = vld [vmem:[%s217 + $0x34] sm:$0xf]
      %v228 = vld [vmem:[%s217 + $0x3c] sm:$0xf]
      %v229 = vld [vmem:[%s217 + $0x40] sm:$0xf]
      %v230 = vld [vmem:[%s217 + $0x48] sm:$0xf]
      %v231 = vld [vmem:[%s217 + $0x4c] sm:$0xf]
      %v232 = vld [vmem:[%s217 + $0x54] sm:$0xf]
      %v233 = vld [vmem:[%s217 + $0x58] sm:$0xf]
      %v234 = vld [vmem:[%s217 + $0x60] sm:$0xf]
      %v235 = vld [vmem:[%s217 + $0x64] sm:$0xf]
      %v236 = vld [vmem:[%s217 + $0x6c] sm:$0xf]
      %v237 = vld [vmem:[%s217 + $0x70] sm:$0xf]
      %v238 = vld [vmem:[%s217 + $0x78] sm:$0xf]
      %v239 = vld [vmem:[%s217 + $0x7c] sm:$0xf]
      %v240 = vld [vmem:[%s217 + $0x84] sm:$0xf]
      %v241 = vld [vmem:[%s217 + $0x88] sm:$0xf]
      %v242 = vld [vmem:[%s217 + $0x90] sm:$0xf]
      %v243 = vld [vmem:[%s217 + $0x94] sm:$0xf]
      %v244 = vld [vmem:[%s217 + $0x9c] sm:$0xf]
      %v245 = vld [vmem:[%s217 + $0xa0] sm:$0xf]
      %v246 = vld [vmem:[%s217 + $0xa8] sm:$0xf]
      %v247 = vld [vmem:[%s217 + $0xac] sm:$0xf]
      %v248 = vld [vmem:[%s217 + $0xb4] sm:$0xf]
      %v249 = vld [vmem:[%s217 + $0xb8] sm:$0xf]
      %v250 = vld [vmem:[%s1] sm:$0xf]
      %v251 = vld [vmem:[%s1 + $0x4] sm:$0xf]
      %v252 = vld [vmem:[%s1 + $0x8] sm:$0xf]
      %v253 = vld [vmem:[%s1 + $0xc] sm:$0xf]
      %v254 = vld [vmem:[%s1 + $0x10] sm:$0xf]
      %v255 = vld [vmem:[%s1 + $0x14] sm:$0xf]
      %v256 = vld [vmem:[%s1 + $0x18] sm:$0xf]
      %v257 = vld [vmem:[%s1 + $0x1c] sm:$0xf]
      %v258 = vld [vmem:[%s217 + $0x8] sm:$0x1]
      %v259 = vld [vmem:[%s217 + $0x14] sm:$0x1]
      %v260 = vld [vmem:[%s217 + $0x20] sm:$0x1]
      %v261 = vld [vmem:[%s217 + $0x2c] sm:$0x1]
      %v262 = vld [vmem:[%s217 + $0x38] sm:$0x1]
      %v263 = vld [vmem:[%s217 + $0x44] sm:$0x1]
      %v264 = vld [vmem:[%s217 + $0x50] sm:$0x1]
      %v265 = vld [vmem:[%s217 + $0x5c] sm:$0x1]
      %v266 = vld [vmem:[%s217 + $0x68] sm:$0x1]
      %v267 = vld [vmem:[%s217 + $0x74] sm:$0x1]
      %v268 = vld [vmem:[%s217 + $0x80] sm:$0x1]
      %v269 = vld [vmem:[%s217 + $0x8c] sm:$0x1]
      %v270 = vld [vmem:[%s217 + $0x98] sm:$0x1]
      %v271 = vld [vmem:[%s217 + $0xa4] sm:$0x1]
      %v272 = vld [vmem:[%s217 + $0xb0] sm:$0x1]
      %v273 = vld [vmem:[%s217 + $0xbc] sm:$0x1]
      %vm274 = vsmask.f32 3328
      %vm275 = vsmask.f32 7440
      %vm276 = vmor %vm274, %vm275
      %v278 = vshrl.u32 %v218, 16
      %v280 = vrot.slane %v278, 4
      %v281 = vshll.u32 %v218, 16
      %v283 = vrot.slane %v281, 5
      %v284 = vor.u32 %v280, %v283
      %v285 = vrot.slane %v284, 4
      %v287 = vshll.u32 %v219, 16
      %v289 = vrot.slane %v287, 5
      %v290 = vsel %vm276, %v285, %v289
      %v291 = vshrl.u32 %v219, 16
      %v293 = vrot.slane %v291, 4
      %v294 = vor.u32 %v293, %v289
      %v295 = vrot.slane %v294, 4
      %v297 = vshll.u32 %v258, 16
      %v299 = vrot.slane %v297, 5
      %v300 = vsel %vm276, %v295, %v299
      %v302 = vshrl.u32 %v220, 16
      %v304 = vrot.slane %v302, 4
      %v305 = vshll.u32 %v220, 16
      %v307 = vrot.slane %v305, 5
      %v308 = vor.u32 %v304, %v307
      %v309 = vrot.slane %v308, 4
      %v311 = vshll.u32 %v221, 16
      %v313 = vrot.slane %v311, 5
      %v314 = vsel %vm276, %v309, %v313
      %v315 = vshrl.u32 %v221, 16
      %v317 = vrot.slane %v315, 4
      %v318 = vor.u32 %v317, %v313
      %v319 = vrot.slane %v318, 4
      %v321 = vshll.u32 %v259, 16
      %v323 = vrot.slane %v321, 5
      %v324 = vsel %vm276, %v319, %v323
      %v326 = vshrl.u32 %v222, 16
      %v328 = vrot.slane %v326, 4
      %v329 = vshll.u32 %v222, 16
      %v331 = vrot.slane %v329, 5
      %v332 = vor.u32 %v328, %v331
      %v333 = vrot.slane %v332, 4
      %v335 = vshll.u32 %v223, 16
      %v337 = vrot.slane %v335, 5
      %v338 = vsel %vm276, %v333, %v337
      %v339 = vshrl.u32 %v223, 16
      %v341 = vrot.slane %v339, 4
      %v342 = vor.u32 %v341, %v337
      %v343 = vrot.slane %v342, 4
      %v345 = vshll.u32 %v260, 16
      %v347 = vrot.slane %v345, 5
      %v348 = vsel %vm276, %v343, %v347
      %v350 = vshrl.u32 %v224, 16
      %v352 = vrot.slane %v350, 4
      %v353 = vshll.u32 %v224, 16
      %v355 = vrot.slane %v353, 5
      %v356 = vor.u32 %v352, %v355
      %v357 = vrot.slane %v356, 4
      %v359 = vshll.u32 %v225, 16
      %v361 = vrot.slane %v359, 5
      %v362 = vsel %vm276, %v357, %v361
      %v363 = vshrl.u32 %v225, 16
      %v365 = vrot.slane %v363, 4
      %v366 = vor.u32 %v365, %v361
      %v367 = vrot.slane %v366, 4
      %v369 = vshll.u32 %v261, 16
      %v371 = vrot.slane %v369, 5
      %v372 = vsel %vm276, %v367, %v371
      %v374 = vshrl.u32 %v226, 16
      %v376 = vrot.slane %v374, 4
      %v377 = vshll.u32 %v226, 16
      %v379 = vrot.slane %v377, 5
      %v380 = vor.u32 %v376, %v379
      %v381 = vrot.slane %v380, 4
      %v383 = vshll.u32 %v227, 16
      %v385 = vrot.slane %v383, 5
      %v386 = vsel %vm276, %v381, %v385
      %v387 = vshrl.u32 %v227, 16
      %v389 = vrot.slane %v387, 4
      %v390 = vor.u32 %v389, %v385
      %v391 = vrot.slane %v390, 4
      %v393 = vshll.u32 %v262, 16
      %v395 = vrot.slane %v393, 5
      %v396 = vsel %vm276, %v391, %v395
      %v398 = vshrl.u32 %v228, 16
      %v400 = vrot.slane %v398, 4
      %v401 = vshll.u32 %v228, 16
      %v403 = vrot.slane %v401, 5
      %v404 = vor.u32 %v400, %v403
      %v405 = vrot.slane %v404, 4
      %v407 = vshll.u32 %v229, 16
      %v409 = vrot.slane %v407, 5
      %v410 = vsel %vm276, %v405, %v409
      %v411 = vshrl.u32 %v229, 16
      %v413 = vrot.slane %v411, 4
      %v414 = vor.u32 %v413, %v409
      %v415 = vrot.slane %v414, 4
      %v417 = vshll.u32 %v263, 16
      %v419 = vrot.slane %v417, 5
      %v420 = vsel %vm276, %v415, %v419
      %v422 = vshrl.u32 %v230, 16
      %v424 = vrot.slane %v422, 4
      %v425 = vshll.u32 %v230, 16
      %v427 = vrot.slane %v425, 5
      %v428 = vor.u32 %v424, %v427
      %v429 = vrot.slane %v428, 4
      %v431 = vshll.u32 %v231, 16
      %v433 = vrot.slane %v431, 5
      %v434 = vsel %vm276, %v429, %v433
      %v435 = vshrl.u32 %v231, 16
      %v437 = vrot.slane %v435, 4
      %v438 = vor.u32 %v437, %v433
      %v439 = vrot.slane %v438, 4
      %v441 = vshll.u32 %v264, 16
      %v443 = vrot.slane %v441, 5
      %v444 = vsel %vm276, %v439, %v443
      %v446 = vshrl.u32 %v232, 16
      %v448 = vrot.slane %v446, 4
      %v449 = vshll.u32 %v232, 16
      %v451 = vrot.slane %v449, 5
      %v452 = vor.u32 %v448, %v451
      %v453 = vrot.slane %v452, 4
      %v455 = vshll.u32 %v233, 16
      %v457 = vrot.slane %v455, 5
      %v458 = vsel %vm276, %v453, %v457
      %v459 = vshrl.u32 %v233, 16
      %v461 = vrot.slane %v459, 4
      %v462 = vor.u32 %v461, %v457
      %v463 = vrot.slane %v462, 4
      %v465 = vshll.u32 %v265, 16
      %v467 = vrot.slane %v465, 5
      %v468 = vsel %vm276, %v463, %v467
      %v470 = vshrl.u32 %v234, 16
      %v472 = vrot.slane %v470, 4
      %v473 = vshll.u32 %v234, 16
      %v475 = vrot.slane %v473, 5
      %v476 = vor.u32 %v472, %v475
      %v477 = vrot.slane %v476, 4
      %v479 = vshll.u32 %v235, 16
      %v481 = vrot.slane %v479, 5
      %v482 = vsel %vm276, %v477, %v481
      %v483 = vshrl.u32 %v235, 16
      %v485 = vrot.slane %v483, 4
      %v486 = vor.u32 %v485, %v481
      %v487 = vrot.slane %v486, 4
      %v489 = vshll.u32 %v266, 16
      %v491 = vrot.slane %v489, 5
      %v492 = vsel %vm276, %v487, %v491
      %v494 = vshrl.u32 %v236, 16
      %v496 = vrot.slane %v494, 4
      %v497 = vshll.u32 %v236, 16
      %v499 = vrot.slane %v497, 5
      %v500 = vor.u32 %v496, %v499
      %v501 = vrot.slane %v500, 4
      %v503 = vshll.u32 %v237, 16
      %v505 = vrot.slane %v503, 5
      %v506 = vsel %vm276, %v501, %v505
      %v507 = vshrl.u32 %v237, 16
      %v509 = vrot.slane %v507, 4
      %v510 = vor.u32 %v509, %v505
      %v511 = vrot.slane %v510, 4
      %v513 = vshll.u32 %v267, 16
      %v515 = vrot.slane %v513, 5
      %v516 = vsel %vm276, %v511, %v515
      %v518 = vshrl.u32 %v238, 16
      %v520 = vrot.slane %v518, 4
      %v521 = vshll.u32 %v238, 16
      %v523 = vrot.slane %v521, 5
      %v524 = vor.u32 %v520, %v523
      %v525 = vrot.slane %v524, 4
      %v527 = vshll.u32 %v239, 16
      %v529 = vrot.slane %v527, 5
      %v530 = vsel %vm276, %v525, %v529
      %v531 = vshrl.u32 %v239, 16
      %v533 = vrot.slane %v531, 4
      %v534 = vor.u32 %v533, %v529
      %v535 = vrot.slane %v534, 4
      %v537 = vshll.u32 %v268, 16
      %v539 = vrot.slane %v537, 5
      %v540 = vsel %vm276, %v535, %v539
      %v542 = vshrl.u32 %v240, 16
      %v544 = vrot.slane %v542, 4
      %v545 = vshll.u32 %v240, 16
      %v547 = vrot.slane %v545, 5
      %v548 = vor.u32 %v544, %v547
      %v549 = vrot.slane %v548, 4
      %v551 = vshll.u32 %v241, 16
      %v553 = vrot.slane %v551, 5
      %v554 = vsel %vm276, %v549, %v553
      %v555 = vshrl.u32 %v241, 16
      %v557 = vrot.slane %v555, 4
      %v558 = vor.u32 %v557, %v553
      %v559 = vrot.slane %v558, 4
      %v561 = vshll.u32 %v269, 16
      %v563 = vrot.slane %v561, 5
      %v564 = vsel %vm276, %v559, %v563
      %v566 = vshrl.u32 %v242, 16
      %v568 = vrot.slane %v566, 4
      %v569 = vshll.u32 %v242, 16
      %v571 = vrot.slane %v569, 5
      %v572 = vor.u32 %v568, %v571
      %v573 = vrot.slane %v572, 4
      %v575 = vshll.u32 %v243, 16
      %v577 = vrot.slane %v575, 5
      %v578 = vsel %vm276, %v573, %v577
      %v579 = vshrl.u32 %v243, 16
      %v581 = vrot.slane %v579, 4
      %v582 = vor.u32 %v581, %v577
      %v583 = vrot.slane %v582, 4
      %v585 = vshll.u32 %v270, 16
      %v587 = vrot.slane %v585, 5
      %v588 = vsel %vm276, %v583, %v587
      %v590 = vshrl.u32 %v244, 16
      %v592 = vrot.slane %v590, 4
      %v593 = vshll.u32 %v244, 16
      %v595 = vrot.slane %v593, 5
      %v596 = vor.u32 %v592, %v595
      %v597 = vrot.slane %v596, 4
      %v599 = vshll.u32 %v245, 16
      %v601 = vrot.slane %v599, 5
      %v602 = vsel %vm276, %v597, %v601
      %v603 = vshrl.u32 %v245, 16
      %v605 = vrot.slane %v603, 4
      %v606 = vor.u32 %v605, %v601
      %v607 = vrot.slane %v606, 4
      %v609 = vshll.u32 %v271, 16
      %v611 = vrot.slane %v609, 5
      %v612 = vsel %vm276, %v607, %v611
      %v614 = vshrl.u32 %v246, 16
      %v616 = vrot.slane %v614, 4
      %v617 = vshll.u32 %v246, 16
      %v619 = vrot.slane %v617, 5
      %v620 = vor.u32 %v616, %v619
      %v621 = vrot.slane %v620, 4
      %v623 = vshll.u32 %v247, 16
      %v625 = vrot.slane %v623, 5
      %v626 = vsel %vm276, %v621, %v625
      %v627 = vshrl.u32 %v247, 16
      %v629 = vrot.slane %v627, 4
      %v630 = vor.u32 %v629, %v625
      %v631 = vrot.slane %v630, 4
      %v633 = vshll.u32 %v272, 16
      %v635 = vrot.slane %v633, 5
      %v636 = vsel %vm276, %v631, %v635
      %v638 = vshrl.u32 %v248, 16
      %v640 = vrot.slane %v638, 4
      %v641 = vshll.u32 %v248, 16
      %v643 = vrot.slane %v641, 5
      %v644 = vor.u32 %v640, %v643
      %v645 = vrot.slane %v644, 4
      %v647 = vshll.u32 %v249, 16
      %v649 = vrot.slane %v647, 5
      %v650 = vsel %vm276, %v645, %v649
      %v651 = vshrl.u32 %v249, 16
      %v653 = vrot.slane %v651, 4
      %v654 = vor.u32 %v653, %v649
      %v655 = vrot.slane %v654, 4
      %v657 = vshll.u32 %v273, 16
      %v659 = vrot.slane %v657, 5
      %v660 = vsel %vm276, %v655, %v659
      %s661 = scalar_lea.vmem %s1, 32
      %v662 = vld [vmem:[%s661] sm:$0xf]
      %v663 = vld [vmem:[%s661 + $0x4] sm:$0xf]
      %v664 = vld [vmem:[%s661 + $0x8] sm:$0xf]
      %v665 = vld [vmem:[%s661 + $0xc] sm:$0xf]
      %v666 = vld [vmem:[%s661 + $0x10] sm:$0xf]
      %v667 = vld [vmem:[%s661 + $0x14] sm:$0xf]
      %v668 = vld [vmem:[%s661 + $0x18] sm:$0xf]
      %v669 = vld [vmem:[%s661 + $0x1c] sm:$0xf]
      %v670 = vunpack.c.l.b16 %v290
      %v671 = vunpack.c.l.b16 %v300
      %v672 = vunpack.c.l.b16 %v314
      %v673 = vunpack.c.l.b16 %v324
      %v674 = vunpack.c.l.b16 %v338
      %v675 = vunpack.c.l.b16 %v348
      %v676 = vunpack.c.l.b16 %v362
      %v677 = vunpack.c.l.b16 %v372
      %v678 = vunpack.c.l.b16 %v386
      %v679 = vunpack.c.l.b16 %v396
      %v680 = vunpack.c.l.b16 %v410
      %v681 = vunpack.c.l.b16 %v420
      %v682 = vunpack.c.l.b16 %v434
      %v683 = vunpack.c.l.b16 %v444
      %v684 = vunpack.c.l.b16 %v458
      %v685 = vunpack.c.l.b16 %v468
      %v686 = vunpack.c.l.b16 %v482
      %v687 = vunpack.c.l.b16 %v492
      %v688 = vunpack.c.l.b16 %v506
      %v689 = vunpack.c.l.b16 %v516
      %v690 = vunpack.c.l.b16 %v530
      %v691 = vunpack.c.l.b16 %v540
      %v692 = vunpack.c.l.b16 %v554
      %v693 = vunpack.c.l.b16 %v564
      %v694 = vunpack.c.l.b16 %v578
      %v695 = vunpack.c.l.b16 %v588
      %v696 = vunpack.c.l.b16 %v602
      %v697 = vunpack.c.l.b16 %v612
      %v698 = vunpack.c.l.b16 %v626
      %v699 = vunpack.c.l.b16 %v636
      %v700 = vunpack.c.l.b16 %v650
      %v701 = vunpack.c.l.b16 %v660
      %v702 = vpack.c.b16 %v671, %v670
      %v703 = vpack.c.b16 %v673, %v672
      %v704 = vpack.c.b16 %v675, %v674
      %v705 = vpack.c.b16 %v677, %v676
      %v706 = vpack.c.b16 %v679, %v678
      %v707 = vpack.c.b16 %v681, %v680
      %v708 = vpack.c.b16 %v683, %v682
      %v709 = vpack.c.b16 %v685, %v684
      %v710 = vpack.c.b16 %v687, %v686
      %v711 = vpack.c.b16 %v689, %v688
      %v712 = vpack.c.b16 %v691, %v690
      %v713 = vpack.c.b16 %v693, %v692
      %v714 = vpack.c.b16 %v695, %v694
      %v715 = vpack.c.b16 %v697, %v696
      %v716 = vpack.c.b16 %v699, %v698
      %v717 = vpack.c.b16 %v701, %v700
      %v726 = vunpack.c.l.b16 %v662
      %v727 = vunpack.c.l.b16 %v663
      %v728 = vunpack.c.l.b16 %v664
      %v729 = vunpack.c.l.b16 %v665
      %v730 = vunpack.c.l.b16 %v666
      %v731 = vunpack.c.l.b16 %v667
      %v732 = vunpack.c.l.b16 %v668
      %v733 = vunpack.c.l.b16 %v669
      %v734 = vpack.c.b16 %v727, %v726
      %v735 = vpack.c.b16 %v729, %v728
      %v736 = vpack.c.b16 %v731, %v730
      %v737 = vpack.c.b16 %v733, %v732
      %vm742 = vcmask 523264
      %v744 = vsel %vm742, %v702, 0
      %v747 = vsel %vm742, %v703, 0
      %v750 = vsel %vm742, %v704, 0
      %v753 = vsel %vm742, %v705, 0
      %v756 = vsel %vm742, %v706, 0
      %v759 = vsel %vm742, %v707, 0
      %v762 = vsel %vm742, %v708, 0
      %v765 = vsel %vm742, %v709, 0
      %v768 = vsel %vm742, %v710, 0
      %v771 = vsel %vm742, %v711, 0
      %v774 = vsel %vm742, %v712, 0
      %v777 = vsel %vm742, %v713, 0
      %v780 = vsel %vm742, %v714, 0
      %v783 = vsel %vm742, %v715, 0
      %v786 = vsel %vm742, %v716, 0
      %v789 = vsel %vm742, %v717, 0
      %791 = vmatprep.subr.bf16.mxu0 0
      %792 = vmatpush1.bf16.msra.mxu0 %v734
      %793 = vmatprep.subr.bf16.mxu0 0
      %794 = vmatpush1.bf16.msra.mxu0 %v735
      %795 = vmatprep.subr.bf16.mxu0 0
      %796 = vmatpush1.bf16.msra.mxu0 %v736
      %797 = vmatprep.subr.bf16.mxu0 0
      %798 = vmatpush1.bf16.msra.mxu0 %v737
      %799 = vmatprep.subr.bf16.mxu0 0
      %800 = vmatpush1.bf16.msra.mxu0 0
      %801 = vmatprep.subr.bf16.mxu0 0
      %802 = vmatpush1.bf16.msra.mxu0 0
      %803 = vmatprep.subr.bf16.mxu0 0
      %804 = vmatpush1.bf16.msra.mxu0 0
      %805 = vmatprep.subr.bf16.mxu0 0
      %806 = vmatpush1.bf16.msra.mxu0 0
      %807 = vmatprep.subr.bf16.mxu0 0
      %808 = vmatpush1.bf16.msra.mxu0 0
      %809 = vmatprep.subr.bf16.mxu0 0
      %810 = vmatpush1.bf16.msra.mxu0 0
      %811 = vmatprep.subr.bf16.mxu0 0
      %812 = vmatpush1.bf16.msra.mxu0 0
      %813 = vmatprep.subr.bf16.mxu0 0
      %814 = vmatpush1.bf16.msra.mxu0 0
      %815 = vmatprep.subr.bf16.mxu0 0
      %816 = vmatpush1.bf16.msra.mxu0 0
      %817 = vmatprep.subr.bf16.mxu0 0
      %818 = vmatpush1.bf16.msra.mxu0 0
      %819 = vmatprep.subr.bf16.mxu0 0
      %820 = vmatpush1.bf16.msra.mxu0 0
      %821 = vmatprep.subr.bf16.mxu0 0
      %822 = vmatpush1.bf16.msra.mxu0 0
      %823 = vmatprep.mubr.bf16.mxu0 0
      %824 = vmatmul.mubr.bf16.gmra.mrb[0].mxu0 %v744
      %v825 = vpop.f32.mrb[0].mxu0
      %v826 = vadd.f32 0.0, %v825
      %v827 = vpop.f32.mrb[0].mxu0
      %v828 = vpop.f32.mrb[0].mxu0
      %v829 = vadd.f32 0.0, %v828
      %v830 = vpop.f32.mrb[0].mxu0
      %831 = vmatprep.mubr.bf16.mxu0 0
      %832 = vmatmul.mubr.bf16.gmra.mrb[0].mxu0 %v747
      %v833 = vpop.f32.mrb[0].mxu0
      %v834 = vadd.f32 0.0, %v833
      %v835 = vpop.f32.mrb[0].mxu0
      %v836 = vpop.f32.mrb[0].mxu0
      %v837 = vadd.f32 0.0, %v836
      %v838 = vpop.f32.mrb[0].mxu0
      %839 = vmatprep.mubr.bf16.mxu0 0
      %840 = vmatmul.mubr.bf16.gmra.mrb[0].mxu0 %v750
      %v841 = vpop.f32.mrb[0].mxu0
      %v842 = vadd.f32 0.0, %v841
      %v843 = vpop.f32.mrb[0].mxu0
      %v844 = vpop.f32.mrb[0].mxu0
      %v845 = vadd.f32 0.0, %v844
      %v846 = vpop.f32.mrb[0].mxu0
      %847 = vmatprep.mubr.bf16.mxu0 0
      %848 = vmatmul.mubr.bf16.gmra.mrb[0].mxu0 %v753
      %v849 = vpop.f32.mrb[0].mxu0
      %v850 = vadd.f32 0.0, %v849
      %v851 = vpop.f32.mrb[0].mxu0
      %v852 = vpop.f32.mrb[0].mxu0
      %v853 = vadd.f32 0.0, %v852
      %v854 = vpop.f32.mrb[0].mxu0
      %855 = vmatprep.mubr.bf16.mxu0 0
      %856 = vmatmul.mubr.bf16.gmra.mrb[0].mxu0 %v756
      %v857 = vpop.f32.mrb[0].mxu0
      %v858 = vadd.f32 0.0, %v857
      %v859 = vpop.f32.mrb[0].mxu0
      %v860 = vpop.f32.mrb[0].mxu0
      %v861 = vadd.f32 0.0, %v860
      %v862 = vpop.f32.mrb[0].mxu0
      %863 = vmatprep.mubr.bf16.mxu0 0
      %864 = vmatmul.mubr.bf16.gmra.mrb[0].mxu0 %v759
      %v865 = vpop.f32.mrb[0].mxu0
      %v866 = vadd.f32 0.0, %v865
      %v867 = vpop.f32.mrb[0].mxu0
      %v868 = vpop.f32.mrb[0].mxu0
      %v869 = vadd.f32 0.0, %v868
      %v870 = vpop.f32.mrb[0].mxu0
      %871 = vmatprep.mubr.bf16.mxu0 0
      %872 = vmatmul.mubr.bf16.gmra.mrb[0].mxu0 %v762
      %v873 = vpop.f32.mrb[0].mxu0
      %v874 = vadd.f32 0.0, %v873
      %v875 = vpop.f32.mrb[0].mxu0
      %v876 = vpop.f32.mrb[0].mxu0
      %v877 = vadd.f32 0.0, %v876
      %v878 = vpop.f32.mrb[0].mxu0
      %879 = vmatprep.mubr.bf16.mxu0 0
      %880 = vmatmul.mubr.bf16.gmra.mrb[0].mxu0 %v765
      %v881 = vpop.f32.mrb[0].mxu0
      %v882 = vadd.f32 0.0, %v881
      %v883 = vpop.f32.mrb[0].mxu0
      %v884 = vpop.f32.mrb[0].mxu0
      %v885 = vadd.f32 0.0, %v884
      %v886 = vpop.f32.mrb[0].mxu0
      %887 = vmatprep.mubr.bf16.mxu0 0
      %888 = vmatmul.mubr.bf16.gmra.mrb[0].mxu0 %v768
      %v889 = vpop.f32.mrb[0].mxu0
      %v890 = vadd.f32 0.0, %v889
      %v891 = vpop.f32.mrb[0].mxu0
      %v892 = vpop.f32.mrb[0].mxu0
      %v893 = vadd.f32 0.0, %v892
      %v894 = vpop.f32.mrb[0].mxu0
      %895 = vmatprep.mubr.bf16.mxu0 0
      %896 = vmatmul.mubr.bf16.gmra.mrb[0].mxu0 %v771
      %v897 = vpop.f32.mrb[0].mxu0
      %v898 = vadd.f32 0.0, %v897
      %v899 = vpop.f32.mrb[0].mxu0
      %v900 = vpop.f32.mrb[0].mxu0
      %v901 = vadd.f32 0.0, %v900
      %v902 = vpop.f32.mrb[0].mxu0
      %903 = vmatprep.mubr.bf16.mxu0 0
      %904 = vmatmul.mubr.bf16.gmra.mrb[0].mxu0 %v774
      %v905 = vpop.f32.mrb[0].mxu0
      %v906 = vadd.f32 0.0, %v905
      %v907 = vpop.f32.mrb[0].mxu0
      %v908 = vpop.f32.mrb[0].mxu0
      %v909 = vadd.f32 0.0, %v908
      %v910 = vpop.f32.mrb[0].mxu0
      %911 = vmatprep.mubr.bf16.mxu0 0
      %912 = vmatmul.mubr.bf16.gmra.mrb[0].mxu0 %v777
      %v913 = vpop.f32.mrb[0].mxu0
      %v914 = vadd.f32 0.0, %v913
      %v915 = vpop.f32.mrb[0].mxu0
      %v916 = vpop.f32.mrb[0].mxu0
      %v917 = vadd.f32 0.0, %v916
      %v918 = vpop.f32.mrb[0].mxu0
      %919 = vmatprep.mubr.bf16.mxu0 0
      %920 = vmatmul.mubr.bf16.gmra.mrb[0].mxu0 %v780
      %v921 = vpop.f32.mrb[0].mxu0
      %v922 = vadd.f32 0.0, %v921
      %v923 = vpop.f32.mrb[0].mxu0
      %v924 = vpop.f32.mrb[0].mxu0
      %v925 = vadd.f32 0.0, %v924
      %v926 = vpop.f32.mrb[0].mxu0
      %927 = vmatprep.mubr.bf16.mxu0 0
      %928 = vmatmul.mubr.bf16.gmra.mrb[0].mxu0 %v783
      %v929 = vpop.f32.mrb[0].mxu0
      %v930 = vadd.f32 0.0, %v929
      %v931 = vpop.f32.mrb[0].mxu0
      %v932 = vpop.f32.mrb[0].mxu0
      %v933 = vadd.f32 0.0, %v932
      %v934 = vpop.f32.mrb[0].mxu0
      %935 = vmatprep.mubr.bf16.mxu0 0
      %936 = vmatmul.mubr.bf16.gmra.mrb[0].mxu0 %v786
      %v937 = vpop.f32.mrb[0].mxu0
      %v938 = vadd.f32 0.0, %v937
      %v939 = vpop.f32.mrb[0].mxu0
      %v940 = vpop.f32.mrb[0].mxu0
      %v941 = vadd.f32 0.0, %v940
      %v942 = vpop.f32.mrb[0].mxu0
      %943 = vmatprep.mubr.bf16.mxu0 0
      %944 = vmatmul.mubr.bf16.gmra.mrb[0].mxu0 %v789
      %v945 = vpop.f32.mrb[0].mxu0
      %v946 = vadd.f32 0.0, %v945
      %v947 = vpop.f32.mrb[0].mxu0
      %v948 = vpop.f32.mrb[0].mxu0
      %v949 = vadd.f32 0.0, %v948
      %v950 = vpop.f32.mrb[0].mxu0
      %951 = vdwg.mxu0
      %v984 = vunpack.c.l.b16 %v218
      %v985 = vunpack.c.l.b16 %v219
      %v986 = vunpack.c.l.b16 %v220
      %v987 = vunpack.c.l.b16 %v221
      %v988 = vunpack.c.l.b16 %v222
      %v989 = vunpack.c.l.b16 %v223
      %v990 = vunpack.c.l.b16 %v224
      %v991 = vunpack.c.l.b16 %v225
      %v992 = vunpack.c.l.b16 %v226
      %v993 = vunpack.c.l.b16 %v227
      %v994 = vunpack.c.l.b16 %v228
      %v995 = vunpack.c.l.b16 %v229
      %v996 = vunpack.c.l.b16 %v230
      %v997 = vunpack.c.l.b16 %v231
      %v998 = vunpack.c.l.b16 %v232
      %v999 = vunpack.c.l.b16 %v233
      %v1000 = vunpack.c.l.b16 %v234
      %v1001 = vunpack.c.l.b16 %v235
      %v1002 = vunpack.c.l.b16 %v236
      %v1003 = vunpack.c.l.b16 %v237
      %v1004 = vunpack.c.l.b16 %v238
      %v1005 = vunpack.c.l.b16 %v239
      %v1006 = vunpack.c.l.b16 %v240
      %v1007 = vunpack.c.l.b16 %v241
      %v1008 = vunpack.c.l.b16 %v242
      %v1009 = vunpack.c.l.b16 %v243
      %v1010 = vunpack.c.l.b16 %v244
      %v1011 = vunpack.c.l.b16 %v245
      %v1012 = vunpack.c.l.b16 %v246
      %v1013 = vunpack.c.l.b16 %v247
      %v1014 = vunpack.c.l.b16 %v248
      %v1015 = vunpack.c.l.b16 %v249
      %v1016 = vpack.c.b16 %v985, %v984
      %v1017 = vpack.c.b16 %v987, %v986
      %v1018 = vpack.c.b16 %v989, %v988
      %v1019 = vpack.c.b16 %v991, %v990
      %v1020 = vpack.c.b16 %v993, %v992
      %v1021 = vpack.c.b16 %v995, %v994
      %v1022 = vpack.c.b16 %v997, %v996
      %v1023 = vpack.c.b16 %v999, %v998
      %v1024 = vpack.c.b16 %v1001, %v1000
      %v1025 = vpack.c.b16 %v1003, %v1002
      %v1026 = vpack.c.b16 %v1005, %v1004
      %v1027 = vpack.c.b16 %v1007, %v1006
      %v1028 = vpack.c.b16 %v1009, %v1008
      %v1029 = vpack.c.b16 %v1011, %v1010
      %v1030 = vpack.c.b16 %v1013, %v1012
      %v1031 = vpack.c.b16 %v1015, %v1014
      %v1040 = vunpack.c.l.b16 %v250
      %v1041 = vunpack.c.l.b16 %v251
      %v1042 = vunpack.c.l.b16 %v252
      %v1043 = vunpack.c.l.b16 %v253
      %v1044 = vunpack.c.l.b16 %v254
      %v1045 = vunpack.c.l.b16 %v255
      %v1046 = vunpack.c.l.b16 %v256
      %v1047 = vunpack.c.l.b16 %v257
      %v1048 = vpack.c.b16 %v1041, %v1040
      %v1049 = vpack.c.b16 %v1043, %v1042
      %v1050 = vpack.c.b16 %v1045, %v1044
      %v1051 = vpack.c.b16 %v1047, %v1046
      %v1057 = vsel %vm742, %v1016, 0
      %v1060 = vsel %vm742, %v1017, 0
      %v1063 = vsel %vm742, %v1018, 0
      %v1066 = vsel %vm742, %v1019, 0
      %v1069 = vsel %vm742, %v1020, 0
      %v1072 = vsel %vm742, %v1021, 0
      %v1075 = vsel %vm742, %v1022, 0
      %v1078 = vsel %vm742, %v1023, 0
      %v1081 = vsel %vm742, %v1024, 0
      %v1084 = vsel %vm742, %v1025, 0
      %v1087 = vsel %vm742, %v1026, 0
      %v1090 = vsel %vm742, %v1027, 0
      %v1093 = vsel %vm742, %v1028, 0
      %v1096 = vsel %vm742, %v1029, 0
      %v1099 = vsel %vm742, %v1030, 0
      %v1102 = vsel %vm742, %v1031, 0
      %1104 = vmatprep.subr.bf16.mxu0 0
      %1105 = vmatpush1.bf16.msra.mxu0 %v1048
      %1106 = vmatprep.subr.bf16.mxu0 0
      %1107 = vmatpush1.bf16.msra.mxu0 %v1049
      %1108 = vmatprep.subr.bf16.mxu0 0
      %1109 = vmatpush1.bf16.msra.mxu0 %v1050
      %1110 = vmatprep.subr.bf16.mxu0 0
      %1111 = vmatpush1.bf16.msra.mxu0 %v1051
      %1112 = vmatprep.subr.bf16.mxu0 0
      %1113 = vmatpush1.bf16.msra.mxu0 0
      %1114 = vmatprep.subr.bf16.mxu0 0
      %1115 = vmatpush1.bf16.msra.mxu0 0
      %1116 = vmatprep.subr.bf16.mxu0 0
      %1117 = vmatpush1.bf16.msra.mxu0 0
      %1118 = vmatprep.subr.bf16.mxu0 0
      %1119 = vmatpush1.bf16.msra.mxu0 0
      %1120 = vmatprep.subr.bf16.mxu0 0
      %1121 = vmatpush1.bf16.msra.mxu0 0
      %1122 = vmatprep.subr.bf16.mxu0 0
      %1123 = vmatpush1.bf16.msra.mxu0 0
      %1124 = vmatprep.subr.bf16.mxu0 0
      %1125 = vmatpush1.bf16.msra.mxu0 0
      %1126 = vmatprep.subr.bf16.mxu0 0
      %1127 = vmatpush1.bf16.msra.mxu0 0
      %1128 = vmatprep.subr.bf16.mxu0 0
      %1129 = vmatpush1.bf16.msra.mxu0 0
      %1130 = vmatprep.subr.bf16.mxu0 0
      %1131 = vmatpush1.bf16.msra.mxu0 0
      %1132 = vmatprep.subr.bf16.mxu0 0
      %1133 = vmatpush1.bf16.msra.mxu0 0
      %1134 = vmatprep.subr.bf16.mxu0 0
      %1135 = vmatpush1.bf16.msra.mxu0 0
      %1136 = vmatprep.mubr.bf16.mxu0 0
      %1137 = vmatmul.mubr.bf16.gmra.mrb[0].mxu0 %v1057
      %v1138 = vpop.f32.mrb[0].mxu0
      %v1139 = vadd.f32 %v826, %v1138
      %v1140 = vpop.f32.mrb[0].mxu0
      %v1141 = vpop.f32.mrb[0].mxu0
      %v1142 = vadd.f32 %v829, %v1141
      %v1143 = vpop.f32.mrb[0].mxu0
      %1144 = vmatprep.mubr.bf16.mxu0 0
      %1145 = vmatmul.mubr.bf16.gmra.mrb[0].mxu0 %v1060
      %v1146 = vpop.f32.mrb[0].mxu0
      %v1147 = vadd.f32 %v834, %v1146
      %v1148 = vpop.f32.mrb[0].mxu0
      %v1149 = vpop.f32.mrb[0].mxu0
      %v1150 = vadd.f32 %v837, %v1149
      %v1151 = vpop.f32.mrb[0].mxu0
      %1152 = vmatprep.mubr.bf16.mxu0 0
      %1153 = vmatmul.mubr.bf16.gmra.mrb[0].mxu0 %v1063
      %v1154 = vpop.f32.mrb[0].mxu0
      %v1155 = vadd.f32 %v842, %v1154
      %v1156 = vpop.f32.mrb[0].mxu0
      %v1157 = vpop.f32.mrb[0].mxu0
      %v1158 = vadd.f32 %v845, %v1157
      %v1159 = vpop.f32.mrb[0].mxu0
      %1160 = vmatprep.mubr.bf16.mxu0 0
      %1161 = vmatmul.mubr.bf16.gmra.mrb[0].mxu0 %v1066
      %v1162 = vpop.f32.mrb[0].mxu0
      %v1163 = vadd.f32 %v850, %v1162
      %v1164 = vpop.f32.mrb[0].mxu0
      %v1165 = vpop.f32.mrb[0].mxu0
      %v1166 = vadd.f32 %v853, %v1165
      %v1167 = vpop.f32.mrb[0].mxu0
      %1168 = vmatprep.mubr.bf16.mxu0 0
      %1169 = vmatmul.mubr.bf16.gmra.mrb[0].mxu0 %v1069
      %v1170 = vpop.f32.mrb[0].mxu0
      %v1171 = vadd.f32 %v858, %v1170
      %v1172 = vpop.f32.mrb[0].mxu0
      %v1173 = vpop.f32.mrb[0].mxu0
      %v1174 = vadd.f32 %v861, %v1173
      %v1175 = vpop.f32.mrb[0].mxu0
      %1176 = vmatprep.mubr.bf16.mxu0 0
      %1177 = vmatmul.mubr.bf16.gmra.mrb[0].mxu0 %v1072
      %v1178 = vpop.f32.mrb[0].mxu0
      %v1179 = vadd.f32 %v866, %v1178
      %v1180 = vpop.f32.mrb[0].mxu0
      %v1181 = vpop.f32.mrb[0].mxu0
      %v1182 = vadd.f32 %v869, %v1181
      %v1183 = vpop.f32.mrb[0].mxu0
      %1184 = vmatprep.mubr.bf16.mxu0 0
      %1185 = vmatmul.mubr.bf16.gmra.mrb[0].mxu0 %v1075
      %v1186 = vpop.f32.mrb[0].mxu0
      %v1187 = vadd.f32 %v874, %v1186
      %v1188 = vpop.f32.mrb[0].mxu0
      %v1189 = vpop.f32.mrb[0].mxu0
      %v1190 = vadd.f32 %v877, %v1189
      %v1191 = vpop.f32.mrb[0].mxu0
      %1192 = vmatprep.mubr.bf16.mxu0 0
      %1193 = vmatmul.mubr.bf16.gmra.mrb[0].mxu0 %v1078
      %v1194 = vpop.f32.mrb[0].mxu0
      %v1195 = vadd.f32 %v882, %v1194
      %v1196 = vpop.f32.mrb[0].mxu0
      %v1197 = vpop.f32.mrb[0].mxu0
      %v1198 = vadd.f32 %v885, %v1197
      %v1199 = vpop.f32.mrb[0].mxu0
      %1200 = vmatprep.mubr.bf16.mxu0 0
      %1201 = vmatmul.mubr.bf16.gmra.mrb[0].mxu0 %v1081
      %v1202 = vpop.f32.mrb[0].mxu0
      %v1203 = vadd.f32 %v890, %v1202
      %v1204 = vpop.f32.mrb[0].mxu0
      %v1205 = vpop.f32.mrb[0].mxu0
      %v1206 = vadd.f32 %v893, %v1205
      %v1207 = vpop.f32.mrb[0].mxu0
      %1208 = vmatprep.mubr.bf16.mxu0 0
      %1209 = vmatmul.mubr.bf16.gmra.mrb[0].mxu0 %v1084
      %v1210 = vpop.f32.mrb[0].mxu0
      %v1211 = vadd.f32 %v898, %v1210
      %v1212 = vpop.f32.mrb[0].mxu0
      %v1213 = vpop.f32.mrb[0].mxu0
      %v1214 = vadd.f32 %v901, %v1213
      %v1215 = vpop.f32.mrb[0].mxu0
      %1216 = vmatprep.mubr.bf16.mxu0 0
      %1217 = vmatmul.mubr.bf16.gmra.mrb[0].mxu0 %v1087
      %v1218 = vpop.f32.mrb[0].mxu0
      %v1219 = vadd.f32 %v906, %v1218
      %v1220 = vpop.f32.mrb[0].mxu0
      %v1221 = vpop.f32.mrb[0].mxu0
      %v1222 = vadd.f32 %v909, %v1221
      %v1223 = vpop.f32.mrb[0].mxu0
      %1224 = vmatprep.mubr.bf16.mxu0 0
      %1225 = vmatmul.mubr.bf16.gmra.mrb[0].mxu0 %v1090
      %v1226 = vpop.f32.mrb[0].mxu0
      %v1227 = vadd.f32 %v914, %v1226
      %v1228 = vpop.f32.mrb[0].mxu0
      %v1229 = vpop.f32.mrb[0].mxu0
      %v1230 = vadd.f32 %v917, %v1229
      %v1231 = vpop.f32.mrb[0].mxu0
      %1232 = vmatprep.mubr.bf16.mxu0 0
      %1233 = vmatmul.mubr.bf16.gmra.mrb[0].mxu0 %v1093
      %v1234 = vpop.f32.mrb[0].mxu0
      %v1235 = vadd.f32 %v922, %v1234
      %v1236 = vpop.f32.mrb[0].mxu0
      %v1237 = vpop.f32.mrb[0].mxu0
      %v1238 = vadd.f32 %v925, %v1237
      %v1239 = vpop.f32.mrb[0].mxu0
      %1240 = vmatprep.mubr.bf16.mxu0 0
      %1241 = vmatmul.mubr.bf16.gmra.mrb[0].mxu0 %v1096
      %v1242 = vpop.f32.mrb[0].mxu0
      %v1243 = vadd.f32 %v930, %v1242
      %v1244 = vpop.f32.mrb[0].mxu0
      %v1245 = vpop.f32.mrb[0].mxu0
      %v1246 = vadd.f32 %v933, %v1245
      %v1247 = vpop.f32.mrb[0].mxu0
      %1248 = vmatprep.mubr.bf16.mxu0 0
      %1249 = vmatmul.mubr.bf16.gmra.mrb[0].mxu0 %v1099
      %v1250 = vpop.f32.mrb[0].mxu0
      %v1251 = vadd.f32 %v938, %v1250
      %v1252 = vpop.f32.mrb[0].mxu0
      %v1253 = vpop.f32.mrb[0].mxu0
      %v1254 = vadd.f32 %v941, %v1253
      %v1255 = vpop.f32.mrb[0].mxu0
      %1256 = vmatprep.mubr.bf16.mxu0 0
      %1257 = vmatmul.mubr.bf16.gmra.mrb[0].mxu0 %v1102
      %v1258 = vpop.f32.mrb[0].mxu0
      %v1259 = vadd.f32 %v946, %v1258
      %v1260 = vpop.f32.mrb[0].mxu0
      %v1261 = vpop.f32.mrb[0].mxu0
      %v1262 = vadd.f32 %v949, %v1261
      %v1263 = vpop.f32.mrb[0].mxu0
      %1264 = vdwg.mxu0
      %v1265 = vld [vmem:[%s217] sm:$0xe]
      %v1266 = vld [vmem:[%s217 + $0xc] sm:$0xe]
      %v1267 = vld [vmem:[%s217 + $0x18] sm:$0xe]
      %v1268 = vld [vmem:[%s217 + $0x24] sm:$0xe]
      %v1269 = vld [vmem:[%s217 + $0x30] sm:$0xe]
      %v1270 = vld [vmem:[%s217 + $0x3c] sm:$0xe]
      %v1271 = vld [vmem:[%s217 + $0x48] sm:$0xe]
      %v1272 = vld [vmem:[%s217 + $0x54] sm:$0xe]
      %v1273 = vld [vmem:[%s217 + $0x60] sm:$0xe]
      %v1274 = vld [vmem:[%s217 + $0x6c] sm:$0xe]
      %v1275 = vld [vmem:[%s217 + $0x78] sm:$0xe]
      %v1276 = vld [vmem:[%s217 + $0x84] sm:$0xe]
      %v1277 = vld [vmem:[%s217 + $0x90] sm:$0xe]
      %v1278 = vld [vmem:[%s217 + $0x9c] sm:$0xe]
      %v1279 = vld [vmem:[%s217 + $0xa8] sm:$0xe]
      %v1280 = vld [vmem:[%s217 + $0xb4] sm:$0xe]
      %vm1313 = vcmask 1042432
      %vm1314 = vcmask 1046532
      %vm1315 = vmor %vm1313, %vm1314
      %v1316 = vrot.slane %v1265, 5
      %v1317 = vrot.slane %v1316, 4
      %v1318 = vrot.slane %v219, 5
      %v1319 = vsel %vm1315, %v1317, %v1318
      %v1320 = vrot.slane %v1318, 4
      %v1321 = vrot.slane %v258, 5
      %v1322 = vsel %vm1315, %v1320, %v1321
      %v1323 = vrot.slane %v1266, 5
      %v1324 = vrot.slane %v1323, 4
      %v1325 = vrot.slane %v221, 5
      %v1326 = vsel %vm1315, %v1324, %v1325
      %v1327 = vrot.slane %v1325, 4
      %v1328 = vrot.slane %v259, 5
      %v1329 = vsel %vm1315, %v1327, %v1328
      %v1330 = vrot.slane %v1267, 5
      %v1331 = vrot.slane %v1330, 4
      %v1332 = vrot.slane %v223, 5
      %v1333 = vsel %vm1315, %v1331, %v1332
      %v1334 = vrot.slane %v1332, 4
      %v1335 = vrot.slane %v260, 5
      %v1336 = vsel %vm1315, %v1334, %v1335
      %v1337 = vrot.slane %v1268, 5
      %v1338 = vrot.slane %v1337, 4
      %v1339 = vrot.slane %v225, 5
      %v1340 = vsel %vm1315, %v1338, %v1339
      %v1341 = vrot.slane %v1339, 4
      %v1342 = vrot.slane %v261, 5
      %v1343 = vsel %vm1315, %v1341, %v1342
      %v1344 = vrot.slane %v1269, 5
      %v1345 = vrot.slane %v1344, 4
      %v1346 = vrot.slane %v227, 5
      %v1347 = vsel %vm1315, %v1345, %v1346
      %v1348 = vrot.slane %v1346, 4
      %v1349 = vrot.slane %v262, 5
      %v1350 = vsel %vm1315, %v1348, %v1349
      %v1351 = vrot.slane %v1270, 5
      %v1352 = vrot.slane %v1351, 4
      %v1353 = vrot.slane %v229, 5
      %v1354 = vsel %vm1315, %v1352, %v1353
      %v1355 = vrot.slane %v1353, 4
      %v1356 = vrot.slane %v263, 5
      %v1357 = vsel %vm1315, %v1355, %v1356
      %v1358 = vrot.slane %v1271, 5
      %v1359 = vrot.slane %v1358, 4
      %v1360 = vrot.slane %v231, 5
      %v1361 = vsel %vm1315, %v1359, %v1360
      %v1362 = vrot.slane %v1360, 4
      %v1363 = vrot.slane %v264, 5
      %v1364 = vsel %vm1315, %v1362, %v1363
      %v1365 = vrot.slane %v1272, 5
      %v1366 = vrot.slane %v1365, 4
      %v1367 = vrot.slane %v233, 5
      %v1368 = vsel %vm1315, %v1366, %v1367
      %v1369 = vrot.slane %v1367, 4
      %v1370 = vrot.slane %v265, 5
      %v1371 = vsel %vm1315, %v1369, %v1370
      %v1372 = vrot.slane %v1273, 5
      %v1373 = vrot.slane %v1372, 4
      %v1374 = vrot.slane %v235, 5
      %v1375 = vsel %vm1315, %v1373, %v1374
      %v1376 = vrot.slane %v1374, 4
      %v1377 = vrot.slane %v266, 5
      %v1378 = vsel %vm1315, %v1376, %v1377
      %v1379 = vrot.slane %v1274, 5
      %v1380 = vrot.slane %v1379, 4
      %v1381 = vrot.slane %v237, 5
      %v1382 = vsel %vm1315, %v1380, %v1381
      %v1383 = vrot.slane %v1381, 4
      %v1384 = vrot.slane %v267, 5
      %v1385 = vsel %vm1315, %v1383, %v1384
      %v1386 = vrot.slane %v1275, 5
      %v1387 = vrot.slane %v1386, 4
      %v1388 = vrot.slane %v239, 5
      %v1389 = vsel %vm1315, %v1387, %v1388
      %v1390 = vrot.slane %v1388, 4
      %v1391 = vrot.slane %v268, 5
      %v1392 = vsel %vm1315, %v1390, %v1391
      %v1393 = vrot.slane %v1276, 5
      %v1394 = vrot.slane %v1393, 4
      %v1395 = vrot.slane %v241, 5
      %v1396 = vsel %vm1315, %v1394, %v1395
      %v1397 = vrot.slane %v1395, 4
      %v1398 = vrot.slane %v269, 5
      %v1399 = vsel %vm1315, %v1397, %v1398
      %v1400 = vrot.slane %v1277, 5
      %v1401 = vrot.slane %v1400, 4
      %v1402 = vrot.slane %v243, 5
      %v1403 = vsel %vm1315, %v1401, %v1402
      %v1404 = vrot.slane %v1402, 4
      %v1405 = vrot.slane %v270, 5
      %v1406 = vsel %vm1315, %v1404, %v1405
      %v1407 = vrot.slane %v1278, 5
      %v1408 = vrot.slane %v1407, 4
      %v1409 = vrot.slane %v245, 5
      %v1410 = vsel %vm1315, %v1408, %v1409
      %v1411 = vrot.slane %v1409, 4
      %v1412 = vrot.slane %v271, 5
      %v1413 = vsel %vm1315, %v1411, %v1412
      %v1414 = vrot.slane %v1279, 5
      %v1415 = vrot.slane %v1414, 4
      %v1416 = vrot.slane %v247, 5
      %v1417 = vsel %vm1315, %v1415, %v1416
      %v1418 = vrot.slane %v1416, 4
      %v1419 = vrot.slane %v272, 5
      %v1420 = vsel %vm1315, %v1418, %v1419
      %v1421 = vrot.slane %v1280, 5
      %v1422 = vrot.slane %v1421, 4
      %v1423 = vrot.slane %v249, 5
      %v1424 = vsel %vm1315, %v1422, %v1423
      %v1425 = vrot.slane %v1423, 4
      %v1426 = vrot.slane %v273, 5
      %v1427 = vsel %vm1315, %v1425, %v1426
      %s1428 = scalar_lea.vmem %s1, 64
      %v1429 = vld [vmem:[%s1428] sm:$0xf]
      %v1430 = vld [vmem:[%s1428 + $0x4] sm:$0xf]
      %v1431 = vld [vmem:[%s1428 + $0x8] sm:$0xf]
      %v1432 = vld [vmem:[%s1428 + $0xc] sm:$0xf]
      %v1433 = vld [vmem:[%s1428 + $0x10] sm:$0xf]
      %v1434 = vld [vmem:[%s1428 + $0x14] sm:$0xf]
      %v1435 = vld [vmem:[%s1428 + $0x18] sm:$0xf]
      %v1436 = vld [vmem:[%s1428 + $0x1c] sm:$0xf]
      %v1437 = vunpack.c.l.b16 %v1319
      %v1438 = vunpack.c.l.b16 %v1322
      %v1439 = vunpack.c.l.b16 %v1326
      %v1440 = vunpack.c.l.b16 %v1329
      %v1441 = vunpack.c.l.b16 %v1333
      %v1442 = vunpack.c.l.b16 %v1336
      %v1443 = vunpack.c.l.b16 %v1340
      %v1444 = vunpack.c.l.b16 %v1343
      %v1445 = vunpack.c.l.b16 %v1347
      %v1446 = vunpack.c.l.b16 %v1350
      %v1447 = vunpack.c.l.b16 %v1354
      %v1448 = vunpack.c.l.b16 %v1357
      %v1449 = vunpack.c.l.b16 %v1361
      %v1450 = vunpack.c.l.b16 %v1364
      %v1451 = vunpack.c.l.b16 %v1368
      %v1452 = vunpack.c.l.b16 %v1371
      %v1453 = vunpack.c.l.b16 %v1375
      %v1454 = vunpack.c.l.b16 %v1378
      %v1455 = vunpack.c.l.b16 %v1382
      %v1456 = vunpack.c.l.b16 %v1385
      %v1457 = vunpack.c.l.b16 %v1389
      %v1458 = vunpack.c.l.b16 %v1392
      %v1459 = vunpack.c.l.b16 %v1396
      %v1460 = vunpack.c.l.b16 %v1399
      %v1461 = vunpack.c.l.b16 %v1403
      %v1462 = vunpack.c.l.b16 %v1406
      %v1463 = vunpack.c.l.b16 %v1410
      %v1464 = vunpack.c.l.b16 %v1413
      %v1465 = vunpack.c.l.b16 %v1417
      %v1466 = vunpack.c.l.b16 %v1420
      %v1467 = vunpack.c.l.b16 %v1424
      %v1468 = vunpack.c.l.b16 %v1427
      %v1469 = vpack.c.b16 %v1438, %v1437
      %v1470 = vpack.c.b16 %v1440, %v1439
      %v1471 = vpack.c.b16 %v1442, %v1441
      %v1472 = vpack.c.b16 %v1444, %v1443
      %v1473 = vpack.c.b16 %v1446, %v1445
      %v1474 = vpack.c.b16 %v1448, %v1447
      %v1475 = vpack.c.b16 %v1450, %v1449
      %v1476 = vpack.c.b16 %v1452, %v1451
      %v1477 = vpack.c.b16 %v1454, %v1453
      %v1478 = vpack.c.b16 %v1456, %v1455
      %v1479 = vpack.c.b16 %v1458, %v1457
      %v1480 = vpack.c.b16 %v1460, %v1459
      %v1481 = vpack.c.b16 %v1462, %v1461
      %v1482 = vpack.c.b16 %v1464, %v1463
      %v1483 = vpack.c.b16 %v1466, %v1465
      %v1484 = vpack.c.b16 %v1468, %v1467
      %v1493 = vunpack.c.l.b16 %v1429
      %v1494 = vunpack.c.l.b16 %v1430
      %v1495 = vunpack.c.l.b16 %v1431
      %v1496 = vunpack.c.l.b16 %v1432
      %v1497 = vunpack.c.l.b16 %v1433
      %v1498 = vunpack.c.l.b16 %v1434
      %v1499 = vunpack.c.l.b16 %v1435
      %v1500 = vunpack.c.l.b16 %v1436
      %v1501 = vpack.c.b16 %v1494, %v1493
      %v1502 = vpack.c.b16 %v1496, %v1495
      %v1503 = vpack.c.b16 %v1498, %v1497
      %v1504 = vpack.c.b16 %v1500, %v1499
      %v1510 = vsel %vm742, %v1469, 0
      %v1513 = vsel %vm742, %v1470, 0
      %v1516 = vsel %vm742, %v1471, 0
      %v1519 = vsel %vm742, %v1472, 0
      %v1522 = vsel %vm742, %v1473, 0
      %v1525 = vsel %vm742, %v1474, 0
      %v1528 = vsel %vm742, %v1475, 0
      %v1531 = vsel %vm742, %v1476, 0
      %v1534 = vsel %vm742, %v1477, 0
      %v1537 = vsel %vm742, %v1478, 0
      %v1540 = vsel %vm742, %v1479, 0
      %v1543 = vsel %vm742, %v1480, 0
      %v1546 = vsel %vm742, %v1481, 0
      %v1549 = vsel %vm742, %v1482, 0
      %v1552 = vsel %vm742, %v1483, 0
      %v1555 = vsel %vm742, %v1484, 0
      %1557 = vmatprep.subr.bf16.mxu0 0
      %1558 = vmatpush1.bf16.msra.mxu0 %v1501
      %1559 = vmatprep.subr.bf16.mxu0 0
      %1560 = vmatpush1.bf16.msra.mxu0 %v1502
      %1561 = vmatprep.subr.bf16.mxu0 0
      %1562 = vmatpush1.bf16.msra.mxu0 %v1503
      %1563 = vmatprep.subr.bf16.mxu0 0
      %1564 = vmatpush1.bf16.msra.mxu0 %v1504
      %1565 = vmatprep.subr.bf16.mxu0 0
      %1566 = vmatpush1.bf16.msra.mxu0 0
      %1567 = vmatprep.subr.bf16.mxu0 0
      %1568 = vmatpush1.bf16.msra.mxu0 0
      %1569 = vmatprep.subr.bf16.mxu0 0
      %1570 = vmatpush1.bf16.msra.mxu0 0
      %1571 = vmatprep.subr.bf16.mxu0 0
      %1572 = vmatpush1.bf16.msra.mxu0 0
      %1573 = vmatprep.subr.bf16.mxu0 0
      %1574 = vmatpush1.bf16.msra.mxu0 0
      %1575 = vmatprep.subr.bf16.mxu0 0
      %1576 = vmatpush1.bf16.msra.mxu0 0
      %1577 = vmatprep.subr.bf16.mxu0 0
      %1578 = vmatpush1.bf16.msra.mxu0 0
      %1579 = vmatprep.subr.bf16.mxu0 0
      %1580 = vmatpush1.bf16.msra.mxu0 0
      %1581 = vmatprep.subr.bf16.mxu0 0
      %1582 = vmatpush1.bf16.msra.mxu0 0
      %1583 = vmatprep.subr.bf16.mxu0 0
      %1584 = vmatpush1.bf16.msra.mxu0 0
      %1585 = vmatprep.subr.bf16.mxu0 0
      %1586 = vmatpush1.bf16.msra.mxu0 0
      %1587 = vmatprep.subr.bf16.mxu0 0
      %1588 = vmatpush1.bf16.msra.mxu0 0
      %1589 = vmatprep.mubr.bf16.mxu0 0
      %1590 = vmatmul.mubr.bf16.gmra.mrb[0].mxu0 %v1510
      %v1591 = vpop.f32.mrb[0].mxu0
      %v1592 = vadd.f32 0.0, %v1591
      %v1593 = vpop.f32.mrb[0].mxu0
      %v1594 = vpop.f32.mrb[0].mxu0
      %v1595 = vadd.f32 0.0, %v1594
      %v1596 = vpop.f32.mrb[0].mxu0
      %1597 = vmatprep.mubr.bf16.mxu0 0
      %1598 = vmatmul.mubr.bf16.gmra.mrb[0].mxu0 %v1513
      %v1599 = vpop.f32.mrb[0].mxu0
      %v1600 = vadd.f32 0.0, %v1599
      %v1601 = vpop.f32.mrb[0].mxu0
      %v1602 = vpop.f32.mrb[0].mxu0
      %v1603 = vadd.f32 0.0, %v1602
      %v1604 = vpop.f32.mrb[0].mxu0
      %1605 = vmatprep.mubr.bf16.mxu0 0
      %1606 = vmatmul.mubr.bf16.gmra.mrb[0].mxu0 %v1516
      %v1607 = vpop.f32.mrb[0].mxu0
      %v1608 = vadd.f32 0.0, %v1607
      %v1609 = vpop.f32.mrb[0].mxu0
      %v1610 = vpop.f32.mrb[0].mxu0
      %v1611 = vadd.f32 0.0, %v1610
      %v1612 = vpop.f32.mrb[0].mxu0
      %1613 = vmatprep.mubr.bf16.mxu0 0
      %1614 = vmatmul.mubr.bf16.gmra.mrb[0].mxu0 %v1519
      %v1615 = vpop.f32.mrb[0].mxu0
      %v1616 = vadd.f32 0.0, %v1615
      %v1617 = vpop.f32.mrb[0].mxu0
      %v1618 = vpop.f32.mrb[0].mxu0
      %v1619 = vadd.f32 0.0, %v1618
      %v1620 = vpop.f32.mrb[0].mxu0
      %1621 = vmatprep.mubr.bf16.mxu0 0
      %1622 = vmatmul.mubr.bf16.gmra.mrb[0].mxu0 %v1522
      %v1623 = vpop.f32.mrb[0].mxu0
      %v1624 = vadd.f32 0.0, %v1623
      %v1625 = vpop.f32.mrb[0].mxu0
      %v1626 = vpop.f32.mrb[0].mxu0
      %v1627 = vadd.f32 0.0, %v1626
      %v1628 = vpop.f32.mrb[0].mxu0
      %1629 = vmatprep.mubr.bf16.mxu0 0
      %1630 = vmatmul.mubr.bf16.gmra.mrb[0].mxu0 %v1525
      %v1631 = vpop.f32.mrb[0].mxu0
      %v1632 = vadd.f32 0.0, %v1631
      %v1633 = vpop.f32.mrb[0].mxu0
      %v1634 = vpop.f32.mrb[0].mxu0
      %v1635 = vadd.f32 0.0, %v1634
      %v1636 = vpop.f32.mrb[0].mxu0
      %1637 = vmatprep.mubr.bf16.mxu0 0
      %1638 = vmatmul.mubr.bf16.gmra.mrb[0].mxu0 %v1528
      %v1639 = vpop.f32.mrb[0].mxu0
      %v1640 = vadd.f32 0.0, %v1639
      %v1641 = vpop.f32.mrb[0].mxu0
      %v1642 = vpop.f32.mrb[0].mxu0
      %v1643 = vadd.f32 0.0, %v1642
      %v1644 = vpop.f32.mrb[0].mxu0
      %1645 = vmatprep.mubr.bf16.mxu0 0
      %1646 = vmatmul.mubr.bf16.gmra.mrb[0].mxu0 %v1531
      %v1647 = vpop.f32.mrb[0].mxu0
      %v1648 = vadd.f32 0.0, %v1647
      %v1649 = vpop.f32.mrb[0].mxu0
      %v1650 = vpop.f32.mrb[0].mxu0
      %v1651 = vadd.f32 0.0, %v1650
      %v1652 = vpop.f32.mrb[0].mxu0
      %1653 = vmatprep.mubr.bf16.mxu0 0
      %1654 = vmatmul.mubr.bf16.gmra.mrb[0].mxu0 %v1534
      %v1655 = vpop.f32.mrb[0].mxu0
      %v1656 = vadd.f32 0.0, %v1655
      %v1657 = vpop.f32.mrb[0].mxu0
      %v1658 = vpop.f32.mrb[0].mxu0
      %v1659 = vadd.f32 0.0, %v1658
      %v1660 = vpop.f32.mrb[0].mxu0
      %1661 = vmatprep.mubr.bf16.mxu0 0
      %1662 = vmatmul.mubr.bf16.gmra.mrb[0].mxu0 %v1537
      %v1663 = vpop.f32.mrb[0].mxu0
      %v1664 = vadd.f32 0.0, %v1663
      %v1665 = vpop.f32.mrb[0].mxu0
      %v1666 = vpop.f32.mrb[0].mxu0
      %v1667 = vadd.f32 0.0, %v1666
      %v1668 = vpop.f32.mrb[0].mxu0
      %1669 = vmatprep.mubr.bf16.mxu0 0
      %1670 = vmatmul.mubr.bf16.gmra.mrb[0].mxu0 %v1540
      %v1671 = vpop.f32.mrb[0].mxu0
      %v1672 = vadd.f32 0.0, %v1671
      %v1673 = vpop.f32.mrb[0].mxu0
      %v1674 = vpop.f32.mrb[0].mxu0
      %v1675 = vadd.f32 0.0, %v1674
      %v1676 = vpop.f32.mrb[0].mxu0
      %1677 = vmatprep.mubr.bf16.mxu0 0
      %1678 = vmatmul.mubr.bf16.gmra.mrb[0].mxu0 %v1543
      %v1679 = vpop.f32.mrb[0].mxu0
      %v1680 = vadd.f32 0.0, %v1679
      %v1681 = vpop.f32.mrb[0].mxu0
      %v1682 = vpop.f32.mrb[0].mxu0
      %v1683 = vadd.f32 0.0, %v1682
      %v1684 = vpop.f32.mrb[0].mxu0
      %1685 = vmatprep.mubr.bf16.mxu0 0
      %1686 = vmatmul.mubr.bf16.gmra.mrb[0].mxu0 %v1546
      %v1687 = vpop.f32.mrb[0].mxu0
      %v1688 = vadd.f32 0.0, %v1687
      %v1689 = vpop.f32.mrb[0].mxu0
      %v1690 = vpop.f32.mrb[0].mxu0
      %v1691 = vadd.f32 0.0, %v1690
      %v1692 = vpop.f32.mrb[0].mxu0
      %1693 = vmatprep.mubr.bf16.mxu0 0
      %1694 = vmatmul.mubr.bf16.gmra.mrb[0].mxu0 %v1549
      %v1695 = vpop.f32.mrb[0].mxu0
      %v1696 = vadd.f32 0.0, %v1695
      %v1697 = vpop.f32.mrb[0].mxu0
      %v1698 = vpop.f32.mrb[0].mxu0
      %v1699 = vadd.f32 0.0, %v1698
      %v1700 = vpop.f32.mrb[0].mxu0
      %1701 = vmatprep.mubr.bf16.mxu0 0
      %1702 = vmatmul.mubr.bf16.gmra.mrb[0].mxu0 %v1552
      %v1703 = vpop.f32.mrb[0].mxu0
      %v1704 = vadd.f32 0.0, %v1703
      %v1705 = vpop.f32.mrb[0].mxu0
      %v1706 = vpop.f32.mrb[0].mxu0
      %v1707 = vadd.f32 0.0, %v1706
      %v1708 = vpop.f32.mrb[0].mxu0
      %1709 = vmatprep.mubr.bf16.mxu0 0
      %1710 = vmatmul.mubr.bf16.gmra.mrb[0].mxu0 %v1555
      %v1711 = vpop.f32.mrb[0].mxu0
      %v1712 = vadd.f32 0.0, %v1711
      %v1713 = vpop.f32.mrb[0].mxu0
      %v1714 = vpop.f32.mrb[0].mxu0
      %v1715 = vadd.f32 0.0, %v1714
      %v1716 = vpop.f32.mrb[0].mxu0
      %1717 = vdwg.mxu0
      %v1718 = vadd.f32 %v1139, %v1592
      %v1719 = vadd.f32 %v1142, %v1595
      %v1720 = vadd.f32 %v1147, %v1600
      %v1721 = vadd.f32 %v1150, %v1603
      %v1722 = vadd.f32 %v1155, %v1608
      %v1723 = vadd.f32 %v1158, %v1611
      %v1724 = vadd.f32 %v1163, %v1616
      %v1725 = vadd.f32 %v1166, %v1619
      %v1726 = vadd.f32 %v1171, %v1624
      %v1727 = vadd.f32 %v1174, %v1627
      %v1728 = vadd.f32 %v1179, %v1632
      %v1729 = vadd.f32 %v1182, %v1635
      %v1730 = vadd.f32 %v1187, %v1640
      %v1731 = vadd.f32 %v1190, %v1643
      %v1732 = vadd.f32 %v1195, %v1648
      %v1733 = vadd.f32 %v1198, %v1651
      %v1734 = vadd.f32 %v1203, %v1656
      %v1735 = vadd.f32 %v1206, %v1659
      %v1736 = vadd.f32 %v1211, %v1664
      %v1737 = vadd.f32 %v1214, %v1667
      %v1738 = vadd.f32 %v1219, %v1672
      %v1739 = vadd.f32 %v1222, %v1675
      %v1740 = vadd.f32 %v1227, %v1680
      %v1741 = vadd.f32 %v1230, %v1683
      %v1742 = vadd.f32 %v1235, %v1688
      %v1743 = vadd.f32 %v1238, %v1691
      %v1744 = vadd.f32 %v1243, %v1696
      %v1745 = vadd.f32 %v1246, %v1699
      %v1746 = vadd.f32 %v1251, %v1704
      %v1747 = vadd.f32 %v1254, %v1707
      %v1748 = vadd.f32 %v1259, %v1712
      %v1749 = vadd.f32 %v1262, %v1715
      %s1750 = sadd.s32 %s214, 1
      %s1751 = smul.u32 %s1750, 3
      %s1752 = smul.addr %s1751, 4
      %s1753 = scalar_lea.vmem %s195, %s1752
      %v1754 = vld [vmem:[%s1753] sm:$0xf]
      %v1755 = vld [vmem:[%s1753 + $0x4] sm:$0xf]
      %v1756 = vld [vmem:[%s1753 + $0xc] sm:$0xf]
      %v1757 = vld [vmem:[%s1753 + $0x10] sm:$0xf]
      %v1758 = vld [vmem:[%s1753 + $0x18] sm:$0xf]
      %v1759 = vld [vmem:[%s1753 + $0x1c] sm:$0xf]
      %v1760 = vld [vmem:[%s1753 + $0x24] sm:$0xf]
      %v1761 = vld [vmem:[%s1753 + $0x28] sm:$0xf]
      %v1762 = vld [vmem:[%s1753 + $0x30] sm:$0xf]
      %v1763 = vld [vmem:[%s1753 + $0x34] sm:$0xf]
      %v1764 = vld [vmem:[%s1753 + $0x3c] sm:$0xf]
      %v1765 = vld [vmem:[%s1753 + $0x40] sm:$0xf]
      %v1766 = vld [vmem:[%s1753 + $0x48] sm:$0xf]
      %v1767 = vld [vmem:[%s1753 + $0x4c] sm:$0xf]
      %v1768 = vld [vmem:[%s1753 + $0x54] sm:$0xf]
      %v1769 = vld [vmem:[%s1753 + $0x58] sm:$0xf]
      %v1770 = vld [vmem:[%s1753 + $0x60] sm:$0xf]
      %v1771 = vld [vmem:[%s1753 + $0x64] sm:$0xf]
      %v1772 = vld [vmem:[%s1753 + $0x6c] sm:$0xf]
      %v1773 = vld [vmem:[%s1753 + $0x70] sm:$0xf]
      %v1774 = vld [vmem:[%s1753 + $0x78] sm:$0xf]
      %v1775 = vld [vmem:[%s1753 + $0x7c] sm:$0xf]
      %v1776 = vld [vmem:[%s1753 + $0x84] sm:$0xf]
      %v1777 = vld [vmem:[%s1753 + $0x88] sm:$0xf]
      %v1778 = vld [vmem:[%s1753 + $0x90] sm:$0xf]
      %v1779 = vld [vmem:[%s1753 + $0x94] sm:$0xf]
      %v1780 = vld [vmem:[%s1753 + $0x9c] sm:$0xf]
      %v1781 = vld [vmem:[%s1753 + $0xa0] sm:$0xf]
      %v1782 = vld [vmem:[%s1753 + $0xa8] sm:$0xf]
      %v1783 = vld [vmem:[%s1753 + $0xac] sm:$0xf]
      %v1784 = vld [vmem:[%s1753 + $0xb4] sm:$0xf]
      %v1785 = vld [vmem:[%s1753 + $0xb8] sm:$0xf]
      %s1786 = scalar_lea.vmem %s1, 96
      %v1787 = vld [vmem:[%s1786] sm:$0xf]
      %v1788 = vld [vmem:[%s1786 + $0x4] sm:$0xf]
      %v1789 = vld [vmem:[%s1786 + $0x8] sm:$0xf]
      %v1790 = vld [vmem:[%s1786 + $0xc] sm:$0xf]
      %v1791 = vld [vmem:[%s1786 + $0x10] sm:$0xf]
      %v1792 = vld [vmem:[%s1786 + $0x14] sm:$0xf]
      %v1793 = vld [vmem:[%s1786 + $0x18] sm:$0xf]
      %v1794 = vld [vmem:[%s1786 + $0x1c] sm:$0xf]
      %v1827 = vunpack.c.l.b16 %v1754
      %v1828 = vunpack.c.l.b16 %v1755
      %v1829 = vunpack.c.l.b16 %v1756
      %v1830 = vunpack.c.l.b16 %v1757
      %v1831 = vunpack.c.l.b16 %v1758
      %v1832 = vunpack.c.l.b16 %v1759
      %v1833 = vunpack.c.l.b16 %v1760
      %v1834 = vunpack.c.l.b16 %v1761
      %v1835 = vunpack.c.l.b16 %v1762
      %v1836 = vunpack.c.l.b16 %v1763
      %v1837 = vunpack.c.l.b16 %v1764
      %v1838 = vunpack.c.l.b16 %v1765
      %v1839 = vunpack.c.l.b16 %v1766
      %v1840 = vunpack.c.l.b16 %v1767
      %v1841 = vunpack.c.l.b16 %v1768
      %v1842 = vunpack.c.l.b16 %v1769
      %v1843 = vunpack.c.l.b16 %v1770
      %v1844 = vunpack.c.l.b16 %v1771
      %v1845 = vunpack.c.l.b16 %v1772
      %v1846 = vunpack.c.l.b16 %v1773
      %v1847 = vunpack.c.l.b16 %v1774
      %v1848 = vunpack.c.l.b16 %v1775
      %v1849 = vunpack.c.l.b16 %v1776
      %v1850 = vunpack.c.l.b16 %v1777
      %v1851 = vunpack.c.l.b16 %v1778
      %v1852 = vunpack.c.l.b16 %v1779
      %v1853 = vunpack.c.l.b16 %v1780
      %v1854 = vunpack.c.l.b16 %v1781
      %v1855 = vunpack.c.l.b16 %v1782
      %v1856 = vunpack.c.l.b16 %v1783
      %v1857 = vunpack.c.l.b16 %v1784
      %v1858 = vunpack.c.l.b16 %v1785
      %v1859 = vpack.c.b16 %v1828, %v1827
      %v1860 = vpack.c.b16 %v1830, %v1829
      %v1861 = vpack.c.b16 %v1832, %v1831
      %v1862 = vpack.c.b16 %v1834, %v1833
      %v1863 = vpack.c.b16 %v1836, %v1835
      %v1864 = vpack.c.b16 %v1838, %v1837
      %v1865 = vpack.c.b16 %v1840, %v1839
      %v1866 = vpack.c.b16 %v1842, %v1841
      %v1867 = vpack.c.b16 %v1844, %v1843
      %v1868 = vpack.c.b16 %v1846, %v1845
      %v1869 = vpack.c.b16 %v1848, %v1847
      %v1870 = vpack.c.b16 %v1850, %v1849
      %v1871 = vpack.c.b16 %v1852, %v1851
      %v1872 = vpack.c.b16 %v1854, %v1853
      %v1873 = vpack.c.b16 %v1856, %v1855
      %v1874 = vpack.c.b16 %v1858, %v1857
      %v1883 = vunpack.c.l.b16 %v1787
      %v1884 = vunpack.c.l.b16 %v1788
      %v1885 = vunpack.c.l.b16 %v1789
      %v1886 = vunpack.c.l.b16 %v1790
      %v1887 = vunpack.c.l.b16 %v1791
      %v1888 = vunpack.c.l.b16 %v1792
      %v1889 = vunpack.c.l.b16 %v1793
      %v1890 = vunpack.c.l.b16 %v1794
      %v1891 = vpack.c.b16 %v1884, %v1883
      %v1892 = vpack.c.b16 %v1886, %v1885
      %v1893 = vpack.c.b16 %v1888, %v1887
      %v1894 = vpack.c.b16 %v1890, %v1889
      %v1900 = vsel %vm742, %v1859, 0
      %v1903 = vsel %vm742, %v1860, 0
      %v1906 = vsel %vm742, %v1861, 0
      %v1909 = vsel %vm742, %v1862, 0
      %v1912 = vsel %vm742, %v1863, 0
      %v1915 = vsel %vm742, %v1864, 0
      %v1918 = vsel %vm742, %v1865, 0
      %v1921 = vsel %vm742, %v1866, 0
      %v1924 = vsel %vm742, %v1867, 0
      %v1927 = vsel %vm742, %v1868, 0
      %v1930 = vsel %vm742, %v1869, 0
      %v1933 = vsel %vm742, %v1870, 0
      %v1936 = vsel %vm742, %v1871, 0
      %v1939 = vsel %vm742, %v1872, 0
      %v1942 = vsel %vm742, %v1873, 0
      %v1945 = vsel %vm742, %v1874, 0
      %1947 = vmatprep.subr.bf16.mxu0 0
      %1948 = vmatpush1.bf16.msra.mxu0 %v1891
      %1949 = vmatprep.subr.bf16.mxu0 0
      %1950 = vmatpush1.bf16.msra.mxu0 %v1892
      %1951 = vmatprep.subr.bf16.mxu0 0
      %1952 = vmatpush1.bf16.msra.mxu0 %v1893
      %1953 = vmatprep.subr.bf16.mxu0 0
      %1954 = vmatpush1.bf16.msra.mxu0 %v1894
      %1955 = vmatprep.subr.bf16.mxu0 0
      %1956 = vmatpush1.bf16.msra.mxu0 0
      %1957 = vmatprep.subr.bf16.mxu0 0
      %1958 = vmatpush1.bf16.msra.mxu0 0
      %1959 = vmatprep.subr.bf16.mxu0 0
      %1960 = vmatpush1.bf16.msra.mxu0 0
      %1961 = vmatprep.subr.bf16.mxu0 0
      %1962 = vmatpush1.bf16.msra.mxu0 0
      %1963 = vmatprep.subr.bf16.mxu0 0
      %1964 = vmatpush1.bf16.msra.mxu0 0
      %1965 = vmatprep.subr.bf16.mxu0 0
      %1966 = vmatpush1.bf16.msra.mxu0 0
      %1967 = vmatprep.subr.bf16.mxu0 0
      %1968 = vmatpush1.bf16.msra.mxu0 0
      %1969 = vmatprep.subr.bf16.mxu0 0
      %1970 = vmatpush1.bf16.msra.mxu0 0
      %1971 = vmatprep.subr.bf16.mxu0 0
      %1972 = vmatpush1.bf16.msra.mxu0 0
      %1973 = vmatprep.subr.bf16.mxu0 0
      %1974 = vmatpush1.bf16.msra.mxu0 0
      %1975 = vmatprep.subr.bf16.mxu0 0
      %1976 = vmatpush1.bf16.msra.mxu0 0
      %1977 = vmatprep.subr.bf16.mxu0 0
      %1978 = vmatpush1.bf16.msra.mxu0 0
      %1979 = vmatprep.mubr.bf16.mxu0 0
      %1980 = vmatmul.mubr.bf16.gmra.mrb[0].mxu0 %v1900
      %v1981 = vpop.f32.mrb[0].mxu0
      %v1982 = vadd.f32 0.0, %v1981
      %v1983 = vpop.f32.mrb[0].mxu0
      %v1984 = vpop.f32.mrb[0].mxu0
      %v1985 = vadd.f32 0.0, %v1984
      %v1986 = vpop.f32.mrb[0].mxu0
      %1987 = vmatprep.mubr.bf16.mxu0 0
      %1988 = vmatmul.mubr.bf16.gmra.mrb[0].mxu0 %v1903
      %v1989 = vpop.f32.mrb[0].mxu0
      %v1990 = vadd.f32 0.0, %v1989
      %v1991 = vpop.f32.mrb[0].mxu0
      %v1992 = vpop.f32.mrb[0].mxu0
      %v1993 = vadd.f32 0.0, %v1992
      %v1994 = vpop.f32.mrb[0].mxu0
      %1995 = vmatprep.mubr.bf16.mxu0 0
      %1996 = vmatmul.mubr.bf16.gmra.mrb[0].mxu0 %v1906
      %v1997 = vpop.f32.mrb[0].mxu0
      %v1998 = vadd.f32 0.0, %v1997
      %v1999 = vpop.f32.mrb[0].mxu0
      %v2000 = vpop.f32.mrb[0].mxu0
      %v2001 = vadd.f32 0.0, %v2000
      %v2002 = vpop.f32.mrb[0].mxu0
      %2003 = vmatprep.mubr.bf16.mxu0 0
      %2004 = vmatmul.mubr.bf16.gmra.mrb[0].mxu0 %v1909
      %v2005 = vpop.f32.mrb[0].mxu0
      %v2006 = vadd.f32 0.0, %v2005
      %v2007 = vpop.f32.mrb[0].mxu0
      %v2008 = vpop.f32.mrb[0].mxu0
      %v2009 = vadd.f32 0.0, %v2008
      %v2010 = vpop.f32.mrb[0].mxu0
      %2011 = vmatprep.mubr.bf16.mxu0 0
      %2012 = vmatmul.mubr.bf16.gmra.mrb[0].mxu0 %v1912
      %v2013 = vpop.f32.mrb[0].mxu0
      %v2014 = vadd.f32 0.0, %v2013
      %v2015 = vpop.f32.mrb[0].mxu0
      %v2016 = vpop.f32.mrb[0].mxu0
      %v2017 = vadd.f32 0.0, %v2016
      %v2018 = vpop.f32.mrb[0].mxu0
      %2019 = vmatprep.mubr.bf16.mxu0 0
      %2020 = vmatmul.mubr.bf16.gmra.mrb[0].mxu0 %v1915
      %v2021 = vpop.f32.mrb[0].mxu0
      %v2022 = vadd.f32 0.0, %v2021
      %v2023 = vpop.f32.mrb[0].mxu0
      %v2024 = vpop.f32.mrb[0].mxu0
      %v2025 = vadd.f32 0.0, %v2024
      %v2026 = vpop.f32.mrb[0].mxu0
      %2027 = vmatprep.mubr.bf16.mxu0 0
      %2028 = vmatmul.mubr.bf16.gmra.mrb[0].mxu0 %v1918
      %v2029 = vpop.f32.mrb[0].mxu0
      %v2030 = vadd.f32 0.0, %v2029
      %v2031 = vpop.f32.mrb[0].mxu0
      %v2032 = vpop.f32.mrb[0].mxu0
      %v2033 = vadd.f32 0.0, %v2032
      %v2034 = vpop.f32.mrb[0].mxu0
      %2035 = vmatprep.mubr.bf16.mxu0 0
      %2036 = vmatmul.mubr.bf16.gmra.mrb[0].mxu0 %v1921
      %v2037 = vpop.f32.mrb[0].mxu0
      %v2038 = vadd.f32 0.0, %v2037
      %v2039 = vpop.f32.mrb[0].mxu0
      %v2040 = vpop.f32.mrb[0].mxu0
      %v2041 = vadd.f32 0.0, %v2040
      %v2042 = vpop.f32.mrb[0].mxu0
      %2043 = vmatprep.mubr.bf16.mxu0 0
      %2044 = vmatmul.mubr.bf16.gmra.mrb[0].mxu0 %v1924
      %v2045 = vpop.f32.mrb[0].mxu0
      %v2046 = vadd.f32 0.0, %v2045
      %v2047 = vpop.f32.mrb[0].mxu0
      %v2048 = vpop.f32.mrb[0].mxu0
      %v2049 = vadd.f32 0.0, %v2048
      %v2050 = vpop.f32.mrb[0].mxu0
      %2051 = vmatprep.mubr.bf16.mxu0 0
      %2052 = vmatmul.mubr.bf16.gmra.mrb[0].mxu0 %v1927
      %v2053 = vpop.f32.mrb[0].mxu0
      %v2054 = vadd.f32 0.0, %v2053
      %v2055 = vpop.f32.mrb[0].mxu0
      %v2056 = vpop.f32.mrb[0].mxu0
      %v2057 = vadd.f32 0.0, %v2056
      %v2058 = vpop.f32.mrb[0].mxu0
      %2059 = vmatprep.mubr.bf16.mxu0 0
      %2060 = vmatmul.mubr.bf16.gmra.mrb[0].mxu0 %v1930
      %v2061 = vpop.f32.mrb[0].mxu0
      %v2062 = vadd.f32 0.0, %v2061
      %v2063 = vpop.f32.mrb[0].mxu0
      %v2064 = vpop.f32.mrb[0].mxu0
      %v2065 = vadd.f32 0.0, %v2064
      %v2066 = vpop.f32.mrb[0].mxu0
      %2067 = vmatprep.mubr.bf16.mxu0 0
      %2068 = vmatmul.mubr.bf16.gmra.mrb[0].mxu0 %v1933
      %v2069 = vpop.f32.mrb[0].mxu0
      %v2070 = vadd.f32 0.0, %v2069
      %v2071 = vpop.f32.mrb[0].mxu0
      %v2072 = vpop.f32.mrb[0].mxu0
      %v2073 = vadd.f32 0.0, %v2072
      %v2074 = vpop.f32.mrb[0].mxu0
      %2075 = vmatprep.mubr.bf16.mxu0 0
      %2076 = vmatmul.mubr.bf16.gmra.mrb[0].mxu0 %v1936
      %v2077 = vpop.f32.mrb[0].mxu0
      %v2078 = vadd.f32 0.0, %v2077
      %v2079 = vpop.f32.mrb[0].mxu0
      %v2080 = vpop.f32.mrb[0].mxu0
      %v2081 = vadd.f32 0.0, %v2080
      %v2082 = vpop.f32.mrb[0].mxu0
      %2083 = vmatprep.mubr.bf16.mxu0 0
      %2084 = vmatmul.mubr.bf16.gmra.mrb[0].mxu0 %v1939
      %v2085 = vpop.f32.mrb[0].mxu0
      %v2086 = vadd.f32 0.0, %v2085
      %v2087 = vpop.f32.mrb[0].mxu0
      %v2088 = vpop.f32.mrb[0].mxu0
      %v2089 = vadd.f32 0.0, %v2088
      %v2090 = vpop.f32.mrb[0].mxu0
      %2091 = vmatprep.mubr.bf16.mxu0 0
      %2092 = vmatmul.mubr.bf16.gmra.mrb[0].mxu0 %v1942
      %v2093 = vpop.f32.mrb[0].mxu0
      %v2094 = vadd.f32 0.0, %v2093
      %v2095 = vpop.f32.mrb[0].mxu0
      %v2096 = vpop.f32.mrb[0].mxu0
      %v2097 = vadd.f32 0.0, %v2096
      %v2098 = vpop.f32.mrb[0].mxu0
      %2099 = vmatprep.mubr.bf16.mxu0 0
      %2100 = vmatmul.mubr.bf16.gmra.mrb[0].mxu0 %v1945
      %v2101 = vpop.f32.mrb[0].mxu0
      %v2102 = vadd.f32 0.0, %v2101
      %v2103 = vpop.f32.mrb[0].mxu0
      %v2104 = vpop.f32.mrb[0].mxu0
      %v2105 = vadd.f32 0.0, %v2104
      %v2106 = vpop.f32.mrb[0].mxu0
      %2107 = vdwg.mxu0
      %v2108 = vadd.f32 %v1718, %v1982
      %v2109 = vadd.f32 %v1719, %v1985
      %v2110 = vadd.f32 %v1720, %v1990
      %v2111 = vadd.f32 %v1721, %v1993
      %v2112 = vadd.f32 %v1722, %v1998
      %v2113 = vadd.f32 %v1723, %v2001
      %v2114 = vadd.f32 %v1724, %v2006
      %v2115 = vadd.f32 %v1725, %v2009
      %v2116 = vadd.f32 %v1726, %v2014
      %v2117 = vadd.f32 %v1727, %v2017
      %v2118 = vadd.f32 %v1728, %v2022
      %v2119 = vadd.f32 %v1729, %v2025
      %v2120 = vadd.f32 %v1730, %v2030
      %v2121 = vadd.f32 %v1731, %v2033
      %v2122 = vadd.f32 %v1732, %v2038
      %v2123 = vadd.f32 %v1733, %v2041
      %v2124 = vadd.f32 %v1734, %v2046
      %v2125 = vadd.f32 %v1735, %v2049
      %v2126 = vadd.f32 %v1736, %v2054
      %v2127 = vadd.f32 %v1737, %v2057
      %v2128 = vadd.f32 %v1738, %v2062
      %v2129 = vadd.f32 %v1739, %v2065
      %v2130 = vadd.f32 %v1740, %v2070
      %v2131 = vadd.f32 %v1741, %v2073
      %v2132 = vadd.f32 %v1742, %v2078
      %v2133 = vadd.f32 %v1743, %v2081
      %v2134 = vadd.f32 %v1744, %v2086
      %v2135 = vadd.f32 %v1745, %v2089
      %v2136 = vadd.f32 %v1746, %v2094
      %v2137 = vadd.f32 %v1747, %v2097
      %v2138 = vadd.f32 %v1748, %v2102
      %v2139 = vadd.f32 %v1749, %v2105
      %v2140 = vld [vmem:[%s1753] sm:$0xf]
      %v2141 = vld [vmem:[%s1753 + $0x4] sm:$0xf]
      %v2142 = vld [vmem:[%s1753 + $0x8] sm:$0x1]
      %v2143 = vld [vmem:[%s1753 + $0xc] sm:$0xf]
      %v2144 = vld [vmem:[%s1753 + $0x10] sm:$0xf]
      %v2145 = vld [vmem:[%s1753 + $0x14] sm:$0x1]
      %v2146 = vld [vmem:[%s1753 + $0x18] sm:$0xf]
      %v2147 = vld [vmem:[%s1753 + $0x1c] sm:$0xf]
      %v2148 = vld [vmem:[%s1753 + $0x20] sm:$0x1]
      %v2149 = vld [vmem:[%s1753 + $0x24] sm:$0xf]
      %v2150 = vld [vmem:[%s1753 + $0x28] sm:$0xf]
      %v2151 = vld [vmem:[%s1753 + $0x2c] sm:$0x1]
      %v2152 = vld [vmem:[%s1753 + $0x30] sm:$0xf]
      %v2153 = vld [vmem:[%s1753 + $0x34] sm:$0xf]
      %v2154 = vld [vmem:[%s1753 + $0x38] sm:$0x1]
      %v2155 = vld [vmem:[%s1753 + $0x3c] sm:$0xf]
      %v2156 = vld [vmem:[%s1753 + $0x40] sm:$0xf]
      %v2157 = vld [vmem:[%s1753 + $0x44] sm:$0x1]
      %v2158 = vld [vmem:[%s1753 + $0x48] sm:$0xf]
      %v2159 = vld [vmem:[%s1753 + $0x4c] sm:$0xf]
      %v2160 = vld [vmem:[%s1753 + $0x50] sm:$0x1]
      %v2161 = vld [vmem:[%s1753 + $0x54] sm:$0xf]
      %v2162 = vld [vmem:[%s1753 + $0x58] sm:$0xf]
      %v2163 = vld [vmem:[%s1753 + $0x5c] sm:$0x1]
      %v2164 = vld [vmem:[%s1753 + $0x60] sm:$0xf]
      %v2165 = vld [vmem:[%s1753 + $0x64] sm:$0xf]
      %v2166 = vld [vmem:[%s1753 + $0x68] sm:$0x1]
      %v2167 = vld [vmem:[%s1753 + $0x6c] sm:$0xf]
      %v2168 = vld [vmem:[%s1753 + $0x70] sm:$0xf]
      %v2169 = vld [vmem:[%s1753 + $0x74] sm:$0x1]
      %v2170 = vld [vmem:[%s1753 + $0x78] sm:$0xf]
      %v2171 = vld [vmem:[%s1753 + $0x7c] sm:$0xf]
      %v2172 = vld [vmem:[%s1753 + $0x80] sm:$0x1]
      %v2173 = vld [vmem:[%s1753 + $0x84] sm:$0xf]
      %v2174 = vld [vmem:[%s1753 + $0x88] sm:$0xf]
      %v2175 = vld [vmem:[%s1753 + $0x8c] sm:$0x1]
      %v2176 = vld [vmem:[%s1753 + $0x90] sm:$0xf]
      %v2177 = vld [vmem:[%s1753 + $0x94] sm:$0xf]
      %v2178 = vld [vmem:[%s1753 + $0x98] sm:$0x1]
      %v2179 = vld [vmem:[%s1753 + $0x9c] sm:$0xf]
      %v2180 = vld [vmem:[%s1753 + $0xa0] sm:$0xf]
      %v2181 = vld [vmem:[%s1753 + $0xa4] sm:$0x1]
      %v2182 = vld [vmem:[%s1753 + $0xa8] sm:$0xf]
      %v2183 = vld [vmem:[%s1753 + $0xac] sm:$0xf]
      %v2184 = vld [vmem:[%s1753 + $0xb0] sm:$0x1]
      %v2185 = vld [vmem:[%s1753 + $0xb4] sm:$0xf]
      %v2186 = vld [vmem:[%s1753 + $0xb8] sm:$0xf]
      %v2187 = vld [vmem:[%s1753 + $0xbc] sm:$0x1]
      %v2189 = vshrl.u32 %v2140, 16
      %v2191 = vrot.slane %v2189, 4
      %v2192 = vshll.u32 %v2140, 16
      %v2194 = vrot.slane %v2192, 5
      %v2195 = vor.u32 %v2191, %v2194
      %v2196 = vrot.slane %v2195, 4
      %v2198 = vshll.u32 %v2141, 16
      %v2200 = vrot.slane %v2198, 5
      %v2201 = vsel %vm276, %v2196, %v2200
      %v2202 = vshrl.u32 %v2141, 16
      %v2204 = vrot.slane %v2202, 4
      %v2205 = vor.u32 %v2204, %v2200
      %v2206 = vrot.slane %v2205, 4
      %v2208 = vshll.u32 %v2142, 16
      %v2210 = vrot.slane %v2208, 5
      %v2211 = vsel %vm276, %v2206, %v2210
      %v2213 = vshrl.u32 %v2143, 16
      %v2215 = vrot.slane %v2213, 4
      %v2216 = vshll.u32 %v2143, 16
      %v2218 = vrot.slane %v2216, 5
      %v2219 = vor.u32 %v2215, %v2218
      %v2220 = vrot.slane %v2219, 4
      %v2222 = vshll.u32 %v2144, 16
      %v2224 = vrot.slane %v2222, 5
      %v2225 = vsel %vm276, %v2220, %v2224
      %v2226 = vshrl.u32 %v2144, 16
      %v2228 = vrot.slane %v2226, 4
      %v2229 = vor.u32 %v2228, %v2224
      %v2230 = vrot.slane %v2229, 4
      %v2232 = vshll.u32 %v2145, 16
      %v2234 = vrot.slane %v2232, 5
      %v2235 = vsel %vm276, %v2230, %v2234
      %v2237 = vshrl.u32 %v2146, 16
      %v2239 = vrot.slane %v2237, 4
      %v2240 = vshll.u32 %v2146, 16
      %v2242 = vrot.slane %v2240, 5
      %v2243 = vor.u32 %v2239, %v2242
      %v2244 = vrot.slane %v2243, 4
      %v2246 = vshll.u32 %v2147, 16
      %v2248 = vrot.slane %v2246, 5
      %v2249 = vsel %vm276, %v2244, %v2248
      %v2250 = vshrl.u32 %v2147, 16
      %v2252 = vrot.slane %v2250, 4
      %v2253 = vor.u32 %v2252, %v2248
      %v2254 = vrot.slane %v2253, 4
      %v2256 = vshll.u32 %v2148, 16
      %v2258 = vrot.slane %v2256, 5
      %v2259 = vsel %vm276, %v2254, %v2258
      %v2261 = vshrl.u32 %v2149, 16
      %v2263 = vrot.slane %v2261, 4
      %v2264 = vshll.u32 %v2149, 16
      %v2266 = vrot.slane %v2264, 5
      %v2267 = vor.u32 %v2263, %v2266
      %v2268 = vrot.slane %v2267, 4
      %v2270 = vshll.u32 %v2150, 16
      %v2272 = vrot.slane %v2270, 5
      %v2273 = vsel %vm276, %v2268, %v2272
      %v2274 = vshrl.u32 %v2150, 16
      %v2276 = vrot.slane %v2274, 4
      %v2277 = vor.u32 %v2276, %v2272
      %v2278 = vrot.slane %v2277, 4
      %v2280 = vshll.u32 %v2151, 16
      %v2282 = vrot.slane %v2280, 5
      %v2283 = vsel %vm276, %v2278, %v2282
      %v2285 = vshrl.u32 %v2152, 16
      %v2287 = vrot.slane %v2285, 4
      %v2288 = vshll.u32 %v2152, 16
      %v2290 = vrot.slane %v2288, 5
      %v2291 = vor.u32 %v2287, %v2290
      %v2292 = vrot.slane %v2291, 4
      %v2294 = vshll.u32 %v2153, 16
      %v2296 = vrot.slane %v2294, 5
      %v2297 = vsel %vm276, %v2292, %v2296
      %v2298 = vshrl.u32 %v2153, 16
      %v2300 = vrot.slane %v2298, 4
      %v2301 = vor.u32 %v2300, %v2296
      %v2302 = vrot.slane %v2301, 4
      %v2304 = vshll.u32 %v2154, 16
      %v2306 = vrot.slane %v2304, 5
      %v2307 = vsel %vm276, %v2302, %v2306
      %v2309 = vshrl.u32 %v2155, 16
      %v2311 = vrot.slane %v2309, 4
      %v2312 = vshll.u32 %v2155, 16
      %v2314 = vrot.slane %v2312, 5
      %v2315 = vor.u32 %v2311, %v2314
      %v2316 = vrot.slane %v2315, 4
      %v2318 = vshll.u32 %v2156, 16
      %v2320 = vrot.slane %v2318, 5
      %v2321 = vsel %vm276, %v2316, %v2320
      %v2322 = vshrl.u32 %v2156, 16
      %v2324 = vrot.slane %v2322, 4
      %v2325 = vor.u32 %v2324, %v2320
      %v2326 = vrot.slane %v2325, 4
      %v2328 = vshll.u32 %v2157, 16
      %v2330 = vrot.slane %v2328, 5
      %v2331 = vsel %vm276, %v2326, %v2330
      %v2333 = vshrl.u32 %v2158, 16
      %v2335 = vrot.slane %v2333, 4
      %v2336 = vshll.u32 %v2158, 16
      %v2338 = vrot.slane %v2336, 5
      %v2339 = vor.u32 %v2335, %v2338
      %v2340 = vrot.slane %v2339, 4
      %v2342 = vshll.u32 %v2159, 16
      %v2344 = vrot.slane %v2342, 5
      %v2345 = vsel %vm276, %v2340, %v2344
      %v2346 = vshrl.u32 %v2159, 16
      %v2348 = vrot.slane %v2346, 4
      %v2349 = vor.u32 %v2348, %v2344
      %v2350 = vrot.slane %v2349, 4
      %v2352 = vshll.u32 %v2160, 16
      %v2354 = vrot.slane %v2352, 5
      %v2355 = vsel %vm276, %v2350, %v2354
      %v2357 = vshrl.u32 %v2161, 16
      %v2359 = vrot.slane %v2357, 4
      %v2360 = vshll.u32 %v2161, 16
      %v2362 = vrot.slane %v2360, 5
      %v2363 = vor.u32 %v2359, %v2362
      %v2364 = vrot.slane %v2363, 4
      %v2366 = vshll.u32 %v2162, 16
      %v2368 = vrot.slane %v2366, 5
      %v2369 = vsel %vm276, %v2364, %v2368
      %v2370 = vshrl.u32 %v2162, 16
      %v2372 = vrot.slane %v2370, 4
      %v2373 = vor.u32 %v2372, %v2368
      %v2374 = vrot.slane %v2373, 4
      %v2376 = vshll.u32 %v2163, 16
      %v2378 = vrot.slane %v2376, 5
      %v2379 = vsel %vm276, %v2374, %v2378
      %v2381 = vshrl.u32 %v2164, 16
      %v2383 = vrot.slane %v2381, 4
      %v2384 = vshll.u32 %v2164, 16
      %v2386 = vrot.slane %v2384, 5
      %v2387 = vor.u32 %v2383, %v2386
      %v2388 = vrot.slane %v2387, 4
      %v2390 = vshll.u32 %v2165, 16
      %v2392 = vrot.slane %v2390, 5
      %v2393 = vsel %vm276, %v2388, %v2392
      %v2394 = vshrl.u32 %v2165, 16
      %v2396 = vrot.slane %v2394, 4
      %v2397 = vor.u32 %v2396, %v2392
      %v2398 = vrot.slane %v2397, 4
      %v2400 = vshll.u32 %v2166, 16
      %v2402 = vrot.slane %v2400, 5
      %v2403 = vsel %vm276, %v2398, %v2402
      %v2405 = vshrl.u32 %v2167, 16
      %v2407 = vrot.slane %v2405, 4
      %v2408 = vshll.u32 %v2167, 16
      %v2410 = vrot.slane %v2408, 5
      %v2411 = vor.u32 %v2407, %v2410
      %v2412 = vrot.slane %v2411, 4
      %v2414 = vshll.u32 %v2168, 16
      %v2416 = vrot.slane %v2414, 5
      %v2417 = vsel %vm276, %v2412, %v2416
      %v2418 = vshrl.u32 %v2168, 16
      %v2420 = vrot.slane %v2418, 4
      %v2421 = vor.u32 %v2420, %v2416
      %v2422 = vrot.slane %v2421, 4
      %v2424 = vshll.u32 %v2169, 16
      %v2426 = vrot.slane %v2424, 5
      %v2427 = vsel %vm276, %v2422, %v2426
      %v2429 = vshrl.u32 %v2170, 16
      %v2431 = vrot.slane %v2429, 4
      %v2432 = vshll.u32 %v2170, 16
      %v2434 = vrot.slane %v2432, 5
      %v2435 = vor.u32 %v2431, %v2434
      %v2436 = vrot.slane %v2435, 4
      %v2438 = vshll.u32 %v2171, 16
      %v2440 = vrot.slane %v2438, 5
      %v2441 = vsel %vm276, %v2436, %v2440
      %v2442 = vshrl.u32 %v2171, 16
      %v2444 = vrot.slane %v2442, 4
      %v2445 = vor.u32 %v2444, %v2440
      %v2446 = vrot.slane %v2445, 4
      %v2448 = vshll.u32 %v2172, 16
      %v2450 = vrot.slane %v2448, 5
      %v2451 = vsel %vm276, %v2446, %v2450
      %v2453 = vshrl.u32 %v2173, 16
      %v2455 = vrot.slane %v2453, 4
      %v2456 = vshll.u32 %v2173, 16
      %v2458 = vrot.slane %v2456, 5
      %v2459 = vor.u32 %v2455, %v2458
      %v2460 = vrot.slane %v2459, 4
      %v2462 = vshll.u32 %v2174, 16
      %v2464 = vrot.slane %v2462, 5
      %v2465 = vsel %vm276, %v2460, %v2464
      %v2466 = vshrl.u32 %v2174, 16
      %v2468 = vrot.slane %v2466, 4
      %v2469 = vor.u32 %v2468, %v2464
      %v2470 = vrot.slane %v2469, 4
      %v2472 = vshll.u32 %v2175, 16
      %v2474 = vrot.slane %v2472, 5
      %v2475 = vsel %vm276, %v2470, %v2474
      %v2477 = vshrl.u32 %v2176, 16
      %v2479 = vrot.slane %v2477, 4
      %v2480 = vshll.u32 %v2176, 16
      %v2482 = vrot.slane %v2480, 5
      %v2483 = vor.u32 %v2479, %v2482
      %v2484 = vrot.slane %v2483, 4
      %v2486 = vshll.u32 %v2177, 16
      %v2488 = vrot.slane %v2486, 5
      %v2489 = vsel %vm276, %v2484, %v2488
      %v2490 = vshrl.u32 %v2177, 16
      %v2492 = vrot.slane %v2490, 4
      %v2493 = vor.u32 %v2492, %v2488
      %v2494 = vrot.slane %v2493, 4
      %v2496 = vshll.u32 %v2178, 16
      %v2498 = vrot.slane %v2496, 5
      %v2499 = vsel %vm276, %v2494, %v2498
      %v2501 = vshrl.u32 %v2179, 16
      %v2503 = vrot.slane %v2501, 4
      %v2504 = vshll.u32 %v2179, 16
      %v2506 = vrot.slane %v2504, 5
      %v2507 = vor.u32 %v2503, %v2506
      %v2508 = vrot.slane %v2507, 4
      %v2510 = vshll.u32 %v2180, 16
      %v2512 = vrot.slane %v2510, 5
      %v2513 = vsel %vm276, %v2508, %v2512
      %v2514 = vshrl.u32 %v2180, 16
      %v2516 = vrot.slane %v2514, 4
      %v2517 = vor.u32 %v2516, %v2512
      %v2518 = vrot.slane %v2517, 4
      %v2520 = vshll.u32 %v2181, 16
      %v2522 = vrot.slane %v2520, 5
      %v2523 = vsel %vm276, %v2518, %v2522
      %v2525 = vshrl.u32 %v2182, 16
      %v2527 = vrot.slane %v2525, 4
      %v2528 = vshll.u32 %v2182, 16
      %v2530 = vrot.slane %v2528, 5
      %v2531 = vor.u32 %v2527, %v2530
      %v2532 = vrot.slane %v2531, 4
      %v2534 = vshll.u32 %v2183, 16
      %v2536 = vrot.slane %v2534, 5
      %v2537 = vsel %vm276, %v2532, %v2536
      %v2538 = vshrl.u32 %v2183, 16
      %v2540 = vrot.slane %v2538, 4
      %v2541 = vor.u32 %v2540, %v2536
      %v2542 = vrot.slane %v2541, 4
      %v2544 = vshll.u32 %v2184, 16
      %v2546 = vrot.slane %v2544, 5
      %v2547 = vsel %vm276, %v2542, %v2546
      %v2549 = vshrl.u32 %v2185, 16
      %v2551 = vrot.slane %v2549, 4
      %v2552 = vshll.u32 %v2185, 16
      %v2554 = vrot.slane %v2552, 5
      %v2555 = vor.u32 %v2551, %v2554
      %v2556 = vrot.slane %v2555, 4
      %v2558 = vshll.u32 %v2186, 16
      %v2560 = vrot.slane %v2558, 5
      %v2561 = vsel %vm276, %v2556, %v2560
      %v2562 = vshrl.u32 %v2186, 16
      %v2564 = vrot.slane %v2562, 4
      %v2565 = vor.u32 %v2564, %v2560
      %v2566 = vrot.slane %v2565, 4
      %v2568 = vshll.u32 %v2187, 16
      %v2570 = vrot.slane %v2568, 5
      %v2571 = vsel %vm276, %v2566, %v2570
      %s2572 = scalar_lea.vmem %s1, 128
      %v2573 = vld [vmem:[%s2572] sm:$0xf]
      %v2574 = vld [vmem:[%s2572 + $0x4] sm:$0xf]
      %v2575 = vld [vmem:[%s2572 + $0x8] sm:$0xf]
      %v2576 = vld [vmem:[%s2572 + $0xc] sm:$0xf]
      %v2577 = vld [vmem:[%s2572 + $0x10] sm:$0xf]
      %v2578 = vld [vmem:[%s2572 + $0x14] sm:$0xf]
      %v2579 = vld [vmem:[%s2572 + $0x18] sm:$0xf]
      %v2580 = vld [vmem:[%s2572 + $0x1c] sm:$0xf]
      %v2581 = vunpack.c.l.b16 %v2201
      %v2582 = vunpack.c.l.b16 %v2211
      %v2583 = vunpack.c.l.b16 %v2225
      %v2584 = vunpack.c.l.b16 %v2235
      %v2585 = vunpack.c.l.b16 %v2249
      %v2586 = vunpack.c.l.b16 %v2259
      %v2587 = vunpack.c.l.b16 %v2273
      %v2588 = vunpack.c.l.b16 %v2283
      %v2589 = vunpack.c.l.b16 %v2297
      %v2590 = vunpack.c.l.b16 %v2307
      %v2591 = vunpack.c.l.b16 %v2321
      %v2592 = vunpack.c.l.b16 %v2331
      %v2593 = vunpack.c.l.b16 %v2345
      %v2594 = vunpack.c.l.b16 %v2355
      %v2595 = vunpack.c.l.b16 %v2369
      %v2596 = vunpack.c.l.b16 %v2379
      %v2597 = vunpack.c.l.b16 %v2393
      %v2598 = vunpack.c.l.b16 %v2403
      %v2599 = vunpack.c.l.b16 %v2417
      %v2600 = vunpack.c.l.b16 %v2427
      %v2601 = vunpack.c.l.b16 %v2441
      %v2602 = vunpack.c.l.b16 %v2451
      %v2603 = vunpack.c.l.b16 %v2465
      %v2604 = vunpack.c.l.b16 %v2475
      %v2605 = vunpack.c.l.b16 %v2489
      %v2606 = vunpack.c.l.b16 %v2499
      %v2607 = vunpack.c.l.b16 %v2513
      %v2608 = vunpack.c.l.b16 %v2523
      %v2609 = vunpack.c.l.b16 %v2537
      %v2610 = vunpack.c.l.b16 %v2547
      %v2611 = vunpack.c.l.b16 %v2561
      %v2612 = vunpack.c.l.b16 %v2571
      %v2613 = vpack.c.b16 %v2582, %v2581
      %v2614 = vpack.c.b16 %v2584, %v2583
      %v2615 = vpack.c.b16 %v2586, %v2585
      %v2616 = vpack.c.b16 %v2588, %v2587
      %v2617 = vpack.c.b16 %v2590, %v2589
      %v2618 = vpack.c.b16 %v2592, %v2591
      %v2619 = vpack.c.b16 %v2594, %v2593
      %v2620 = vpack.c.b16 %v2596, %v2595
      %v2621 = vpack.c.b16 %v2598, %v2597
      %v2622 = vpack.c.b16 %v2600, %v2599
      %v2623 = vpack.c.b16 %v2602, %v2601
      %v2624 = vpack.c.b16 %v2604, %v2603
      %v2625 = vpack.c.b16 %v2606, %v2605
      %v2626 = vpack.c.b16 %v2608, %v2607
      %v2627 = vpack.c.b16 %v2610, %v2609
      %v2628 = vpack.c.b16 %v2612, %v2611
      %v2637 = vunpack.c.l.b16 %v2573
      %v2638 = vunpack.c.l.b16 %v2574
      %v2639 = vunpack.c.l.b16 %v2575
      %v2640 = vunpack.c.l.b16 %v2576
      %v2641 = vunpack.c.l.b16 %v2577
      %v2642 = vunpack.c.l.b16 %v2578
      %v2643 = vunpack.c.l.b16 %v2579
      %v2644 = vunpack.c.l.b16 %v2580
      %v2645 = vpack.c.b16 %v2638, %v2637
      %v2646 = vpack.c.b16 %v2640, %v2639
      %v2647 = vpack.c.b16 %v2642, %v2641
      %v2648 = vpack.c.b16 %v2644, %v2643
      %v2654 = vsel %vm742, %v2613, 0
      %v2657 = vsel %vm742, %v2614, 0
      %v2660 = vsel %vm742, %v2615, 0
      %v2663 = vsel %vm742, %v2616, 0
      %v2666 = vsel %vm742, %v2617, 0
      %v2669 = vsel %vm742, %v2618, 0
      %v2672 = vsel %vm742, %v2619, 0
      %v2675 = vsel %vm742, %v2620, 0
      %v2678 = vsel %vm742, %v2621, 0
      %v2681 = vsel %vm742, %v2622, 0
      %v2684 = vsel %vm742, %v2623, 0
      %v2687 = vsel %vm742, %v2624, 0
      %v2690 = vsel %vm742, %v2625, 0
      %v2693 = vsel %vm742, %v2626, 0
      %v2696 = vsel %vm742, %v2627, 0
      %v2699 = vsel %vm742, %v2628, 0
      %2701 = vmatprep.subr.bf16.mxu0 0
      %2702 = vmatpush1.bf16.msra.mxu0 %v2645
      %2703 = vmatprep.subr.bf16.mxu0 0
      %2704 = vmatpush1.bf16.msra.mxu0 %v2646
      %2705 = vmatprep.subr.bf16.mxu0 0
      %2706 = vmatpush1.bf16.msra.mxu0 %v2647
      %2707 = vmatprep.subr.bf16.mxu0 0
      %2708 = vmatpush1.bf16.msra.mxu0 %v2648
      %2709 = vmatprep.subr.bf16.mxu0 0
      %2710 = vmatpush1.bf16.msra.mxu0 0
      %2711 = vmatprep.subr.bf16.mxu0 0
      %2712 = vmatpush1.bf16.msra.mxu0 0
      %2713 = vmatprep.subr.bf16.mxu0 0
      %2714 = vmatpush1.bf16.msra.mxu0 0
      %2715 = vmatprep.subr.bf16.mxu0 0
      %2716 = vmatpush1.bf16.msra.mxu0 0
      %2717 = vmatprep.subr.bf16.mxu0 0
      %2718 = vmatpush1.bf16.msra.mxu0 0
      %2719 = vmatprep.subr.bf16.mxu0 0
      %2720 = vmatpush1.bf16.msra.mxu0 0
      %2721 = vmatprep.subr.bf16.mxu0 0
      %2722 = vmatpush1.bf16.msra.mxu0 0
      %2723 = vmatprep.subr.bf16.mxu0 0
      %2724 = vmatpush1.bf16.msra.mxu0 0
      %2725 = vmatprep.subr.bf16.mxu0 0
      %2726 = vmatpush1.bf16.msra.mxu0 0
      %2727 = vmatprep.subr.bf16.mxu0 0
      %2728 = vmatpush1.bf16.msra.mxu0 0
      %2729 = vmatprep.subr.bf16.mxu0 0
      %2730 = vmatpush1.bf16.msra.mxu0 0
      %2731 = vmatprep.subr.bf16.mxu0 0
      %2732 = vmatpush1.bf16.msra.mxu0 0
      %2733 = vmatprep.mubr.bf16.mxu0 0
      %2734 = vmatmul.mubr.bf16.gmra.mrb[0].mxu0 %v2654
      %v2735 = vpop.f32.mrb[0].mxu0
      %v2736 = vadd.f32 0.0, %v2735
      %v2737 = vpop.f32.mrb[0].mxu0
      %v2738 = vpop.f32.mrb[0].mxu0
      %v2739 = vadd.f32 0.0, %v2738
      %v2740 = vpop.f32.mrb[0].mxu0
      %2741 = vmatprep.mubr.bf16.mxu0 0
      %2742 = vmatmul.mubr.bf16.gmra.mrb[0].mxu0 %v2657
      %v2743 = vpop.f32.mrb[0].mxu0
      %v2744 = vadd.f32 0.0, %v2743
      %v2745 = vpop.f32.mrb[0].mxu0
      %v2746 = vpop.f32.mrb[0].mxu0
      %v2747 = vadd.f32 0.0, %v2746
      %v2748 = vpop.f32.mrb[0].mxu0
      %2749 = vmatprep.mubr.bf16.mxu0 0
      %2750 = vmatmul.mubr.bf16.gmra.mrb[0].mxu0 %v2660
      %v2751 = vpop.f32.mrb[0].mxu0
      %v2752 = vadd.f32 0.0, %v2751
      %v2753 = vpop.f32.mrb[0].mxu0
      %v2754 = vpop.f32.mrb[0].mxu0
      %v2755 = vadd.f32 0.0, %v2754
      %v2756 = vpop.f32.mrb[0].mxu0
      %2757 = vmatprep.mubr.bf16.mxu0 0
      %2758 = vmatmul.mubr.bf16.gmra.mrb[0].mxu0 %v2663
      %v2759 = vpop.f32.mrb[0].mxu0
      %v2760 = vadd.f32 0.0, %v2759
      %v2761 = vpop.f32.mrb[0].mxu0
      %v2762 = vpop.f32.mrb[0].mxu0
      %v2763 = vadd.f32 0.0, %v2762
      %v2764 = vpop.f32.mrb[0].mxu0
      %2765 = vmatprep.mubr.bf16.mxu0 0
      %2766 = vmatmul.mubr.bf16.gmra.mrb[0].mxu0 %v2666
      %v2767 = vpop.f32.mrb[0].mxu0
      %v2768 = vadd.f32 0.0, %v2767
      %v2769 = vpop.f32.mrb[0].mxu0
      %v2770 = vpop.f32.mrb[0].mxu0
      %v2771 = vadd.f32 0.0, %v2770
      %v2772 = vpop.f32.mrb[0].mxu0
      %2773 = vmatprep.mubr.bf16.mxu0 0
      %2774 = vmatmul.mubr.bf16.gmra.mrb[0].mxu0 %v2669
      %v2775 = vpop.f32.mrb[0].mxu0
      %v2776 = vadd.f32 0.0, %v2775
      %v2777 = vpop.f32.mrb[0].mxu0
      %v2778 = vpop.f32.mrb[0].mxu0
      %v2779 = vadd.f32 0.0, %v2778
      %v2780 = vpop.f32.mrb[0].mxu0
      %2781 = vmatprep.mubr.bf16.mxu0 0
      %2782 = vmatmul.mubr.bf16.gmra.mrb[0].mxu0 %v2672
      %v2783 = vpop.f32.mrb[0].mxu0
      %v2784 = vadd.f32 0.0, %v2783
      %v2785 = vpop.f32.mrb[0].mxu0
      %v2786 = vpop.f32.mrb[0].mxu0
      %v2787 = vadd.f32 0.0, %v2786
      %v2788 = vpop.f32.mrb[0].mxu0
      %2789 = vmatprep.mubr.bf16.mxu0 0
      %2790 = vmatmul.mubr.bf16.gmra.mrb[0].mxu0 %v2675
      %v2791 = vpop.f32.mrb[0].mxu0
      %v2792 = vadd.f32 0.0, %v2791
      %v2793 = vpop.f32.mrb[0].mxu0
      %v2794 = vpop.f32.mrb[0].mxu0
      %v2795 = vadd.f32 0.0, %v2794
      %v2796 = vpop.f32.mrb[0].mxu0
      %2797 = vmatprep.mubr.bf16.mxu0 0
      %2798 = vmatmul.mubr.bf16.gmra.mrb[0].mxu0 %v2678
      %v2799 = vpop.f32.mrb[0].mxu0
      %v2800 = vadd.f32 0.0, %v2799
      %v2801 = vpop.f32.mrb[0].mxu0
      %v2802 = vpop.f32.mrb[0].mxu0
      %v2803 = vadd.f32 0.0, %v2802
      %v2804 = vpop.f32.mrb[0].mxu0
      %2805 = vmatprep.mubr.bf16.mxu0 0
      %2806 = vmatmul.mubr.bf16.gmra.mrb[0].mxu0 %v2681
      %v2807 = vpop.f32.mrb[0].mxu0
      %v2808 = vadd.f32 0.0, %v2807
      %v2809 = vpop.f32.mrb[0].mxu0
      %v2810 = vpop.f32.mrb[0].mxu0
      %v2811 = vadd.f32 0.0, %v2810
      %v2812 = vpop.f32.mrb[0].mxu0
      %2813 = vmatprep.mubr.bf16.mxu0 0
      %2814 = vmatmul.mubr.bf16.gmra.mrb[0].mxu0 %v2684
      %v2815 = vpop.f32.mrb[0].mxu0
      %v2816 = vadd.f32 0.0, %v2815
      %v2817 = vpop.f32.mrb[0].mxu0
      %v2818 = vpop.f32.mrb[0].mxu0
      %v2819 = vadd.f32 0.0, %v2818
      %v2820 = vpop.f32.mrb[0].mxu0
      %2821 = vmatprep.mubr.bf16.mxu0 0
      %2822 = vmatmul.mubr.bf16.gmra.mrb[0].mxu0 %v2687
      %v2823 = vpop.f32.mrb[0].mxu0
      %v2824 = vadd.f32 0.0, %v2823
      %v2825 = vpop.f32.mrb[0].mxu0
      %v2826 = vpop.f32.mrb[0].mxu0
      %v2827 = vadd.f32 0.0, %v2826
      %v2828 = vpop.f32.mrb[0].mxu0
      %2829 = vmatprep.mubr.bf16.mxu0 0
      %2830 = vmatmul.mubr.bf16.gmra.mrb[0].mxu0 %v2690
      %v2831 = vpop.f32.mrb[0].mxu0
      %v2832 = vadd.f32 0.0, %v2831
      %v2833 = vpop.f32.mrb[0].mxu0
      %v2834 = vpop.f32.mrb[0].mxu0
      %v2835 = vadd.f32 0.0, %v2834
      %v2836 = vpop.f32.mrb[0].mxu0
      %2837 = vmatprep.mubr.bf16.mxu0 0
      %2838 = vmatmul.mubr.bf16.gmra.mrb[0].mxu0 %v2693
      %v2839 = vpop.f32.mrb[0].mxu0
      %v2840 = vadd.f32 0.0, %v2839
      %v2841 = vpop.f32.mrb[0].mxu0
      %v2842 = vpop.f32.mrb[0].mxu0
      %v2843 = vadd.f32 0.0, %v2842
      %v2844 = vpop.f32.mrb[0].mxu0
      %2845 = vmatprep.mubr.bf16.mxu0 0
      %2846 = vmatmul.mubr.bf16.gmra.mrb[0].mxu0 %v2696
      %v2847 = vpop.f32.mrb[0].mxu0
      %v2848 = vadd.f32 0.0, %v2847
      %v2849 = vpop.f32.mrb[0].mxu0
      %v2850 = vpop.f32.mrb[0].mxu0
      %v2851 = vadd.f32 0.0, %v2850
      %v2852 = vpop.f32.mrb[0].mxu0
      %2853 = vmatprep.mubr.bf16.mxu0 0
      %2854 = vmatmul.mubr.bf16.gmra.mrb[0].mxu0 %v2699
      %v2855 = vpop.f32.mrb[0].mxu0
      %v2856 = vadd.f32 0.0, %v2855
      %v2857 = vpop.f32.mrb[0].mxu0
      %v2858 = vpop.f32.mrb[0].mxu0
      %v2859 = vadd.f32 0.0, %v2858
      %v2860 = vpop.f32.mrb[0].mxu0
      %2861 = vdwg.mxu0
      %v2862 = vadd.f32 %v2108, %v2736
      %v2863 = vadd.f32 %v2109, %v2739
      %v2864 = vadd.f32 %v2110, %v2744
      %v2865 = vadd.f32 %v2111, %v2747
      %v2866 = vadd.f32 %v2112, %v2752
      %v2867 = vadd.f32 %v2113, %v2755
      %v2868 = vadd.f32 %v2114, %v2760
      %v2869 = vadd.f32 %v2115, %v2763
      %v2870 = vadd.f32 %v2116, %v2768
      %v2871 = vadd.f32 %v2117, %v2771
      %v2872 = vadd.f32 %v2118, %v2776
      %v2873 = vadd.f32 %v2119, %v2779
      %v2874 = vadd.f32 %v2120, %v2784
      %v2875 = vadd.f32 %v2121, %v2787
      %v2876 = vadd.f32 %v2122, %v2792
      %v2877 = vadd.f32 %v2123, %v2795
      %v2878 = vadd.f32 %v2124, %v2800
      %v2879 = vadd.f32 %v2125, %v2803
      %v2880 = vadd.f32 %v2126, %v2808
      %v2881 = vadd.f32 %v2127, %v2811
      %v2882 = vadd.f32 %v2128, %v2816
      %v2883 = vadd.f32 %v2129, %v2819
      %v2884 = vadd.f32 %v2130, %v2824
      %v2885 = vadd.f32 %v2131, %v2827
      %v2886 = vadd.f32 %v2132, %v2832
      %v2887 = vadd.f32 %v2133, %v2835
      %v2888 = vadd.f32 %v2134, %v2840
      %v2889 = vadd.f32 %v2135, %v2843
      %v2890 = vadd.f32 %v2136, %v2848
      %v2891 = vadd.f32 %v2137, %v2851
      %v2892 = vadd.f32 %v2138, %v2856
      %v2893 = vadd.f32 %v2139, %v2859
      %v2894 = vld [vmem:[%s1753] sm:$0xe]
      %v2895 = vld [vmem:[%s1753 + $0xc] sm:$0xe]
      %v2896 = vld [vmem:[%s1753 + $0x18] sm:$0xe]
      %v2897 = vld [vmem:[%s1753 + $0x24] sm:$0xe]
      %v2898 = vld [vmem:[%s1753 + $0x30] sm:$0xe]
      %v2899 = vld [vmem:[%s1753 + $0x3c] sm:$0xe]
      %v2900 = vld [vmem:[%s1753 + $0x48] sm:$0xe]
      %v2901 = vld [vmem:[%s1753 + $0x54] sm:$0xe]
      %v2902 = vld [vmem:[%s1753 + $0x60] sm:$0xe]
      %v2903 = vld [vmem:[%s1753 + $0x6c] sm:$0xe]
      %v2904 = vld [vmem:[%s1753 + $0x78] sm:$0xe]
      %v2905 = vld [vmem:[%s1753 + $0x84] sm:$0xe]
      %v2906 = vld [vmem:[%s1753 + $0x90] sm:$0xe]
      %v2907 = vld [vmem:[%s1753 + $0x9c] sm:$0xe]
      %v2908 = vld [vmem:[%s1753 + $0xa8] sm:$0xe]
      %v2909 = vld [vmem:[%s1753 + $0xb4] sm:$0xe]
      %v2958 = vrot.slane %v2894, 5
      %v2959 = vrot.slane %v2958, 4
      %v2960 = vrot.slane %v2141, 5
      %v2961 = vsel %vm1315, %v2959, %v2960
      %v2962 = vrot.slane %v2960, 4
      %v2963 = vrot.slane %v2142, 5
      %v2964 = vsel %vm1315, %v2962, %v2963
      %v2965 = vrot.slane %v2895, 5
      %v2966 = vrot.slane %v2965, 4
      %v2967 = vrot.slane %v2144, 5
      %v2968 = vsel %vm1315, %v2966, %v2967
      %v2969 = vrot.slane %v2967, 4
      %v2970 = vrot.slane %v2145, 5
      %v2971 = vsel %vm1315, %v2969, %v2970
      %v2972 = vrot.slane %v2896, 5
      %v2973 = vrot.slane %v2972, 4
      %v2974 = vrot.slane %v2147, 5
      %v2975 = vsel %vm1315, %v2973, %v2974
      %v2976 = vrot.slane %v2974, 4
      %v2977 = vrot.slane %v2148, 5
      %v2978 = vsel %vm1315, %v2976, %v2977
      %v2979 = vrot.slane %v2897, 5
      %v2980 = vrot.slane %v2979, 4
      %v2981 = vrot.slane %v2150, 5
      %v2982 = vsel %vm1315, %v2980, %v2981
      %v2983 = vrot.slane %v2981, 4
      %v2984 = vrot.slane %v2151, 5
      %v2985 = vsel %vm1315, %v2983, %v2984
      %v2986 = vrot.slane %v2898, 5
      %v2987 = vrot.slane %v2986, 4
      %v2988 = vrot.slane %v2153, 5
      %v2989 = vsel %vm1315, %v2987, %v2988
      %v2990 = vrot.slane %v2988, 4
      %v2991 = vrot.slane %v2154, 5
      %v2992 = vsel %vm1315, %v2990, %v2991
      %v2993 = vrot.slane %v2899, 5
      %v2994 = vrot.slane %v2993, 4
      %v2995 = vrot.slane %v2156, 5
      %v2996 = vsel %vm1315, %v2994, %v2995
      %v2997 = vrot.slane %v2995, 4
      %v2998 = vrot.slane %v2157, 5
      %v2999 = vsel %vm1315, %v2997, %v2998
      %v3000 = vrot.slane %v2900, 5
      %v3001 = vrot.slane %v3000, 4
      %v3002 = vrot.slane %v2159, 5
      %v3003 = vsel %vm1315, %v3001, %v3002
      %v3004 = vrot.slane %v3002, 4
      %v3005 = vrot.slane %v2160, 5
      %v3006 = vsel %vm1315, %v3004, %v3005
      %v3007 = vrot.slane %v2901, 5
      %v3008 = vrot.slane %v3007, 4
      %v3009 = vrot.slane %v2162, 5
      %v3010 = vsel %vm1315, %v3008, %v3009
      %v3011 = vrot.slane %v3009, 4
      %v3012 = vrot.slane %v2163, 5
      %v3013 = vsel %vm1315, %v3011, %v3012
      %v3014 = vrot.slane %v2902, 5
      %v3015 = vrot.slane %v3014, 4
      %v3016 = vrot.slane %v2165, 5
      %v3017 = vsel %vm1315, %v3015, %v3016
      %v3018 = vrot.slane %v3016, 4
      %v3019 = vrot.slane %v2166, 5
      %v3020 = vsel %vm1315, %v3018, %v3019
      %v3021 = vrot.slane %v2903, 5
      %v3022 = vrot.slane %v3021, 4
      %v3023 = vrot.slane %v2168, 5
      %v3024 = vsel %vm1315, %v3022, %v3023
      %v3025 = vrot.slane %v3023, 4
      %v3026 = vrot.slane %v2169, 5
      %v3027 = vsel %vm1315, %v3025, %v3026
      %v3028 = vrot.slane %v2904, 5
      %v3029 = vrot.slane %v3028, 4
      %v3030 = vrot.slane %v2171, 5
      %v3031 = vsel %vm1315, %v3029, %v3030
      %v3032 = vrot.slane %v3030, 4
      %v3033 = vrot.slane %v2172, 5
      %v3034 = vsel %vm1315, %v3032, %v3033
      %v3035 = vrot.slane %v2905, 5
      %v3036 = vrot.slane %v3035, 4
      %v3037 = vrot.slane %v2174, 5
      %v3038 = vsel %vm1315, %v3036, %v3037
      %v3039 = vrot.slane %v3037, 4
      %v3040 = vrot.slane %v2175, 5
      %v3041 = vsel %vm1315, %v3039, %v3040
      %v3042 = vrot.slane %v2906, 5
      %v3043 = vrot.slane %v3042, 4
      %v3044 = vrot.slane %v2177, 5
      %v3045 = vsel %vm1315, %v3043, %v3044
      %v3046 = vrot.slane %v3044, 4
      %v3047 = vrot.slane %v2178, 5
      %v3048 = vsel %vm1315, %v3046, %v3047
      %v3049 = vrot.slane %v2907, 5
      %v3050 = vrot.slane %v3049, 4
      %v3051 = vrot.slane %v2180, 5
      %v3052 = vsel %vm1315, %v3050, %v3051
      %v3053 = vrot.slane %v3051, 4
      %v3054 = vrot.slane %v2181, 5
      %v3055 = vsel %vm1315, %v3053, %v3054
      %v3056 = vrot.slane %v2908, 5
      %v3057 = vrot.slane %v3056, 4
      %v3058 = vrot.slane %v2183, 5
      %v3059 = vsel %vm1315, %v3057, %v3058
      %v3060 = vrot.slane %v3058, 4
      %v3061 = vrot.slane %v2184, 5
      %v3062 = vsel %vm1315, %v3060, %v3061
      %v3063 = vrot.slane %v2909, 5
      %v3064 = vrot.slane %v3063, 4
      %v3065 = vrot.slane %v2186, 5
      %v3066 = vsel %vm1315, %v3064, %v3065
      %v3067 = vrot.slane %v3065, 4
      %v3068 = vrot.slane %v2187, 5
      %v3069 = vsel %vm1315, %v3067, %v3068
      %s3070 = scalar_lea.vmem %s1, 160
      %v3071 = vld [vmem:[%s3070] sm:$0xf]
      %v3072 = vld [vmem:[%s3070 + $0x4] sm:$0xf]
      %v3073 = vld [vmem:[%s3070 + $0x8] sm:$0xf]
      %v3074 = vld [vmem:[%s3070 + $0xc] sm:$0xf]
      %v3075 = vld [vmem:[%s3070 + $0x10] sm:$0xf]
      %v3076 = vld [vmem:[%s3070 + $0x14] sm:$0xf]
      %v3077 = vld [vmem:[%s3070 + $0x18] sm:$0xf]
      %v3078 = vld [vmem:[%s3070 + $0x1c] sm:$0xf]
      %v3079 = vunpack.c.l.b16 %v2961
      %v3080 = vunpack.c.l.b16 %v2964
      %v3081 = vunpack.c.l.b16 %v2968
      %v3082 = vunpack.c.l.b16 %v2971
      %v3083 = vunpack.c.l.b16 %v2975
      %v3084 = vunpack.c.l.b16 %v2978
      %v3085 = vunpack.c.l.b16 %v2982
      %v3086 = vunpack.c.l.b16 %v2985
      %v3087 = vunpack.c.l.b16 %v2989
      %v3088 = vunpack.c.l.b16 %v2992
      %v3089 = vunpack.c.l.b16 %v2996
      %v3090 = vunpack.c.l.b16 %v2999
      %v3091 = vunpack.c.l.b16 %v3003
      %v3092 = vunpack.c.l.b16 %v3006
      %v3093 = vunpack.c.l.b16 %v3010
      %v3094 = vunpack.c.l.b16 %v3013
      %v3095 = vunpack.c.l.b16 %v3017
      %v3096 = vunpack.c.l.b16 %v3020
      %v3097 = vunpack.c.l.b16 %v3024
      %v3098 = vunpack.c.l.b16 %v3027
      %v3099 = vunpack.c.l.b16 %v3031
      %v3100 = vunpack.c.l.b16 %v3034
      %v3101 = vunpack.c.l.b16 %v3038
      %v3102 = vunpack.c.l.b16 %v3041
      %v3103 = vunpack.c.l.b16 %v3045
      %v3104 = vunpack.c.l.b16 %v3048
      %v3105 = vunpack.c.l.b16 %v3052
      %v3106 = vunpack.c.l.b16 %v3055
      %v3107 = vunpack.c.l.b16 %v3059
      %v3108 = vunpack.c.l.b16 %v3062
      %v3109 = vunpack.c.l.b16 %v3066
      %v3110 = vunpack.c.l.b16 %v3069
      %v3111 = vpack.c.b16 %v3080, %v3079
      %v3112 = vpack.c.b16 %v3082, %v3081
      %v3113 = vpack.c.b16 %v3084, %v3083
      %v3114 = vpack.c.b16 %v3086, %v3085
      %v3115 = vpack.c.b16 %v3088, %v3087
      %v3116 = vpack.c.b16 %v3090, %v3089
      %v3117 = vpack.c.b16 %v3092, %v3091
      %v3118 = vpack.c.b16 %v3094, %v3093
      %v3119 = vpack.c.b16 %v3096, %v3095
      %v3120 = vpack.c.b16 %v3098, %v3097
      %v3121 = vpack.c.b16 %v3100, %v3099
      %v3122 = vpack.c.b16 %v3102, %v3101
      %v3123 = vpack.c.b16 %v3104, %v3103
      %v3124 = vpack.c.b16 %v3106, %v3105
      %v3125 = vpack.c.b16 %v3108, %v3107
      %v3126 = vpack.c.b16 %v3110, %v3109
      %v3135 = vunpack.c.l.b16 %v3071
      %v3136 = vunpack.c.l.b16 %v3072
      %v3137 = vunpack.c.l.b16 %v3073
      %v3138 = vunpack.c.l.b16 %v3074
      %v3139 = vunpack.c.l.b16 %v3075
      %v3140 = vunpack.c.l.b16 %v3076
      %v3141 = vunpack.c.l.b16 %v3077
      %v3142 = vunpack.c.l.b16 %v3078
      %v3143 = vpack.c.b16 %v3136, %v3135
      %v3144 = vpack.c.b16 %v3138, %v3137
      %v3145 = vpack.c.b16 %v3140, %v3139
      %v3146 = vpack.c.b16 %v3142, %v3141
      %v3152 = vsel %vm742, %v3111, 0
      %v3155 = vsel %vm742, %v3112, 0
      %v3158 = vsel %vm742, %v3113, 0
      %v3161 = vsel %vm742, %v3114, 0
      %v3164 = vsel %vm742, %v3115, 0
      %v3167 = vsel %vm742, %v3116, 0
      %v3170 = vsel %vm742, %v3117, 0
      %v3173 = vsel %vm742, %v3118, 0
      %v3176 = vsel %vm742, %v3119, 0
      %v3179 = vsel %vm742, %v3120, 0
      %v3182 = vsel %vm742, %v3121, 0
      %v3185 = vsel %vm742, %v3122, 0
      %v3188 = vsel %vm742, %v3123, 0
      %v3191 = vsel %vm742, %v3124, 0
      %v3194 = vsel %vm742, %v3125, 0
      %v3197 = vsel %vm742, %v3126, 0
      %3199 = vmatprep.subr.bf16.mxu0 0
      %3200 = vmatpush1.bf16.msra.mxu0 %v3143
      %3201 = vmatprep.subr.bf16.mxu0 0
      %3202 = vmatpush1.bf16.msra.mxu0 %v3144
      %3203 = vmatprep.subr.bf16.mxu0 0
      %3204 = vmatpush1.bf16.msra.mxu0 %v3145
      %3205 = vmatprep.subr.bf16.mxu0 0
      %3206 = vmatpush1.bf16.msra.mxu0 %v3146
      %3207 = vmatprep.subr.bf16.mxu0 0
      %3208 = vmatpush1.bf16.msra.mxu0 0
      %3209 = vmatprep.subr.bf16.mxu0 0
      %3210 = vmatpush1.bf16.msra.mxu0 0
      %3211 = vmatprep.subr.bf16.mxu0 0
      %3212 = vmatpush1.bf16.msra.mxu0 0
      %3213 = vmatprep.subr.bf16.mxu0 0
      %3214 = vmatpush1.bf16.msra.mxu0 0
      %3215 = vmatprep.subr.bf16.mxu0 0
      %3216 = vmatpush1.bf16.msra.mxu0 0
      %3217 = vmatprep.subr.bf16.mxu0 0
      %3218 = vmatpush1.bf16.msra.mxu0 0
      %3219 = vmatprep.subr.bf16.mxu0 0
      %3220 = vmatpush1.bf16.msra.mxu0 0
      %3221 = vmatprep.subr.bf16.mxu0 0
      %3222 = vmatpush1.bf16.msra.mxu0 0
      %3223 = vmatprep.subr.bf16.mxu0 0
      %3224 = vmatpush1.bf16.msra.mxu0 0
      %3225 = vmatprep.subr.bf16.mxu0 0
      %3226 = vmatpush1.bf16.msra.mxu0 0
      %3227 = vmatprep.subr.bf16.mxu0 0
      %3228 = vmatpush1.bf16.msra.mxu0 0
      %3229 = vmatprep.subr.bf16.mxu0 0
      %3230 = vmatpush1.bf16.msra.mxu0 0
      %3231 = vmatprep.mubr.bf16.mxu0 0
      %3232 = vmatmul.mubr.bf16.gmra.mrb[0].mxu0 %v3152
      %v3233 = vpop.f32.mrb[0].mxu0
      %v3234 = vadd.f32 0.0, %v3233
      %v3235 = vpop.f32.mrb[0].mxu0
      %v3236 = vpop.f32.mrb[0].mxu0
      %v3237 = vadd.f32 0.0, %v3236
      %v3238 = vpop.f32.mrb[0].mxu0
      %3239 = vmatprep.mubr.bf16.mxu0 0
      %3240 = vmatmul.mubr.bf16.gmra.mrb[0].mxu0 %v3155
      %v3241 = vpop.f32.mrb[0].mxu0
      %v3242 = vadd.f32 0.0, %v3241
      %v3243 = vpop.f32.mrb[0].mxu0
      %v3244 = vpop.f32.mrb[0].mxu0
      %v3245 = vadd.f32 0.0, %v3244
      %v3246 = vpop.f32.mrb[0].mxu0
      %3247 = vmatprep.mubr.bf16.mxu0 0
      %3248 = vmatmul.mubr.bf16.gmra.mrb[0].mxu0 %v3158
      %v3249 = vpop.f32.mrb[0].mxu0
      %v3250 = vadd.f32 0.0, %v3249
      %v3251 = vpop.f32.mrb[0].mxu0
      %v3252 = vpop.f32.mrb[0].mxu0
      %v3253 = vadd.f32 0.0, %v3252
      %v3254 = vpop.f32.mrb[0].mxu0
      %3255 = vmatprep.mubr.bf16.mxu0 0
      %3256 = vmatmul.mubr.bf16.gmra.mrb[0].mxu0 %v3161
      %v3257 = vpop.f32.mrb[0].mxu0
      %v3258 = vadd.f32 0.0, %v3257
      %v3259 = vpop.f32.mrb[0].mxu0
      %v3260 = vpop.f32.mrb[0].mxu0
      %v3261 = vadd.f32 0.0, %v3260
      %v3262 = vpop.f32.mrb[0].mxu0
      %3263 = vmatprep.mubr.bf16.mxu0 0
      %3264 = vmatmul.mubr.bf16.gmra.mrb[0].mxu0 %v3164
      %v3265 = vpop.f32.mrb[0].mxu0
      %v3266 = vadd.f32 0.0, %v3265
      %v3267 = vpop.f32.mrb[0].mxu0
      %v3268 = vpop.f32.mrb[0].mxu0
      %v3269 = vadd.f32 0.0, %v3268
      %v3270 = vpop.f32.mrb[0].mxu0
      %3271 = vmatprep.mubr.bf16.mxu0 0
      %3272 = vmatmul.mubr.bf16.gmra.mrb[0].mxu0 %v3167
      %v3273 = vpop.f32.mrb[0].mxu0
      %v3274 = vadd.f32 0.0, %v3273
      %v3275 = vpop.f32.mrb[0].mxu0
      %v3276 = vpop.f32.mrb[0].mxu0
      %v3277 = vadd.f32 0.0, %v3276
      %v3278 = vpop.f32.mrb[0].mxu0
      %3279 = vmatprep.mubr.bf16.mxu0 0
      %3280 = vmatmul.mubr.bf16.gmra.mrb[0].mxu0 %v3170
      %v3281 = vpop.f32.mrb[0].mxu0
      %v3282 = vadd.f32 0.0, %v3281
      %v3283 = vpop.f32.mrb[0].mxu0
      %v3284 = vpop.f32.mrb[0].mxu0
      %v3285 = vadd.f32 0.0, %v3284
      %v3286 = vpop.f32.mrb[0].mxu0
      %3287 = vmatprep.mubr.bf16.mxu0 0
      %3288 = vmatmul.mubr.bf16.gmra.mrb[0].mxu0 %v3173
      %v3289 = vpop.f32.mrb[0].mxu0
      %v3290 = vadd.f32 0.0, %v3289
      %v3291 = vpop.f32.mrb[0].mxu0
      %v3292 = vpop.f32.mrb[0].mxu0
      %v3293 = vadd.f32 0.0, %v3292
      %v3294 = vpop.f32.mrb[0].mxu0
      %3295 = vmatprep.mubr.bf16.mxu0 0
      %3296 = vmatmul.mubr.bf16.gmra.mrb[0].mxu0 %v3176
      %v3297 = vpop.f32.mrb[0].mxu0
      %v3298 = vadd.f32 0.0, %v3297
      %v3299 = vpop.f32.mrb[0].mxu0
      %v3300 = vpop.f32.mrb[0].mxu0
      %v3301 = vadd.f32 0.0, %v3300
      %v3302 = vpop.f32.mrb[0].mxu0
      %3303 = vmatprep.mubr.bf16.mxu0 0
      %3304 = vmatmul.mubr.bf16.gmra.mrb[0].mxu0 %v3179
      %v3305 = vpop.f32.mrb[0].mxu0
      %v3306 = vadd.f32 0.0, %v3305
      %v3307 = vpop.f32.mrb[0].mxu0
      %v3308 = vpop.f32.mrb[0].mxu0
      %v3309 = vadd.f32 0.0, %v3308
      %v3310 = vpop.f32.mrb[0].mxu0
      %3311 = vmatprep.mubr.bf16.mxu0 0
      %3312 = vmatmul.mubr.bf16.gmra.mrb[0].mxu0 %v3182
      %v3313 = vpop.f32.mrb[0].mxu0
      %v3314 = vadd.f32 0.0, %v3313
      %v3315 = vpop.f32.mrb[0].mxu0
      %v3316 = vpop.f32.mrb[0].mxu0
      %v3317 = vadd.f32 0.0, %v3316
      %v3318 = vpop.f32.mrb[0].mxu0
      %3319 = vmatprep.mubr.bf16.mxu0 0
      %3320 = vmatmul.mubr.bf16.gmra.mrb[0].mxu0 %v3185
      %v3321 = vpop.f32.mrb[0].mxu0
      %v3322 = vadd.f32 0.0, %v3321
      %v3323 = vpop.f32.mrb[0].mxu0
      %v3324 = vpop.f32.mrb[0].mxu0
      %v3325 = vadd.f32 0.0, %v3324
      %v3326 = vpop.f32.mrb[0].mxu0
      %3327 = vmatprep.mubr.bf16.mxu0 0
      %3328 = vmatmul.mubr.bf16.gmra.mrb[0].mxu0 %v3188
      %v3329 = vpop.f32.mrb[0].mxu0
      %v3330 = vadd.f32 0.0, %v3329
      %v3331 = vpop.f32.mrb[0].mxu0
      %v3332 = vpop.f32.mrb[0].mxu0
      %v3333 = vadd.f32 0.0, %v3332
      %v3334 = vpop.f32.mrb[0].mxu0
      %3335 = vmatprep.mubr.bf16.mxu0 0
      %3336 = vmatmul.mubr.bf16.gmra.mrb[0].mxu0 %v3191
      %v3337 = vpop.f32.mrb[0].mxu0
      %v3338 = vadd.f32 0.0, %v3337
      %v3339 = vpop.f32.mrb[0].mxu0
      %v3340 = vpop.f32.mrb[0].mxu0
      %v3341 = vadd.f32 0.0, %v3340
      %v3342 = vpop.f32.mrb[0].mxu0
      %3343 = vmatprep.mubr.bf16.mxu0 0
      %3344 = vmatmul.mubr.bf16.gmra.mrb[0].mxu0 %v3194
      %v3345 = vpop.f32.mrb[0].mxu0
      %v3346 = vadd.f32 0.0, %v3345
      %v3347 = vpop.f32.mrb[0].mxu0
      %v3348 = vpop.f32.mrb[0].mxu0
      %v3349 = vadd.f32 0.0, %v3348
      %v3350 = vpop.f32.mrb[0].mxu0
      %3351 = vmatprep.mubr.bf16.mxu0 0
      %3352 = vmatmul.mubr.bf16.gmra.mrb[0].mxu0 %v3197
      %v3353 = vpop.f32.mrb[0].mxu0
      %v3354 = vadd.f32 0.0, %v3353
      %v3355 = vpop.f32.mrb[0].mxu0
      %v3356 = vpop.f32.mrb[0].mxu0
      %v3357 = vadd.f32 0.0, %v3356
      %v3358 = vpop.f32.mrb[0].mxu0
      %3359 = vdwg.mxu0
      %v3360 = vadd.f32 %v2862, %v3234
      %v3361 = vadd.f32 %v2863, %v3237
      %v3362 = vadd.f32 %v2864, %v3242
      %v3363 = vadd.f32 %v2865, %v3245
      %v3364 = vadd.f32 %v2866, %v3250
      %v3365 = vadd.f32 %v2867, %v3253
      %v3366 = vadd.f32 %v2868, %v3258
      %v3367 = vadd.f32 %v2869, %v3261
      %v3368 = vadd.f32 %v2870, %v3266
      %v3369 = vadd.f32 %v2871, %v3269
      %v3370 = vadd.f32 %v2872, %v3274
      %v3371 = vadd.f32 %v2873, %v3277
      %v3372 = vadd.f32 %v2874, %v3282
      %v3373 = vadd.f32 %v2875, %v3285
      %v3374 = vadd.f32 %v2876, %v3290
      %v3375 = vadd.f32 %v2877, %v3293
      %v3376 = vadd.f32 %v2878, %v3298
      %v3377 = vadd.f32 %v2879, %v3301
      %v3378 = vadd.f32 %v2880, %v3306
      %v3379 = vadd.f32 %v2881, %v3309
      %v3380 = vadd.f32 %v2882, %v3314
      %v3381 = vadd.f32 %v2883, %v3317
      %v3382 = vadd.f32 %v2884, %v3322
      %v3383 = vadd.f32 %v2885, %v3325
      %v3384 = vadd.f32 %v2886, %v3330
      %v3385 = vadd.f32 %v2887, %v3333
      %v3386 = vadd.f32 %v2888, %v3338
      %v3387 = vadd.f32 %v2889, %v3341
      %v3388 = vadd.f32 %v2890, %v3346
      %v3389 = vadd.f32 %v2891, %v3349
      %v3390 = vadd.f32 %v2892, %v3354
      %v3391 = vadd.f32 %v2893, %v3357
      %s3392 = sadd.s32 %s214, 2
      %s3393 = smul.u32 %s3392, 3
      %s3394 = smul.addr %s3393, 4
      %s3395 = scalar_lea.vmem %s195, %s3394
      %v3396 = vld [vmem:[%s3395] sm:$0xf]
      %v3397 = vld [vmem:[%s3395 + $0x4] sm:$0xf]
      %v3398 = vld [vmem:[%s3395 + $0xc] sm:$0xf]
      %v3399 = vld [vmem:[%s3395 + $0x10] sm:$0xf]
      %v3400 = vld [vmem:[%s3395 + $0x18] sm:$0xf]
      %v3401 = vld [vmem:[%s3395 + $0x1c] sm:$0xf]
      %v3402 = vld [vmem:[%s3395 + $0x24] sm:$0xf]
      %v3403 = vld [vmem:[%s3395 + $0x28] sm:$0xf]
      %v3404 = vld [vmem:[%s3395 + $0x30] sm:$0xf]
      %v3405 = vld [vmem:[%s3395 + $0x34] sm:$0xf]
      %v3406 = vld [vmem:[%s3395 + $0x3c] sm:$0xf]
      %v3407 = vld [vmem:[%s3395 + $0x40] sm:$0xf]
      %v3408 = vld [vmem:[%s3395 + $0x48] sm:$0xf]
      %v3409 = vld [vmem:[%s3395 + $0x4c] sm:$0xf]
      %v3410 = vld [vmem:[%s3395 + $0x54] sm:$0xf]
      %v3411 = vld [vmem:[%s3395 + $0x58] sm:$0xf]
      %v3412 = vld [vmem:[%s3395 + $0x60] sm:$0xf]
      %v3413 = vld [vmem:[%s3395 + $0x64] sm:$0xf]
      %v3414 = vld [vmem:[%s3395 + $0x6c] sm:$0xf]
      %v3415 = vld [vmem:[%s3395 + $0x70] sm:$0xf]
      %v3416 = vld [vmem:[%s3395 + $0x78] sm:$0xf]
      %v3417 = vld [vmem:[%s3395 + $0x7c] sm:$0xf]
      %v3418 = vld [vmem:[%s3395 + $0x84] sm:$0xf]
      %v3419 = vld [vmem:[%s3395 + $0x88] sm:$0xf]
      %v3420 = vld [vmem:[%s3395 + $0x90] sm:$0xf]
      %v3421 = vld [vmem:[%s3395 + $0x94] sm:$0xf]
      %v3422 = vld [vmem:[%s3395 + $0x9c] sm:$0xf]
      %v3423 = vld [vmem:[%s3395 + $0xa0] sm:$0xf]
      %v3424 = vld [vmem:[%s3395 + $0xa8] sm:$0xf]
      %v3425 = vld [vmem:[%s3395 + $0xac] sm:$0xf]
      %v3426 = vld [vmem:[%s3395 + $0xb4] sm:$0xf]
      %v3427 = vld [vmem:[%s3395 + $0xb8] sm:$0xf]
      %s3428 = scalar_lea.vmem %s1, 192
      %v3429 = vld [vmem:[%s3428] sm:$0xf]
      %v3430 = vld [vmem:[%s3428 + $0x4] sm:$0xf]
      %v3431 = vld [vmem:[%s3428 + $0x8] sm:$0xf]
      %v3432 = vld [vmem:[%s3428 + $0xc] sm:$0xf]
      %v3433 = vld [vmem:[%s3428 + $0x10] sm:$0xf]
      %v3434 = vld [vmem:[%s3428 + $0x14] sm:$0xf]
      %v3435 = vld [vmem:[%s3428 + $0x18] sm:$0xf]
      %v3436 = vld [vmem:[%s3428 + $0x1c] sm:$0xf]
      %v3469 = vunpack.c.l.b16 %v3396
      %v3470 = vunpack.c.l.b16 %v3397
      %v3471 = vunpack.c.l.b16 %v3398
      %v3472 = vunpack.c.l.b16 %v3399
      %v3473 = vunpack.c.l.b16 %v3400
      %v3474 = vunpack.c.l.b16 %v3401
      %v3475 = vunpack.c.l.b16 %v3402
      %v3476 = vunpack.c.l.b16 %v3403
      %v3477 = vunpack.c.l.b16 %v3404
      %v3478 = vunpack.c.l.b16 %v3405
      %v3479 = vunpack.c.l.b16 %v3406
      %v3480 = vunpack.c.l.b16 %v3407
      %v3481 = vunpack.c.l.b16 %v3408
      %v3482 = vunpack.c.l.b16 %v3409
      %v3483 = vunpack.c.l.b16 %v3410
      %v3484 = vunpack.c.l.b16 %v3411
      %v3485 = vunpack.c.l.b16 %v3412
      %v3486 = vunpack.c.l.b16 %v3413
      %v3487 = vunpack.c.l.b16 %v3414
      %v3488 = vunpack.c.l.b16 %v3415
      %v3489 = vunpack.c.l.b16 %v3416
      %v3490 = vunpack.c.l.b16 %v3417
      %v3491 = vunpack.c.l.b16 %v3418
      %v3492 = vunpack.c.l.b16 %v3419
      %v3493 = vunpack.c.l.b16 %v3420
      %v3494 = vunpack.c.l.b16 %v3421
      %v3495 = vunpack.c.l.b16 %v3422
      %v3496 = vunpack.c.l.b16 %v3423
      %v3497 = vunpack.c.l.b16 %v3424
      %v3498 = vunpack.c.l.b16 %v3425
      %v3499 = vunpack.c.l.b16 %v3426
      %v3500 = vunpack.c.l.b16 %v3427
      %v3501 = vpack.c.b16 %v3470, %v3469
      %v3502 = vpack.c.b16 %v3472, %v3471
      %v3503 = vpack.c.b16 %v3474, %v3473
      %v3504 = vpack.c.b16 %v3476, %v3475
      %v3505 = vpack.c.b16 %v3478, %v3477
      %v3506 = vpack.c.b16 %v3480, %v3479
      %v3507 = vpack.c.b16 %v3482, %v3481
      %v3508 = vpack.c.b16 %v3484, %v3483
      %v3509 = vpack.c.b16 %v3486, %v3485
      %v3510 = vpack.c.b16 %v3488, %v3487
      %v3511 = vpack.c.b16 %v3490, %v3489
      %v3512 = vpack.c.b16 %v3492, %v3491
      %v3513 = vpack.c.b16 %v3494, %v3493
      %v3514 = vpack.c.b16 %v3496, %v3495
      %v3515 = vpack.c.b16 %v3498, %v3497
      %v3516 = vpack.c.b16 %v3500, %v3499
      %v3525 = vunpack.c.l.b16 %v3429
      %v3526 = vunpack.c.l.b16 %v3430
      %v3527 = vunpack.c.l.b16 %v3431
      %v3528 = vunpack.c.l.b16 %v3432
      %v3529 = vunpack.c.l.b16 %v3433
      %v3530 = vunpack.c.l.b16 %v3434
      %v3531 = vunpack.c.l.b16 %v3435
      %v3532 = vunpack.c.l.b16 %v3436
      %v3533 = vpack.c.b16 %v3526, %v3525
      %v3534 = vpack.c.b16 %v3528, %v3527
      %v3535 = vpack.c.b16 %v3530, %v3529
      %v3536 = vpack.c.b16 %v3532, %v3531
      %v3542 = vsel %vm742, %v3501, 0
      %v3545 = vsel %vm742, %v3502, 0
      %v3548 = vsel %vm742, %v3503, 0
      %v3551 = vsel %vm742, %v3504, 0
      %v3554 = vsel %vm742, %v3505, 0
      %v3557 = vsel %vm742, %v3506, 0
      %v3560 = vsel %vm742, %v3507, 0
      %v3563 = vsel %vm742, %v3508, 0
      %v3566 = vsel %vm742, %v3509, 0
      %v3569 = vsel %vm742, %v3510, 0
      %v3572 = vsel %vm742, %v3511, 0
      %v3575 = vsel %vm742, %v3512, 0
      %v3578 = vsel %vm742, %v3513, 0
      %v3581 = vsel %vm742, %v3514, 0
      %v3584 = vsel %vm742, %v3515, 0
      %v3587 = vsel %vm742, %v3516, 0
      %3589 = vmatprep.subr.bf16.mxu0 0
      %3590 = vmatpush1.bf16.msra.mxu0 %v3533
      %3591 = vmatprep.subr.bf16.mxu0 0
      %3592 = vmatpush1.bf16.msra.mxu0 %v3534
      %3593 = vmatprep.subr.bf16.mxu0 0
      %3594 = vmatpush1.bf16.msra.mxu0 %v3535
      %3595 = vmatprep.subr.bf16.mxu0 0
      %3596 = vmatpush1.bf16.msra.mxu0 %v3536
      %3597 = vmatprep.subr.bf16.mxu0 0
      %3598 = vmatpush1.bf16.msra.mxu0 0
      %3599 = vmatprep.subr.bf16.mxu0 0
      %3600 = vmatpush1.bf16.msra.mxu0 0
      %3601 = vmatprep.subr.bf16.mxu0 0
      %3602 = vmatpush1.bf16.msra.mxu0 0
      %3603 = vmatprep.subr.bf16.mxu0 0
      %3604 = vmatpush1.bf16.msra.mxu0 0
      %3605 = vmatprep.subr.bf16.mxu0 0
      %3606 = vmatpush1.bf16.msra.mxu0 0
      %3607 = vmatprep.subr.bf16.mxu0 0
      %3608 = vmatpush1.bf16.msra.mxu0 0
      %3609 = vmatprep.subr.bf16.mxu0 0
      %3610 = vmatpush1.bf16.msra.mxu0 0
      %3611 = vmatprep.subr.bf16.mxu0 0
      %3612 = vmatpush1.bf16.msra.mxu0 0
      %3613 = vmatprep.subr.bf16.mxu0 0
      %3614 = vmatpush1.bf16.msra.mxu0 0
      %3615 = vmatprep.subr.bf16.mxu0 0
      %3616 = vmatpush1.bf16.msra.mxu0 0
      %3617 = vmatprep.subr.bf16.mxu0 0
      %3618 = vmatpush1.bf16.msra.mxu0 0
      %3619 = vmatprep.subr.bf16.mxu0 0
      %3620 = vmatpush1.bf16.msra.mxu0 0
      %3621 = vmatprep.mubr.bf16.mxu0 0
      %3622 = vmatmul.mubr.bf16.gmra.mrb[0].mxu0 %v3542
      %v3623 = vpop.f32.mrb[0].mxu0
      %v3624 = vadd.f32 0.0, %v3623
      %v3625 = vpop.f32.mrb[0].mxu0
      %v3626 = vpop.f32.mrb[0].mxu0
      %v3627 = vadd.f32 0.0, %v3626
      %v3628 = vpop.f32.mrb[0].mxu0
      %3629 = vmatprep.mubr.bf16.mxu0 0
      %3630 = vmatmul.mubr.bf16.gmra.mrb[0].mxu0 %v3545
      %v3631 = vpop.f32.mrb[0].mxu0
      %v3632 = vadd.f32 0.0, %v3631
      %v3633 = vpop.f32.mrb[0].mxu0
      %v3634 = vpop.f32.mrb[0].mxu0
      %v3635 = vadd.f32 0.0, %v3634
      %v3636 = vpop.f32.mrb[0].mxu0
      %3637 = vmatprep.mubr.bf16.mxu0 0
      %3638 = vmatmul.mubr.bf16.gmra.mrb[0].mxu0 %v3548
      %v3639 = vpop.f32.mrb[0].mxu0
      %v3640 = vadd.f32 0.0, %v3639
      %v3641 = vpop.f32.mrb[0].mxu0
      %v3642 = vpop.f32.mrb[0].mxu0
      %v3643 = vadd.f32 0.0, %v3642
      %v3644 = vpop.f32.mrb[0].mxu0
      %3645 = vmatprep.mubr.bf16.mxu0 0
      %3646 = vmatmul.mubr.bf16.gmra.mrb[0].mxu0 %v3551
      %v3647 = vpop.f32.mrb[0].mxu0
      %v3648 = vadd.f32 0.0, %v3647
      %v3649 = vpop.f32.mrb[0].mxu0
      %v3650 = vpop.f32.mrb[0].mxu0
      %v3651 = vadd.f32 0.0, %v3650
      %v3652 = vpop.f32.mrb[0].mxu0
      %3653 = vmatprep.mubr.bf16.mxu0 0
      %3654 = vmatmul.mubr.bf16.gmra.mrb[0].mxu0 %v3554
      %v3655 = vpop.f32.mrb[0].mxu0
      %v3656 = vadd.f32 0.0, %v3655
      %v3657 = vpop.f32.mrb[0].mxu0
      %v3658 = vpop.f32.mrb[0].mxu0
      %v3659 = vadd.f32 0.0, %v3658
      %v3660 = vpop.f32.mrb[0].mxu0
      %3661 = vmatprep.mubr.bf16.mxu0 0
      %3662 = vmatmul.mubr.bf16.gmra.mrb[0].mxu0 %v3557
      %v3663 = vpop.f32.mrb[0].mxu0
      %v3664 = vadd.f32 0.0, %v3663
      %v3665 = vpop.f32.mrb[0].mxu0
      %v3666 = vpop.f32.mrb[0].mxu0
      %v3667 = vadd.f32 0.0, %v3666
      %v3668 = vpop.f32.mrb[0].mxu0
      %3669 = vmatprep.mubr.bf16.mxu0 0
      %3670 = vmatmul.mubr.bf16.gmra.mrb[0].mxu0 %v3560
      %v3671 = vpop.f32.mrb[0].mxu0
      %v3672 = vadd.f32 0.0, %v3671
      %v3673 = vpop.f32.mrb[0].mxu0
      %v3674 = vpop.f32.mrb[0].mxu0
      %v3675 = vadd.f32 0.0, %v3674
      %v3676 = vpop.f32.mrb[0].mxu0
      %3677 = vmatprep.mubr.bf16.mxu0 0
      %3678 = vmatmul.mubr.bf16.gmra.mrb[0].mxu0 %v3563
      %v3679 = vpop.f32.mrb[0].mxu0
      %v3680 = vadd.f32 0.0, %v3679
      %v3681 = vpop.f32.mrb[0].mxu0
      %v3682 = vpop.f32.mrb[0].mxu0
      %v3683 = vadd.f32 0.0, %v3682
      %v3684 = vpop.f32.mrb[0].mxu0
      %3685 = vmatprep.mubr.bf16.mxu0 0
      %3686 = vmatmul.mubr.bf16.gmra.mrb[0].mxu0 %v3566
      %v3687 = vpop.f32.mrb[0].mxu0
      %v3688 = vadd.f32 0.0, %v3687
      %v3689 = vpop.f32.mrb[0].mxu0
      %v3690 = vpop.f32.mrb[0].mxu0
      %v3691 = vadd.f32 0.0, %v3690
      %v3692 = vpop.f32.mrb[0].mxu0
      %3693 = vmatprep.mubr.bf16.mxu0 0
      %3694 = vmatmul.mubr.bf16.gmra.mrb[0].mxu0 %v3569
      %v3695 = vpop.f32.mrb[0].mxu0
      %v3696 = vadd.f32 0.0, %v3695
      %v3697 = vpop.f32.mrb[0].mxu0
      %v3698 = vpop.f32.mrb[0].mxu0
      %v3699 = vadd.f32 0.0, %v3698
      %v3700 = vpop.f32.mrb[0].mxu0
      %3701 = vmatprep.mubr.bf16.mxu0 0
      %3702 = vmatmul.mubr.bf16.gmra.mrb[0].mxu0 %v3572
      %v3703 = vpop.f32.mrb[0].mxu0
      %v3704 = vadd.f32 0.0, %v3703
      %v3705 = vpop.f32.mrb[0].mxu0
      %v3706 = vpop.f32.mrb[0].mxu0
      %v3707 = vadd.f32 0.0, %v3706
      %v3708 = vpop.f32.mrb[0].mxu0
      %3709 = vmatprep.mubr.bf16.mxu0 0
      %3710 = vmatmul.mubr.bf16.gmra.mrb[0].mxu0 %v3575
      %v3711 = vpop.f32.mrb[0].mxu0
      %v3712 = vadd.f32 0.0, %v3711
      %v3713 = vpop.f32.mrb[0].mxu0
      %v3714 = vpop.f32.mrb[0].mxu0
      %v3715 = vadd.f32 0.0, %v3714
      %v3716 = vpop.f32.mrb[0].mxu0
      %3717 = vmatprep.mubr.bf16.mxu0 0
      %3718 = vmatmul.mubr.bf16.gmra.mrb[0].mxu0 %v3578
      %v3719 = vpop.f32.mrb[0].mxu0
      %v3720 = vadd.f32 0.0, %v3719
      %v3721 = vpop.f32.mrb[0].mxu0
      %v3722 = vpop.f32.mrb[0].mxu0
      %v3723 = vadd.f32 0.0, %v3722
      %v3724 = vpop.f32.mrb[0].mxu0
      %3725 = vmatprep.mubr.bf16.mxu0 0
      %3726 = vmatmul.mubr.bf16.gmra.mrb[0].mxu0 %v3581
      %v3727 = vpop.f32.mrb[0].mxu0
      %v3728 = vadd.f32 0.0, %v3727
      %v3729 = vpop.f32.mrb[0].mxu0
      %v3730 = vpop.f32.mrb[0].mxu0
      %v3731 = vadd.f32 0.0, %v3730
      %v3732 = vpop.f32.mrb[0].mxu0
      %3733 = vmatprep.mubr.bf16.mxu0 0
      %3734 = vmatmul.mubr.bf16.gmra.mrb[0].mxu0 %v3584
      %v3735 = vpop.f32.mrb[0].mxu0
      %v3736 = vadd.f32 0.0, %v3735
      %v3737 = vpop.f32.mrb[0].mxu0
      %v3738 = vpop.f32.mrb[0].mxu0
      %v3739 = vadd.f32 0.0, %v3738
      %v3740 = vpop.f32.mrb[0].mxu0
      %3741 = vmatprep.mubr.bf16.mxu0 0
      %3742 = vmatmul.mubr.bf16.gmra.mrb[0].mxu0 %v3587
      %v3743 = vpop.f32.mrb[0].mxu0
      %v3744 = vadd.f32 0.0, %v3743
      %v3745 = vpop.f32.mrb[0].mxu0
      %v3746 = vpop.f32.mrb[0].mxu0
      %v3747 = vadd.f32 0.0, %v3746
      %v3748 = vpop.f32.mrb[0].mxu0
      %3749 = vdwg.mxu0
      %v3750 = vadd.f32 %v3360, %v3624
      %v3751 = vadd.f32 %v3361, %v3627
      %v3752 = vadd.f32 %v3362, %v3632
      %v3753 = vadd.f32 %v3363, %v3635
      %v3754 = vadd.f32 %v3364, %v3640
      %v3755 = vadd.f32 %v3365, %v3643
      %v3756 = vadd.f32 %v3366, %v3648
      %v3757 = vadd.f32 %v3367, %v3651
      %v3758 = vadd.f32 %v3368, %v3656
      %v3759 = vadd.f32 %v3369, %v3659
      %v3760 = vadd.f32 %v3370, %v3664
      %v3761 = vadd.f32 %v3371, %v3667
      %v3762 = vadd.f32 %v3372, %v3672
      %v3763 = vadd.f32 %v3373, %v3675
      %v3764 = vadd.f32 %v3374, %v3680
      %v3765 = vadd.f32 %v3375, %v3683
      %v3766 = vadd.f32 %v3376, %v3688
      %v3767 = vadd.f32 %v3377, %v3691
      %v3768 = vadd.f32 %v3378, %v3696
      %v3769 = vadd.f32 %v3379, %v3699
      %v3770 = vadd.f32 %v3380, %v3704
      %v3771 = vadd.f32 %v3381, %v3707
      %v3772 = vadd.f32 %v3382, %v3712
      %v3773 = vadd.f32 %v3383, %v3715
      %v3774 = vadd.f32 %v3384, %v3720
      %v3775 = vadd.f32 %v3385, %v3723
      %v3776 = vadd.f32 %v3386, %v3728
      %v3777 = vadd.f32 %v3387, %v3731
      %v3778 = vadd.f32 %v3388, %v3736
      %v3779 = vadd.f32 %v3389, %v3739
      %v3780 = vadd.f32 %v3390, %v3744
      %v3781 = vadd.f32 %v3391, %v3747
      %v3782 = vld [vmem:[%s3395] sm:$0xf]
      %v3783 = vld [vmem:[%s3395 + $0x4] sm:$0xf]
      %v3784 = vld [vmem:[%s3395 + $0x8] sm:$0x1]
      %v3785 = vld [vmem:[%s3395 + $0xc] sm:$0xf]
      %v3786 = vld [vmem:[%s3395 + $0x10] sm:$0xf]
      %v3787 = vld [vmem:[%s3395 + $0x14] sm:$0x1]
      %v3788 = vld [vmem:[%s3395 + $0x18] sm:$0xf]
      %v3789 = vld [vmem:[%s3395 + $0x1c] sm:$0xf]
      %v3790 = vld [vmem:[%s3395 + $0x20] sm:$0x1]
      %v3791 = vld [vmem:[%s3395 + $0x24] sm:$0xf]
      %v3792 = vld [vmem:[%s3395 + $0x28] sm:$0xf]
      %v3793 = vld [vmem:[%s3395 + $0x2c] sm:$0x1]
      %v3794 = vld [vmem:[%s3395 + $0x30] sm:$0xf]
      %v3795 = vld [vmem:[%s3395 + $0x34] sm:$0xf]
      %v3796 = vld [vmem:[%s3395 + $0x38] sm:$0x1]
      %v3797 = vld [vmem:[%s3395 + $0x3c] sm:$0xf]
      %v3798 = vld [vmem:[%s3395 + $0x40] sm:$0xf]
      %v3799 = vld [vmem:[%s3395 + $0x44] sm:$0x1]
      %v3800 = vld [vmem:[%s3395 + $0x48] sm:$0xf]
      %v3801 = vld [vmem:[%s3395 + $0x4c] sm:$0xf]
      %v3802 = vld [vmem:[%s3395 + $0x50] sm:$0x1]
      %v3803 = vld [vmem:[%s3395 + $0x54] sm:$0xf]
      %v3804 = vld [vmem:[%s3395 + $0x58] sm:$0xf]
      %v3805 = vld [vmem:[%s3395 + $0x5c] sm:$0x1]
      %v3806 = vld [vmem:[%s3395 + $0x60] sm:$0xf]
      %v3807 = vld [vmem:[%s3395 + $0x64] sm:$0xf]
      %v3808 = vld [vmem:[%s3395 + $0x68] sm:$0x1]
      %v3809 = vld [vmem:[%s3395 + $0x6c] sm:$0xf]
      %v3810 = vld [vmem:[%s3395 + $0x70] sm:$0xf]
      %v3811 = vld [vmem:[%s3395 + $0x74] sm:$0x1]
      %v3812 = vld [vmem:[%s3395 + $0x78] sm:$0xf]
      %v3813 = vld [vmem:[%s3395 + $0x7c] sm:$0xf]
      %v3814 = vld [vmem:[%s3395 + $0x80] sm:$0x1]
      %v3815 = vld [vmem:[%s3395 + $0x84] sm:$0xf]
      %v3816 = vld [vmem:[%s3395 + $0x88] sm:$0xf]
      %v3817 = vld [vmem:[%s3395 + $0x8c] sm:$0x1]
      %v3818 = vld [vmem:[%s3395 + $0x90] sm:$0xf]
      %v3819 = vld [vmem:[%s3395 + $0x94] sm:$0xf]
      %v3820 = vld [vmem:[%s3395 + $0x98] sm:$0x1]
      %v3821 = vld [vmem:[%s3395 + $0x9c] sm:$0xf]
      %v3822 = vld [vmem:[%s3395 + $0xa0] sm:$0xf]
      %v3823 = vld [vmem:[%s3395 + $0xa4] sm:$0x1]
      %v3824 = vld [vmem:[%s3395 + $0xa8] sm:$0xf]
      %v3825 = vld [vmem:[%s3395 + $0xac] sm:$0xf]
      %v3826 = vld [vmem:[%s3395 + $0xb0] sm:$0x1]
      %v3827 = vld [vmem:[%s3395 + $0xb4] sm:$0xf]
      %v3828 = vld [vmem:[%s3395 + $0xb8] sm:$0xf]
      %v3829 = vld [vmem:[%s3395 + $0xbc] sm:$0x1]
      %v3831 = vshrl.u32 %v3782, 16
      %v3833 = vrot.slane %v3831, 4
      %v3834 = vshll.u32 %v3782, 16
      %v3836 = vrot.slane %v3834, 5
      %v3837 = vor.u32 %v3833, %v3836
      %v3838 = vrot.slane %v3837, 4
      %v3840 = vshll.u32 %v3783, 16
      %v3842 = vrot.slane %v3840, 5
      %v3843 = vsel %vm276, %v3838, %v3842
      %v3844 = vshrl.u32 %v3783, 16
      %v3846 = vrot.slane %v3844, 4
      %v3847 = vor.u32 %v3846, %v3842
      %v3848 = vrot.slane %v3847, 4
      %v3850 = vshll.u32 %v3784, 16
      %v3852 = vrot.slane %v3850, 5
      %v3853 = vsel %vm276, %v3848, %v3852
      %v3855 = vshrl.u32 %v3785, 16
      %v3857 = vrot.slane %v3855, 4
      %v3858 = vshll.u32 %v3785, 16
      %v3860 = vrot.slane %v3858, 5
      %v3861 = vor.u32 %v3857, %v3860
      %v3862 = vrot.slane %v3861, 4
      %v3864 = vshll.u32 %v3786, 16
      %v3866 = vrot.slane %v3864, 5
      %v3867 = vsel %vm276, %v3862, %v3866
      %v3868 = vshrl.u32 %v3786, 16
      %v3870 = vrot.slane %v3868, 4
      %v3871 = vor.u32 %v3870, %v3866
      %v3872 = vrot.slane %v3871, 4
      %v3874 = vshll.u32 %v3787, 16
      %v3876 = vrot.slane %v3874, 5
      %v3877 = vsel %vm276, %v3872, %v3876
      %v3879 = vshrl.u32 %v3788, 16
      %v3881 = vrot.slane %v3879, 4
      %v3882 = vshll.u32 %v3788, 16
      %v3884 = vrot.slane %v3882, 5
      %v3885 = vor.u32 %v3881, %v3884
      %v3886 = vrot.slane %v3885, 4
      %v3888 = vshll.u32 %v3789, 16
      %v3890 = vrot.slane %v3888, 5
      %v3891 = vsel %vm276, %v3886, %v3890
      %v3892 = vshrl.u32 %v3789, 16
      %v3894 = vrot.slane %v3892, 4
      %v3895 = vor.u32 %v3894, %v3890
      %v3896 = vrot.slane %v3895, 4
      %v3898 = vshll.u32 %v3790, 16
      %v3900 = vrot.slane %v3898, 5
      %v3901 = vsel %vm276, %v3896, %v3900
      %v3903 = vshrl.u32 %v3791, 16
      %v3905 = vrot.slane %v3903, 4
      %v3906 = vshll.u32 %v3791, 16
      %v3908 = vrot.slane %v3906, 5
      %v3909 = vor.u32 %v3905, %v3908
      %v3910 = vrot.slane %v3909, 4
      %v3912 = vshll.u32 %v3792, 16
      %v3914 = vrot.slane %v3912, 5
      %v3915 = vsel %vm276, %v3910, %v3914
      %v3916 = vshrl.u32 %v3792, 16
      %v3918 = vrot.slane %v3916, 4
      %v3919 = vor.u32 %v3918, %v3914
      %v3920 = vrot.slane %v3919, 4
      %v3922 = vshll.u32 %v3793, 16
      %v3924 = vrot.slane %v3922, 5
      %v3925 = vsel %vm276, %v3920, %v3924
      %v3927 = vshrl.u32 %v3794, 16
      %v3929 = vrot.slane %v3927, 4
      %v3930 = vshll.u32 %v3794, 16
      %v3932 = vrot.slane %v3930, 5
      %v3933 = vor.u32 %v3929, %v3932
      %v3934 = vrot.slane %v3933, 4
      %v3936 = vshll.u32 %v3795, 16
      %v3938 = vrot.slane %v3936, 5
      %v3939 = vsel %vm276, %v3934, %v3938
      %v3940 = vshrl.u32 %v3795, 16
      %v3942 = vrot.slane %v3940, 4
      %v3943 = vor.u32 %v3942, %v3938
      %v3944 = vrot.slane %v3943, 4
      %v3946 = vshll.u32 %v3796, 16
      %v3948 = vrot.slane %v3946, 5
      %v3949 = vsel %vm276, %v3944, %v3948
      %v3951 = vshrl.u32 %v3797, 16
      %v3953 = vrot.slane %v3951, 4
      %v3954 = vshll.u32 %v3797, 16
      %v3956 = vrot.slane %v3954, 5
      %v3957 = vor.u32 %v3953, %v3956
      %v3958 = vrot.slane %v3957, 4
      %v3960 = vshll.u32 %v3798, 16
      %v3962 = vrot.slane %v3960, 5
      %v3963 = vsel %vm276, %v3958, %v3962
      %v3964 = vshrl.u32 %v3798, 16
      %v3966 = vrot.slane %v3964, 4
      %v3967 = vor.u32 %v3966, %v3962
      %v3968 = vrot.slane %v3967, 4
      %v3970 = vshll.u32 %v3799, 16
      %v3972 = vrot.slane %v3970, 5
      %v3973 = vsel %vm276, %v3968, %v3972
      %v3975 = vshrl.u32 %v3800, 16
      %v3977 = vrot.slane %v3975, 4
      %v3978 = vshll.u32 %v3800, 16
      %v3980 = vrot.slane %v3978, 5
      %v3981 = vor.u32 %v3977, %v3980
      %v3982 = vrot.slane %v3981, 4
      %v3984 = vshll.u32 %v3801, 16
      %v3986 = vrot.slane %v3984, 5
      %v3987 = vsel %vm276, %v3982, %v3986
      %v3988 = vshrl.u32 %v3801, 16
      %v3990 = vrot.slane %v3988, 4
      %v3991 = vor.u32 %v3990, %v3986
      %v3992 = vrot.slane %v3991, 4
      %v3994 = vshll.u32 %v3802, 16
      %v3996 = vrot.slane %v3994, 5
      %v3997 = vsel %vm276, %v3992, %v3996
      %v3999 = vshrl.u32 %v3803, 16
      %v4001 = vrot.slane %v3999, 4
      %v4002 = vshll.u32 %v3803, 16
      %v4004 = vrot.slane %v4002, 5
      %v4005 = vor.u32 %v4001, %v4004
      %v4006 = vrot.slane %v4005, 4
      %v4008 = vshll.u32 %v3804, 16
      %v4010 = vrot.slane %v4008, 5
      %v4011 = vsel %vm276, %v4006, %v4010
      %v4012 = vshrl.u32 %v3804, 16
      %v4014 = vrot.slane %v4012, 4
      %v4015 = vor.u32 %v4014, %v4010
      %v4016 = vrot.slane %v4015, 4
      %v4018 = vshll.u32 %v3805, 16
      %v4020 = vrot.slane %v4018, 5
      %v4021 = vsel %vm276, %v4016, %v4020
      %v4023 = vshrl.u32 %v3806, 16
      %v4025 = vrot.slane %v4023, 4
      %v4026 = vshll.u32 %v3806, 16
      %v4028 = vrot.slane %v4026, 5
      %v4029 = vor.u32 %v4025, %v4028
      %v4030 = vrot.slane %v4029, 4
      %v4032 = vshll.u32 %v3807, 16
      %v4034 = vrot.slane %v4032, 5
      %v4035 = vsel %vm276, %v4030, %v4034
      %v4036 = vshrl.u32 %v3807, 16
      %v4038 = vrot.slane %v4036, 4
      %v4039 = vor.u32 %v4038, %v4034
      %v4040 = vrot.slane %v4039, 4
      %v4042 = vshll.u32 %v3808, 16
      %v4044 = vrot.slane %v4042, 5
      %v4045 = vsel %vm276, %v4040, %v4044
      %v4047 = vshrl.u32 %v3809, 16
      %v4049 = vrot.slane %v4047, 4
      %v4050 = vshll.u32 %v3809, 16
      %v4052 = vrot.slane %v4050, 5
      %v4053 = vor.u32 %v4049, %v4052
      %v4054 = vrot.slane %v4053, 4
      %v4056 = vshll.u32 %v3810, 16
      %v4058 = vrot.slane %v4056, 5
      %v4059 = vsel %vm276, %v4054, %v4058
      %v4060 = vshrl.u32 %v3810, 16
      %v4062 = vrot.slane %v4060, 4
      %v4063 = vor.u32 %v4062, %v4058
      %v4064 = vrot.slane %v4063, 4
      %v4066 = vshll.u32 %v3811, 16
      %v4068 = vrot.slane %v4066, 5
      %v4069 = vsel %vm276, %v4064, %v4068
      %v4071 = vshrl.u32 %v3812, 16
      %v4073 = vrot.slane %v4071, 4
      %v4074 = vshll.u32 %v3812, 16
      %v4076 = vrot.slane %v4074, 5
      %v4077 = vor.u32 %v4073, %v4076
      %v4078 = vrot.slane %v4077, 4
      %v4080 = vshll.u32 %v3813, 16
      %v4082 = vrot.slane %v4080, 5
      %v4083 = vsel %vm276, %v4078, %v4082
      %v4084 = vshrl.u32 %v3813, 16
      %v4086 = vrot.slane %v4084, 4
      %v4087 = vor.u32 %v4086, %v4082
      %v4088 = vrot.slane %v4087, 4
      %v4090 = vshll.u32 %v3814, 16
      %v4092 = vrot.slane %v4090, 5
      %v4093 = vsel %vm276, %v4088, %v4092
      %v4095 = vshrl.u32 %v3815, 16
      %v4097 = vrot.slane %v4095, 4
      %v4098 = vshll.u32 %v3815, 16
      %v4100 = vrot.slane %v4098, 5
      %v4101 = vor.u32 %v4097, %v4100
      %v4102 = vrot.slane %v4101, 4
      %v4104 = vshll.u32 %v3816, 16
      %v4106 = vrot.slane %v4104, 5
      %v4107 = vsel %vm276, %v4102, %v4106
      %v4108 = vshrl.u32 %v3816, 16
      %v4110 = vrot.slane %v4108, 4
      %v4111 = vor.u32 %v4110, %v4106
      %v4112 = vrot.slane %v4111, 4
      %v4114 = vshll.u32 %v3817, 16
      %v4116 = vrot.slane %v4114, 5
      %v4117 = vsel %vm276, %v4112, %v4116
      %v4119 = vshrl.u32 %v3818, 16
      %v4121 = vrot.slane %v4119, 4
      %v4122 = vshll.u32 %v3818, 16
      %v4124 = vrot.slane %v4122, 5
      %v4125 = vor.u32 %v4121, %v4124
      %v4126 = vrot.slane %v4125, 4
      %v4128 = vshll.u32 %v3819, 16
      %v4130 = vrot.slane %v4128, 5
      %v4131 = vsel %vm276, %v4126, %v4130
      %v4132 = vshrl.u32 %v3819, 16
      %v4134 = vrot.slane %v4132, 4
      %v4135 = vor.u32 %v4134, %v4130
      %v4136 = vrot.slane %v4135, 4
      %v4138 = vshll.u32 %v3820, 16
      %v4140 = vrot.slane %v4138, 5
      %v4141 = vsel %vm276, %v4136, %v4140
      %v4143 = vshrl.u32 %v3821, 16
      %v4145 = vrot.slane %v4143, 4
      %v4146 = vshll.u32 %v3821, 16
      %v4148 = vrot.slane %v4146, 5
      %v4149 = vor.u32 %v4145, %v4148
      %v4150 = vrot.slane %v4149, 4
      %v4152 = vshll.u32 %v3822, 16
      %v4154 = vrot.slane %v4152, 5
      %v4155 = vsel %vm276, %v4150, %v4154
      %v4156 = vshrl.u32 %v3822, 16
      %v4158 = vrot.slane %v4156, 4
      %v4159 = vor.u32 %v4158, %v4154
      %v4160 = vrot.slane %v4159, 4
      %v4162 = vshll.u32 %v3823, 16
      %v4164 = vrot.slane %v4162, 5
      %v4165 = vsel %vm276, %v4160, %v4164
      %v4167 = vshrl.u32 %v3824, 16
      %v4169 = vrot.slane %v4167, 4
      %v4170 = vshll.u32 %v3824, 16
      %v4172 = vrot.slane %v4170, 5
      %v4173 = vor.u32 %v4169, %v4172
      %v4174 = vrot.slane %v4173, 4
      %v4176 = vshll.u32 %v3825, 16
      %v4178 = vrot.slane %v4176, 5
      %v4179 = vsel %vm276, %v4174, %v4178
      %v4180 = vshrl.u32 %v3825, 16
      %v4182 = vrot.slane %v4180, 4
      %v4183 = vor.u32 %v4182, %v4178
      %v4184 = vrot.slane %v4183, 4
      %v4186 = vshll.u32 %v3826, 16
      %v4188 = vrot.slane %v4186, 5
      %v4189 = vsel %vm276, %v4184, %v4188
      %v4191 = vshrl.u32 %v3827, 16
      %v4193 = vrot.slane %v4191, 4
      %v4194 = vshll.u32 %v3827, 16
      %v4196 = vrot.slane %v4194, 5
      %v4197 = vor.u32 %v4193, %v4196
      %v4198 = vrot.slane %v4197, 4
      %v4200 = vshll.u32 %v3828, 16
      %v4202 = vrot.slane %v4200, 5
      %v4203 = vsel %vm276, %v4198, %v4202
      %v4204 = vshrl.u32 %v3828, 16
      %v4206 = vrot.slane %v4204, 4
      %v4207 = vor.u32 %v4206, %v4202
      %v4208 = vrot.slane %v4207, 4
      %v4210 = vshll.u32 %v3829, 16
      %v4212 = vrot.slane %v4210, 5
      %v4213 = vsel %vm276, %v4208, %v4212
      %s4214 = scalar_lea.vmem %s1, 224
      %v4215 = vld [vmem:[%s4214] sm:$0xf]
      %v4216 = vld [vmem:[%s4214 + $0x4] sm:$0xf]
      %v4217 = vld [vmem:[%s4214 + $0x8] sm:$0xf]
      %v4218 = vld [vmem:[%s4214 + $0xc] sm:$0xf]
      %v4219 = vld [vmem:[%s4214 + $0x10] sm:$0xf]
      %v4220 = vld [vmem:[%s4214 + $0x14] sm:$0xf]
      %v4221 = vld [vmem:[%s4214 + $0x18] sm:$0xf]
      %v4222 = vld [vmem:[%s4214 + $0x1c] sm:$0xf]
      %v4223 = vunpack.c.l.b16 %v3843
      %v4224 = vunpack.c.l.b16 %v3853
      %v4225 = vunpack.c.l.b16 %v3867
      %v4226 = vunpack.c.l.b16 %v3877
      %v4227 = vunpack.c.l.b16 %v3891
      %v4228 = vunpack.c.l.b16 %v3901
      %v4229 = vunpack.c.l.b16 %v3915
      %v4230 = vunpack.c.l.b16 %v3925
      %v4231 = vunpack.c.l.b16 %v3939
      %v4232 = vunpack.c.l.b16 %v3949
      %v4233 = vunpack.c.l.b16 %v3963
      %v4234 = vunpack.c.l.b16 %v3973
      %v4235 = vunpack.c.l.b16 %v3987
      %v4236 = vunpack.c.l.b16 %v3997
      %v4237 = vunpack.c.l.b16 %v4011
      %v4238 = vunpack.c.l.b16 %v4021
      %v4239 = vunpack.c.l.b16 %v4035
      %v4240 = vunpack.c.l.b16 %v4045
      %v4241 = vunpack.c.l.b16 %v4059
      %v4242 = vunpack.c.l.b16 %v4069
      %v4243 = vunpack.c.l.b16 %v4083
      %v4244 = vunpack.c.l.b16 %v4093
      %v4245 = vunpack.c.l.b16 %v4107
      %v4246 = vunpack.c.l.b16 %v4117
      %v4247 = vunpack.c.l.b16 %v4131
      %v4248 = vunpack.c.l.b16 %v4141
      %v4249 = vunpack.c.l.b16 %v4155
      %v4250 = vunpack.c.l.b16 %v4165
      %v4251 = vunpack.c.l.b16 %v4179
      %v4252 = vunpack.c.l.b16 %v4189
      %v4253 = vunpack.c.l.b16 %v4203
      %v4254 = vunpack.c.l.b16 %v4213
      %v4255 = vpack.c.b16 %v4224, %v4223
      %v4256 = vpack.c.b16 %v4226, %v4225
      %v4257 = vpack.c.b16 %v4228, %v4227
      %v4258 = vpack.c.b16 %v4230, %v4229
      %v4259 = vpack.c.b16 %v4232, %v4231
      %v4260 = vpack.c.b16 %v4234, %v4233
      %v4261 = vpack.c.b16 %v4236, %v4235
      %v4262 = vpack.c.b16 %v4238, %v4237
      %v4263 = vpack.c.b16 %v4240, %v4239
      %v4264 = vpack.c.b16 %v4242, %v4241
      %v4265 = vpack.c.b16 %v4244, %v4243
      %v4266 = vpack.c.b16 %v4246, %v4245
      %v4267 = vpack.c.b16 %v4248, %v4247
      %v4268 = vpack.c.b16 %v4250, %v4249
      %v4269 = vpack.c.b16 %v4252, %v4251
      %v4270 = vpack.c.b16 %v4254, %v4253
      %v4279 = vunpack.c.l.b16 %v4215
      %v4280 = vunpack.c.l.b16 %v4216
      %v4281 = vunpack.c.l.b16 %v4217
      %v4282 = vunpack.c.l.b16 %v4218
      %v4283 = vunpack.c.l.b16 %v4219
      %v4284 = vunpack.c.l.b16 %v4220
      %v4285 = vunpack.c.l.b16 %v4221
      %v4286 = vunpack.c.l.b16 %v4222
      %v4287 = vpack.c.b16 %v4280, %v4279
      %v4288 = vpack.c.b16 %v4282, %v4281
      %v4289 = vpack.c.b16 %v4284, %v4283
      %v4290 = vpack.c.b16 %v4286, %v4285
      %v4296 = vsel %vm742, %v4255, 0
      %v4299 = vsel %vm742, %v4256, 0
      %v4302 = vsel %vm742, %v4257, 0
      %v4305 = vsel %vm742, %v4258, 0
      %v4308 = vsel %vm742, %v4259, 0
      %v4311 = vsel %vm742, %v4260, 0
      %v4314 = vsel %vm742, %v4261, 0
      %v4317 = vsel %vm742, %v4262, 0
      %v4320 = vsel %vm742, %v4263, 0
      %v4323 = vsel %vm742, %v4264, 0
      %v4326 = vsel %vm742, %v4265, 0
      %v4329 = vsel %vm742, %v4266, 0
      %v4332 = vsel %vm742, %v4267, 0
      %v4335 = vsel %vm742, %v4268, 0
      %v4338 = vsel %vm742, %v4269, 0
      %v4341 = vsel %vm742, %v4270, 0
      %4343 = vmatprep.subr.bf16.mxu0 0
      %4344 = vmatpush1.bf16.msra.mxu0 %v4287
      %4345 = vmatprep.subr.bf16.mxu0 0
      %4346 = vmatpush1.bf16.msra.mxu0 %v4288
      %4347 = vmatprep.subr.bf16.mxu0 0
      %4348 = vmatpush1.bf16.msra.mxu0 %v4289
      %4349 = vmatprep.subr.bf16.mxu0 0
      %4350 = vmatpush1.bf16.msra.mxu0 %v4290
      %4351 = vmatprep.subr.bf16.mxu0 0
      %4352 = vmatpush1.bf16.msra.mxu0 0
      %4353 = vmatprep.subr.bf16.mxu0 0
      %4354 = vmatpush1.bf16.msra.mxu0 0
      %4355 = vmatprep.subr.bf16.mxu0 0
      %4356 = vmatpush1.bf16.msra.mxu0 0
      %4357 = vmatprep.subr.bf16.mxu0 0
      %4358 = vmatpush1.bf16.msra.mxu0 0
      %4359 = vmatprep.subr.bf16.mxu0 0
      %4360 = vmatpush1.bf16.msra.mxu0 0
      %4361 = vmatprep.subr.bf16.mxu0 0
      %4362 = vmatpush1.bf16.msra.mxu0 0
      %4363 = vmatprep.subr.bf16.mxu0 0
      %4364 = vmatpush1.bf16.msra.mxu0 0
      %4365 = vmatprep.subr.bf16.mxu0 0
      %4366 = vmatpush1.bf16.msra.mxu0 0
      %4367 = vmatprep.subr.bf16.mxu0 0
      %4368 = vmatpush1.bf16.msra.mxu0 0
      %4369 = vmatprep.subr.bf16.mxu0 0
      %4370 = vmatpush1.bf16.msra.mxu0 0
      %4371 = vmatprep.subr.bf16.mxu0 0
      %4372 = vmatpush1.bf16.msra.mxu0 0
      %4373 = vmatprep.subr.bf16.mxu0 0
      %4374 = vmatpush1.bf16.msra.mxu0 0
      %4375 = vmatprep.mubr.bf16.mxu0 0
      %4376 = vmatmul.mubr.bf16.gmra.mrb[0].mxu0 %v4296
      %v4377 = vpop.f32.mrb[0].mxu0
      %v4378 = vadd.f32 0.0, %v4377
      %v4379 = vpop.f32.mrb[0].mxu0
      %v4380 = vpop.f32.mrb[0].mxu0
      %v4381 = vadd.f32 0.0, %v4380
      %v4382 = vpop.f32.mrb[0].mxu0
      %4383 = vmatprep.mubr.bf16.mxu0 0
      %4384 = vmatmul.mubr.bf16.gmra.mrb[0].mxu0 %v4299
      %v4385 = vpop.f32.mrb[0].mxu0
      %v4386 = vadd.f32 0.0, %v4385
      %v4387 = vpop.f32.mrb[0].mxu0
      %v4388 = vpop.f32.mrb[0].mxu0
      %v4389 = vadd.f32 0.0, %v4388
      %v4390 = vpop.f32.mrb[0].mxu0
      %4391 = vmatprep.mubr.bf16.mxu0 0
      %4392 = vmatmul.mubr.bf16.gmra.mrb[0].mxu0 %v4302
      %v4393 = vpop.f32.mrb[0].mxu0
      %v4394 = vadd.f32 0.0, %v4393
      %v4395 = vpop.f32.mrb[0].mxu0
      %v4396 = vpop.f32.mrb[0].mxu0
      %v4397 = vadd.f32 0.0, %v4396
      %v4398 = vpop.f32.mrb[0].mxu0
      %4399 = vmatprep.mubr.bf16.mxu0 0
      %4400 = vmatmul.mubr.bf16.gmra.mrb[0].mxu0 %v4305
      %v4401 = vpop.f32.mrb[0].mxu0
      %v4402 = vadd.f32 0.0, %v4401
      %v4403 = vpop.f32.mrb[0].mxu0
      %v4404 = vpop.f32.mrb[0].mxu0
      %v4405 = vadd.f32 0.0, %v4404
      %v4406 = vpop.f32.mrb[0].mxu0
      %4407 = vmatprep.mubr.bf16.mxu0 0
      %4408 = vmatmul.mubr.bf16.gmra.mrb[0].mxu0 %v4308
      %v4409 = vpop.f32.mrb[0].mxu0
      %v4410 = vadd.f32 0.0, %v4409
      %v4411 = vpop.f32.mrb[0].mxu0
      %v4412 = vpop.f32.mrb[0].mxu0
      %v4413 = vadd.f32 0.0, %v4412
      %v4414 = vpop.f32.mrb[0].mxu0
      %4415 = vmatprep.mubr.bf16.mxu0 0
      %4416 = vmatmul.mubr.bf16.gmra.mrb[0].mxu0 %v4311
      %v4417 = vpop.f32.mrb[0].mxu0
      %v4418 = vadd.f32 0.0, %v4417
      %v4419 = vpop.f32.mrb[0].mxu0
      %v4420 = vpop.f32.mrb[0].mxu0
      %v4421 = vadd.f32 0.0, %v4420
      %v4422 = vpop.f32.mrb[0].mxu0
      %4423 = vmatprep.mubr.bf16.mxu0 0
      %4424 = vmatmul.mubr.bf16.gmra.mrb[0].mxu0 %v4314
      %v4425 = vpop.f32.mrb[0].mxu0
      %v4426 = vadd.f32 0.0, %v4425
      %v4427 = vpop.f32.mrb[0].mxu0
      %v4428 = vpop.f32.mrb[0].mxu0
      %v4429 = vadd.f32 0.0, %v4428
      %v4430 = vpop.f32.mrb[0].mxu0
      %4431 = vmatprep.mubr.bf16.mxu0 0
      %4432 = vmatmul.mubr.bf16.gmra.mrb[0].mxu0 %v4317
      %v4433 = vpop.f32.mrb[0].mxu0
      %v4434 = vadd.f32 0.0, %v4433
      %v4435 = vpop.f32.mrb[0].mxu0
      %v4436 = vpop.f32.mrb[0].mxu0
      %v4437 = vadd.f32 0.0, %v4436
      %v4438 = vpop.f32.mrb[0].mxu0
      %4439 = vmatprep.mubr.bf16.mxu0 0
      %4440 = vmatmul.mubr.bf16.gmra.mrb[0].mxu0 %v4320
      %v4441 = vpop.f32.mrb[0].mxu0
      %v4442 = vadd.f32 0.0, %v4441
      %v4443 = vpop.f32.mrb[0].mxu0
      %v4444 = vpop.f32.mrb[0].mxu0
      %v4445 = vadd.f32 0.0, %v4444
      %v4446 = vpop.f32.mrb[0].mxu0
      %4447 = vmatprep.mubr.bf16.mxu0 0
      %4448 = vmatmul.mubr.bf16.gmra.mrb[0].mxu0 %v4323
      %v4449 = vpop.f32.mrb[0].mxu0
      %v4450 = vadd.f32 0.0, %v4449
      %v4451 = vpop.f32.mrb[0].mxu0
      %v4452 = vpop.f32.mrb[0].mxu0
      %v4453 = vadd.f32 0.0, %v4452
      %v4454 = vpop.f32.mrb[0].mxu0
      %4455 = vmatprep.mubr.bf16.mxu0 0
      %4456 = vmatmul.mubr.bf16.gmra.mrb[0].mxu0 %v4326
      %v4457 = vpop.f32.mrb[0].mxu0
      %v4458 = vadd.f32 0.0, %v4457
      %v4459 = vpop.f32.mrb[0].mxu0
      %v4460 = vpop.f32.mrb[0].mxu0
      %v4461 = vadd.f32 0.0, %v4460
      %v4462 = vpop.f32.mrb[0].mxu0
      %4463 = vmatprep.mubr.bf16.mxu0 0
      %4464 = vmatmul.mubr.bf16.gmra.mrb[0].mxu0 %v4329
      %v4465 = vpop.f32.mrb[0].mxu0
      %v4466 = vadd.f32 0.0, %v4465
      %v4467 = vpop.f32.mrb[0].mxu0
      %v4468 = vpop.f32.mrb[0].mxu0
      %v4469 = vadd.f32 0.0, %v4468
      %v4470 = vpop.f32.mrb[0].mxu0
      %4471 = vmatprep.mubr.bf16.mxu0 0
      %4472 = vmatmul.mubr.bf16.gmra.mrb[0].mxu0 %v4332
      %v4473 = vpop.f32.mrb[0].mxu0
      %v4474 = vadd.f32 0.0, %v4473
      %v4475 = vpop.f32.mrb[0].mxu0
      %v4476 = vpop.f32.mrb[0].mxu0
      %v4477 = vadd.f32 0.0, %v4476
      %v4478 = vpop.f32.mrb[0].mxu0
      %4479 = vmatprep.mubr.bf16.mxu0 0
      %4480 = vmatmul.mubr.bf16.gmra.mrb[0].mxu0 %v4335
      %v4481 = vpop.f32.mrb[0].mxu0
      %v4482 = vadd.f32 0.0, %v4481
      %v4483 = vpop.f32.mrb[0].mxu0
      %v4484 = vpop.f32.mrb[0].mxu0
      %v4485 = vadd.f32 0.0, %v4484
      %v4486 = vpop.f32.mrb[0].mxu0
      %4487 = vmatprep.mubr.bf16.mxu0 0
      %4488 = vmatmul.mubr.bf16.gmra.mrb[0].mxu0 %v4338
      %v4489 = vpop.f32.mrb[0].mxu0
      %v4490 = vadd.f32 0.0, %v4489
      %v4491 = vpop.f32.mrb[0].mxu0
      %v4492 = vpop.f32.mrb[0].mxu0
      %v4493 = vadd.f32 0.0, %v4492
      %v4494 = vpop.f32.mrb[0].mxu0
      %4495 = vmatprep.mubr.bf16.mxu0 0
      %4496 = vmatmul.mubr.bf16.gmra.mrb[0].mxu0 %v4341
      %v4497 = vpop.f32.mrb[0].mxu0
      %v4498 = vadd.f32 0.0, %v4497
      %v4499 = vpop.f32.mrb[0].mxu0
      %v4500 = vpop.f32.mrb[0].mxu0
      %v4501 = vadd.f32 0.0, %v4500
      %v4502 = vpop.f32.mrb[0].mxu0
      %4503 = vdwg.mxu0
      %v4504 = vadd.f32 %v3750, %v4378
      %v4505 = vadd.f32 %v3751, %v4381
      %v4506 = vadd.f32 %v3752, %v4386
      %v4507 = vadd.f32 %v3753, %v4389
      %v4508 = vadd.f32 %v3754, %v4394
      %v4509 = vadd.f32 %v3755, %v4397
      %v4510 = vadd.f32 %v3756, %v4402
      %v4511 = vadd.f32 %v3757, %v4405
      %v4512 = vadd.f32 %v3758, %v4410
      %v4513 = vadd.f32 %v3759, %v4413
      %v4514 = vadd.f32 %v3760, %v4418
      %v4515 = vadd.f32 %v3761, %v4421
      %v4516 = vadd.f32 %v3762, %v4426
      %v4517 = vadd.f32 %v3763, %v4429
      %v4518 = vadd.f32 %v3764, %v4434
      %v4519 = vadd.f32 %v3765, %v4437
      %v4520 = vadd.f32 %v3766, %v4442
      %v4521 = vadd.f32 %v3767, %v4445
      %v4522 = vadd.f32 %v3768, %v4450
      %v4523 = vadd.f32 %v3769, %v4453
      %v4524 = vadd.f32 %v3770, %v4458
      %v4525 = vadd.f32 %v3771, %v4461
      %v4526 = vadd.f32 %v3772, %v4466
      %v4527 = vadd.f32 %v3773, %v4469
      %v4528 = vadd.f32 %v3774, %v4474
      %v4529 = vadd.f32 %v3775, %v4477
      %v4530 = vadd.f32 %v3776, %v4482
      %v4531 = vadd.f32 %v3777, %v4485
      %v4532 = vadd.f32 %v3778, %v4490
      %v4533 = vadd.f32 %v3779, %v4493
      %v4534 = vadd.f32 %v3780, %v4498
      %v4535 = vadd.f32 %v3781, %v4501
      %v4536 = vld [vmem:[%s3395] sm:$0xe]
      %v4537 = vld [vmem:[%s3395 + $0xc] sm:$0xe]
      %v4538 = vld [vmem:[%s3395 + $0x18] sm:$0xe]
      %v4539 = vld [vmem:[%s3395 + $0x24] sm:$0xe]
      %v4540 = vld [vmem:[%s3395 + $0x30] sm:$0xe]
      %v4541 = vld [vmem:[%s3395 + $0x3c] sm:$0xe]
      %v4542 = vld [vmem:[%s3395 + $0x48] sm:$0xe]
      %v4543 = vld [vmem:[%s3395 + $0x54] sm:$0xe]
      %v4544 = vld [vmem:[%s3395 + $0x60] sm:$0xe]
      %v4545 = vld [vmem:[%s3395 + $0x6c] sm:$0xe]
      %v4546 = vld [vmem:[%s3395 + $0x78] sm:$0xe]
      %v4547 = vld [vmem:[%s3395 + $0x84] sm:$0xe]
      %v4548 = vld [vmem:[%s3395 + $0x90] sm:$0xe]
      %v4549 = vld [vmem:[%s3395 + $0x9c] sm:$0xe]
      %v4550 = vld [vmem:[%s3395 + $0xa8] sm:$0xe]
      %v4551 = vld [vmem:[%s3395 + $0xb4] sm:$0xe]
      %v4600 = vrot.slane %v4536, 5
      %v4601 = vrot.slane %v4600, 4
      %v4602 = vrot.slane %v3783, 5
      %v4603 = vsel %vm1315, %v4601, %v4602
      %v4604 = vrot.slane %v4602, 4
      %v4605 = vrot.slane %v3784, 5
      %v4606 = vsel %vm1315, %v4604, %v4605
      %v4607 = vrot.slane %v4537, 5
      %v4608 = vrot.slane %v4607, 4
      %v4609 = vrot.slane %v3786, 5
      %v4610 = vsel %vm1315, %v4608, %v4609
      %v4611 = vrot.slane %v4609, 4
      %v4612 = vrot.slane %v3787, 5
      %v4613 = vsel %vm1315, %v4611, %v4612
      %v4614 = vrot.slane %v4538, 5
      %v4615 = vrot.slane %v4614, 4
      %v4616 = vrot.slane %v3789, 5
      %v4617 = vsel %vm1315, %v4615, %v4616
      %v4618 = vrot.slane %v4616, 4
      %v4619 = vrot.slane %v3790, 5
      %v4620 = vsel %vm1315, %v4618, %v4619
      %v4621 = vrot.slane %v4539, 5
      %v4622 = vrot.slane %v4621, 4
      %v4623 = vrot.slane %v3792, 5
      %v4624 = vsel %vm1315, %v4622, %v4623
      %v4625 = vrot.slane %v4623, 4
      %v4626 = vrot.slane %v3793, 5
      %v4627 = vsel %vm1315, %v4625, %v4626
      %v4628 = vrot.slane %v4540, 5
      %v4629 = vrot.slane %v4628, 4
      %v4630 = vrot.slane %v3795, 5
      %v4631 = vsel %vm1315, %v4629, %v4630
      %v4632 = vrot.slane %v4630, 4
      %v4633 = vrot.slane %v3796, 5
      %v4634 = vsel %vm1315, %v4632, %v4633
      %v4635 = vrot.slane %v4541, 5
      %v4636 = vrot.slane %v4635, 4
      %v4637 = vrot.slane %v3798, 5
      %v4638 = vsel %vm1315, %v4636, %v4637
      %v4639 = vrot.slane %v4637, 4
      %v4640 = vrot.slane %v3799, 5
      %v4641 = vsel %vm1315, %v4639, %v4640
      %v4642 = vrot.slane %v4542, 5
      %v4643 = vrot.slane %v4642, 4
      %v4644 = vrot.slane %v3801, 5
      %v4645 = vsel %vm1315, %v4643, %v4644
      %v4646 = vrot.slane %v4644, 4
      %v4647 = vrot.slane %v3802, 5
      %v4648 = vsel %vm1315, %v4646, %v4647
      %v4649 = vrot.slane %v4543, 5
      %v4650 = vrot.slane %v4649, 4
      %v4651 = vrot.slane %v3804, 5
      %v4652 = vsel %vm1315, %v4650, %v4651
      %v4653 = vrot.slane %v4651, 4
      %v4654 = vrot.slane %v3805, 5
      %v4655 = vsel %vm1315, %v4653, %v4654
      %v4656 = vrot.slane %v4544, 5
      %v4657 = vrot.slane %v4656, 4
      %v4658 = vrot.slane %v3807, 5
      %v4659 = vsel %vm1315, %v4657, %v4658
      %v4660 = vrot.slane %v4658, 4
      %v4661 = vrot.slane %v3808, 5
      %v4662 = vsel %vm1315, %v4660, %v4661
      %v4663 = vrot.slane %v4545, 5
      %v4664 = vrot.slane %v4663, 4
      %v4665 = vrot.slane %v3810, 5
      %v4666 = vsel %vm1315, %v4664, %v4665
      %v4667 = vrot.slane %v4665, 4
      %v4668 = vrot.slane %v3811, 5
      %v4669 = vsel %vm1315, %v4667, %v4668
      %v4670 = vrot.slane %v4546, 5
      %v4671 = vrot.slane %v4670, 4
      %v4672 = vrot.slane %v3813, 5
      %v4673 = vsel %vm1315, %v4671, %v4672
      %v4674 = vrot.slane %v4672, 4
      %v4675 = vrot.slane %v3814, 5
      %v4676 = vsel %vm1315, %v4674, %v4675
      %v4677 = vrot.slane %v4547, 5
      %v4678 = vrot.slane %v4677, 4
      %v4679 = vrot.slane %v3816, 5
      %v4680 = vsel %vm1315, %v4678, %v4679
      %v4681 = vrot.slane %v4679, 4
      %v4682 = vrot.slane %v3817, 5
      %v4683 = vsel %vm1315, %v4681, %v4682
      %v4684 = vrot.slane %v4548, 5
      %v4685 = vrot.slane %v4684, 4
      %v4686 = vrot.slane %v3819, 5
      %v4687 = vsel %vm1315, %v4685, %v4686
      %v4688 = vrot.slane %v4686, 4
      %v4689 = vrot.slane %v3820, 5
      %v4690 = vsel %vm1315, %v4688, %v4689
      %v4691 = vrot.slane %v4549, 5
      %v4692 = vrot.slane %v4691, 4
      %v4693 = vrot.slane %v3822, 5
      %v4694 = vsel %vm1315, %v4692, %v4693
      %v4695 = vrot.slane %v4693, 4
      %v4696 = vrot.slane %v3823, 5
      %v4697 = vsel %vm1315, %v4695, %v4696
      %v4698 = vrot.slane %v4550, 5
      %v4699 = vrot.slane %v4698, 4
      %v4700 = vrot.slane %v3825, 5
      %v4701 = vsel %vm1315, %v4699, %v4700
      %v4702 = vrot.slane %v4700, 4
      %v4703 = vrot.slane %v3826, 5
      %v4704 = vsel %vm1315, %v4702, %v4703
      %v4705 = vrot.slane %v4551, 5
      %v4706 = vrot.slane %v4705, 4
      %v4707 = vrot.slane %v3828, 5
      %v4708 = vsel %vm1315, %v4706, %v4707
      %v4709 = vrot.slane %v4707, 4
      %v4710 = vrot.slane %v3829, 5
      %v4711 = vsel %vm1315, %v4709, %v4710
      %s4712 = scalar_lea.vmem %s1, 256
      %v4713 = vld [vmem:[%s4712] sm:$0xf]
      %v4714 = vld [vmem:[%s4712 + $0x4] sm:$0xf]
      %v4715 = vld [vmem:[%s4712 + $0x8] sm:$0xf]
      %v4716 = vld [vmem:[%s4712 + $0xc] sm:$0xf]
      %v4717 = vld [vmem:[%s4712 + $0x10] sm:$0xf]
      %v4718 = vld [vmem:[%s4712 + $0x14] sm:$0xf]
      %v4719 = vld [vmem:[%s4712 + $0x18] sm:$0xf]
      %v4720 = vld [vmem:[%s4712 + $0x1c] sm:$0xf]
      %v4721 = vunpack.c.l.b16 %v4603
      %v4722 = vunpack.c.l.b16 %v4606
      %v4723 = vunpack.c.l.b16 %v4610
      %v4724 = vunpack.c.l.b16 %v4613
      %v4725 = vunpack.c.l.b16 %v4617
      %v4726 = vunpack.c.l.b16 %v4620
      %v4727 = vunpack.c.l.b16 %v4624
      %v4728 = vunpack.c.l.b16 %v4627
      %v4729 = vunpack.c.l.b16 %v4631
      %v4730 = vunpack.c.l.b16 %v4634
      %v4731 = vunpack.c.l.b16 %v4638
      %v4732 = vunpack.c.l.b16 %v4641
      %v4733 = vunpack.c.l.b16 %v4645
      %v4734 = vunpack.c.l.b16 %v4648
      %v4735 = vunpack.c.l.b16 %v4652
      %v4736 = vunpack.c.l.b16 %v4655
      %v4737 = vunpack.c.l.b16 %v4659
      %v4738 = vunpack.c.l.b16 %v4662
      %v4739 = vunpack.c.l.b16 %v4666
      %v4740 = vunpack.c.l.b16 %v4669
      %v4741 = vunpack.c.l.b16 %v4673
      %v4742 = vunpack.c.l.b16 %v4676
      %v4743 = vunpack.c.l.b16 %v4680
      %v4744 = vunpack.c.l.b16 %v4683
      %v4745 = vunpack.c.l.b16 %v4687
      %v4746 = vunpack.c.l.b16 %v4690
      %v4747 = vunpack.c.l.b16 %v4694
      %v4748 = vunpack.c.l.b16 %v4697
      %v4749 = vunpack.c.l.b16 %v4701
      %v4750 = vunpack.c.l.b16 %v4704
      %v4751 = vunpack.c.l.b16 %v4708
      %v4752 = vunpack.c.l.b16 %v4711
      %v4753 = vpack.c.b16 %v4722, %v4721
      %v4754 = vpack.c.b16 %v4724, %v4723
      %v4755 = vpack.c.b16 %v4726, %v4725
      %v4756 = vpack.c.b16 %v4728, %v4727
      %v4757 = vpack.c.b16 %v4730, %v4729
      %v4758 = vpack.c.b16 %v4732, %v4731
      %v4759 = vpack.c.b16 %v4734, %v4733
      %v4760 = vpack.c.b16 %v4736, %v4735
      %v4761 = vpack.c.b16 %v4738, %v4737
      %v4762 = vpack.c.b16 %v4740, %v4739
      %v4763 = vpack.c.b16 %v4742, %v4741
      %v4764 = vpack.c.b16 %v4744, %v4743
      %v4765 = vpack.c.b16 %v4746, %v4745
      %v4766 = vpack.c.b16 %v4748, %v4747
      %v4767 = vpack.c.b16 %v4750, %v4749
      %v4768 = vpack.c.b16 %v4752, %v4751
      %v4777 = vunpack.c.l.b16 %v4713
      %v4778 = vunpack.c.l.b16 %v4714
      %v4779 = vunpack.c.l.b16 %v4715
      %v4780 = vunpack.c.l.b16 %v4716
      %v4781 = vunpack.c.l.b16 %v4717
      %v4782 = vunpack.c.l.b16 %v4718
      %v4783 = vunpack.c.l.b16 %v4719
      %v4784 = vunpack.c.l.b16 %v4720
      %v4785 = vpack.c.b16 %v4778, %v4777
      %v4786 = vpack.c.b16 %v4780, %v4779
      %v4787 = vpack.c.b16 %v4782, %v4781
      %v4788 = vpack.c.b16 %v4784, %v4783
      %v4794 = vsel %vm742, %v4753, 0
      %v4797 = vsel %vm742, %v4754, 0
      %v4800 = vsel %vm742, %v4755, 0
      %v4803 = vsel %vm742, %v4756, 0
      %v4806 = vsel %vm742, %v4757, 0
      %v4809 = vsel %vm742, %v4758, 0
      %v4812 = vsel %vm742, %v4759, 0
      %v4815 = vsel %vm742, %v4760, 0
      %v4818 = vsel %vm742, %v4761, 0
      %v4821 = vsel %vm742, %v4762, 0
      %v4824 = vsel %vm742, %v4763, 0
      %v4827 = vsel %vm742, %v4764, 0
      %v4830 = vsel %vm742, %v4765, 0
      %v4833 = vsel %vm742, %v4766, 0
      %v4836 = vsel %vm742, %v4767, 0
      %v4839 = vsel %vm742, %v4768, 0
      %4841 = vmatprep.subr.bf16.mxu0 0
      %4842 = vmatpush1.bf16.msra.mxu0 %v4785
      %4843 = vmatprep.subr.bf16.mxu0 0
      %4844 = vmatpush1.bf16.msra.mxu0 %v4786
      %4845 = vmatprep.subr.bf16.mxu0 0
      %4846 = vmatpush1.bf16.msra.mxu0 %v4787
      %4847 = vmatprep.subr.bf16.mxu0 0
      %4848 = vmatpush1.bf16.msra.mxu0 %v4788
      %4849 = vmatprep.subr.bf16.mxu0 0
      %4850 = vmatpush1.bf16.msra.mxu0 0
      %4851 = vmatprep.subr.bf16.mxu0 0
      %4852 = vmatpush1.bf16.msra.mxu0 0
      %4853 = vmatprep.subr.bf16.mxu0 0
      %4854 = vmatpush1.bf16.msra.mxu0 0
      %4855 = vmatprep.subr.bf16.mxu0 0
      %4856 = vmatpush1.bf16.msra.mxu0 0
      %4857 = vmatprep.subr.bf16.mxu0 0
      %4858 = vmatpush1.bf16.msra.mxu0 0
      %4859 = vmatprep.subr.bf16.mxu0 0
      %4860 = vmatpush1.bf16.msra.mxu0 0
      %4861 = vmatprep.subr.bf16.mxu0 0
      %4862 = vmatpush1.bf16.msra.mxu0 0
      %4863 = vmatprep.subr.bf16.mxu0 0
      %4864 = vmatpush1.bf16.msra.mxu0 0
      %4865 = vmatprep.subr.bf16.mxu0 0
      %4866 = vmatpush1.bf16.msra.mxu0 0
      %4867 = vmatprep.subr.bf16.mxu0 0
      %4868 = vmatpush1.bf16.msra.mxu0 0
      %4869 = vmatprep.subr.bf16.mxu0 0
      %4870 = vmatpush1.bf16.msra.mxu0 0
      %4871 = vmatprep.subr.bf16.mxu0 0
      %4872 = vmatpush1.bf16.msra.mxu0 0
      %4873 = vmatprep.mubr.bf16.mxu0 0
      %4874 = vmatmul.mubr.bf16.gmra.mrb[0].mxu0 %v4794
      %v4875 = vpop.f32.mrb[0].mxu0
      %v4876 = vadd.f32 0.0, %v4875
      %v4877 = vpop.f32.mrb[0].mxu0
      %v4878 = vpop.f32.mrb[0].mxu0
      %v4879 = vadd.f32 0.0, %v4878
      %v4880 = vpop.f32.mrb[0].mxu0
      %4881 = vmatprep.mubr.bf16.mxu0 0
      %4882 = vmatmul.mubr.bf16.gmra.mrb[0].mxu0 %v4797
      %v4883 = vpop.f32.mrb[0].mxu0
      %v4884 = vadd.f32 0.0, %v4883
      %v4885 = vpop.f32.mrb[0].mxu0
      %v4886 = vpop.f32.mrb[0].mxu0
      %v4887 = vadd.f32 0.0, %v4886
      %v4888 = vpop.f32.mrb[0].mxu0
      %4889 = vmatprep.mubr.bf16.mxu0 0
      %4890 = vmatmul.mubr.bf16.gmra.mrb[0].mxu0 %v4800
      %v4891 = vpop.f32.mrb[0].mxu0
      %v4892 = vadd.f32 0.0, %v4891
      %v4893 = vpop.f32.mrb[0].mxu0
      %v4894 = vpop.f32.mrb[0].mxu0
      %v4895 = vadd.f32 0.0, %v4894
      %v4896 = vpop.f32.mrb[0].mxu0
      %4897 = vmatprep.mubr.bf16.mxu0 0
      %4898 = vmatmul.mubr.bf16.gmra.mrb[0].mxu0 %v4803
      %v4899 = vpop.f32.mrb[0].mxu0
      %v4900 = vadd.f32 0.0, %v4899
      %v4901 = vpop.f32.mrb[0].mxu0
      %v4902 = vpop.f32.mrb[0].mxu0
      %v4903 = vadd.f32 0.0, %v4902
      %v4904 = vpop.f32.mrb[0].mxu0
      %4905 = vmatprep.mubr.bf16.mxu0 0
      %4906 = vmatmul.mubr.bf16.gmra.mrb[0].mxu0 %v4806
      %v4907 = vpop.f32.mrb[0].mxu0
      %v4908 = vadd.f32 0.0, %v4907
      %v4909 = vpop.f32.mrb[0].mxu0
      %v4910 = vpop.f32.mrb[0].mxu0
      %v4911 = vadd.f32 0.0, %v4910
      %v4912 = vpop.f32.mrb[0].mxu0
      %4913 = vmatprep.mubr.bf16.mxu0 0
      %4914 = vmatmul.mubr.bf16.gmra.mrb[0].mxu0 %v4809
      %v4915 = vpop.f32.mrb[0].mxu0
      %v4916 = vadd.f32 0.0, %v4915
      %v4917 = vpop.f32.mrb[0].mxu0
      %v4918 = vpop.f32.mrb[0].mxu0
      %v4919 = vadd.f32 0.0, %v4918
      %v4920 = vpop.f32.mrb[0].mxu0
      %4921 = vmatprep.mubr.bf16.mxu0 0
      %4922 = vmatmul.mubr.bf16.gmra.mrb[0].mxu0 %v4812
      %v4923 = vpop.f32.mrb[0].mxu0
      %v4924 = vadd.f32 0.0, %v4923
      %v4925 = vpop.f32.mrb[0].mxu0
      %v4926 = vpop.f32.mrb[0].mxu0
      %v4927 = vadd.f32 0.0, %v4926
      %v4928 = vpop.f32.mrb[0].mxu0
      %4929 = vmatprep.mubr.bf16.mxu0 0
      %4930 = vmatmul.mubr.bf16.gmra.mrb[0].mxu0 %v4815
      %v4931 = vpop.f32.mrb[0].mxu0
      %v4932 = vadd.f32 0.0, %v4931
      %v4933 = vpop.f32.mrb[0].mxu0
      %v4934 = vpop.f32.mrb[0].mxu0
      %v4935 = vadd.f32 0.0, %v4934
      %v4936 = vpop.f32.mrb[0].mxu0
      %4937 = vmatprep.mubr.bf16.mxu0 0
      %4938 = vmatmul.mubr.bf16.gmra.mrb[0].mxu0 %v4818
      %v4939 = vpop.f32.mrb[0].mxu0
      %v4940 = vadd.f32 0.0, %v4939
      %v4941 = vpop.f32.mrb[0].mxu0
      %v4942 = vpop.f32.mrb[0].mxu0
      %v4943 = vadd.f32 0.0, %v4942
      %v4944 = vpop.f32.mrb[0].mxu0
      %4945 = vmatprep.mubr.bf16.mxu0 0
      %4946 = vmatmul.mubr.bf16.gmra.mrb[0].mxu0 %v4821
      %v4947 = vpop.f32.mrb[0].mxu0
      %v4948 = vadd.f32 0.0, %v4947
      %v4949 = vpop.f32.mrb[0].mxu0
      %v4950 = vpop.f32.mrb[0].mxu0
      %v4951 = vadd.f32 0.0, %v4950
      %v4952 = vpop.f32.mrb[0].mxu0
      %4953 = vmatprep.mubr.bf16.mxu0 0
      %4954 = vmatmul.mubr.bf16.gmra.mrb[0].mxu0 %v4824
      %v4955 = vpop.f32.mrb[0].mxu0
      %v4956 = vadd.f32 0.0, %v4955
      %v4957 = vpop.f32.mrb[0].mxu0
      %v4958 = vpop.f32.mrb[0].mxu0
      %v4959 = vadd.f32 0.0, %v4958
      %v4960 = vpop.f32.mrb[0].mxu0
      %4961 = vmatprep.mubr.bf16.mxu0 0
      %4962 = vmatmul.mubr.bf16.gmra.mrb[0].mxu0 %v4827
      %v4963 = vpop.f32.mrb[0].mxu0
      %v4964 = vadd.f32 0.0, %v4963
      %v4965 = vpop.f32.mrb[0].mxu0
      %v4966 = vpop.f32.mrb[0].mxu0
      %v4967 = vadd.f32 0.0, %v4966
      %v4968 = vpop.f32.mrb[0].mxu0
      %4969 = vmatprep.mubr.bf16.mxu0 0
      %4970 = vmatmul.mubr.bf16.gmra.mrb[0].mxu0 %v4830
      %v4971 = vpop.f32.mrb[0].mxu0
      %v4972 = vadd.f32 0.0, %v4971
      %v4973 = vpop.f32.mrb[0].mxu0
      %v4974 = vpop.f32.mrb[0].mxu0
      %v4975 = vadd.f32 0.0, %v4974
      %v4976 = vpop.f32.mrb[0].mxu0
      %4977 = vmatprep.mubr.bf16.mxu0 0
      %4978 = vmatmul.mubr.bf16.gmra.mrb[0].mxu0 %v4833
      %v4979 = vpop.f32.mrb[0].mxu0
      %v4980 = vadd.f32 0.0, %v4979
      %v4981 = vpop.f32.mrb[0].mxu0
      %v4982 = vpop.f32.mrb[0].mxu0
      %v4983 = vadd.f32 0.0, %v4982
      %v4984 = vpop.f32.mrb[0].mxu0
      %4985 = vmatprep.mubr.bf16.mxu0 0
      %4986 = vmatmul.mubr.bf16.gmra.mrb[0].mxu0 %v4836
      %v4987 = vpop.f32.mrb[0].mxu0
      %v4988 = vadd.f32 0.0, %v4987
      %v4989 = vpop.f32.mrb[0].mxu0
      %v4990 = vpop.f32.mrb[0].mxu0
      %v4991 = vadd.f32 0.0, %v4990
      %v4992 = vpop.f32.mrb[0].mxu0
      %4993 = vmatprep.mubr.bf16.mxu0 0
      %4994 = vmatmul.mubr.bf16.gmra.mrb[0].mxu0 %v4839
      %v4995 = vpop.f32.mrb[0].mxu0
      %v4996 = vadd.f32 0.0, %v4995
      %v4997 = vpop.f32.mrb[0].mxu0
      %v4998 = vpop.f32.mrb[0].mxu0
      %v4999 = vadd.f32 0.0, %v4998
      %v5000 = vpop.f32.mrb[0].mxu0
      %5001 = vdwg.mxu0
      %v5002 = vadd.f32 %v4504, %v4876
      %v5003 = vadd.f32 %v4505, %v4879
      %v5004 = vadd.f32 %v4506, %v4884
      %v5005 = vadd.f32 %v4507, %v4887
      %v5006 = vadd.f32 %v4508, %v4892
      %v5007 = vadd.f32 %v4509, %v4895
      %v5008 = vadd.f32 %v4510, %v4900
      %v5009 = vadd.f32 %v4511, %v4903
      %v5010 = vadd.f32 %v4512, %v4908
      %v5011 = vadd.f32 %v4513, %v4911
      %v5012 = vadd.f32 %v4514, %v4916
      %v5013 = vadd.f32 %v4515, %v4919
      %v5014 = vadd.f32 %v4516, %v4924
      %v5015 = vadd.f32 %v4517, %v4927
      %v5016 = vadd.f32 %v4518, %v4932
      %v5017 = vadd.f32 %v4519, %v4935
      %v5018 = vadd.f32 %v4520, %v4940
      %v5019 = vadd.f32 %v4521, %v4943
      %v5020 = vadd.f32 %v4522, %v4948
      %v5021 = vadd.f32 %v4523, %v4951
      %v5022 = vadd.f32 %v4524, %v4956
      %v5023 = vadd.f32 %v4525, %v4959
      %v5024 = vadd.f32 %v4526, %v4964
      %v5025 = vadd.f32 %v4527, %v4967
      %v5026 = vadd.f32 %v4528, %v4972
      %v5027 = vadd.f32 %v4529, %v4975
      %v5028 = vadd.f32 %v4530, %v4980
      %v5029 = vadd.f32 %v4531, %v4983
      %v5030 = vadd.f32 %v4532, %v4988
      %v5031 = vadd.f32 %v4533, %v4991
      %v5032 = vadd.f32 %v4534, %v4996
      %v5033 = vadd.f32 %v4535, %v4999
      %v5034 = vsel %vm742, %v5002, 0.0
      %v5035 = vsel %vm742, %v5003, 0.0
      %v5036 = vadd.f32 %v5034, %v5035
      %v5037 = vsel %vm742, %v5004, 0.0
      %v5038 = vadd.f32 %v5036, %v5037
      %v5039 = vsel %vm742, %v5005, 0.0
      %v5040 = vadd.f32 %v5038, %v5039
      %v5041 = vsel %vm742, %v5006, 0.0
      %v5042 = vadd.f32 %v5040, %v5041
      %v5043 = vsel %vm742, %v5007, 0.0
      %v5044 = vadd.f32 %v5042, %v5043
      %v5045 = vsel %vm742, %v5008, 0.0
      %v5046 = vadd.f32 %v5044, %v5045
      %v5047 = vsel %vm742, %v5009, 0.0
      %v5048 = vadd.f32 %v5046, %v5047
      %v5049 = vsel %vm742, %v5010, 0.0
      %v5050 = vadd.f32 %v5048, %v5049
      %v5051 = vsel %vm742, %v5011, 0.0
      %v5052 = vadd.f32 %v5050, %v5051
      %v5053 = vsel %vm742, %v5012, 0.0
      %v5054 = vadd.f32 %v5052, %v5053
      %v5055 = vsel %vm742, %v5013, 0.0
      %v5056 = vadd.f32 %v5054, %v5055
      %v5057 = vsel %vm742, %v5014, 0.0
      %v5058 = vadd.f32 %v5056, %v5057
      %v5059 = vsel %vm742, %v5015, 0.0
      %v5060 = vadd.f32 %v5058, %v5059
      %v5061 = vsel %vm742, %v5016, 0.0
      %v5062 = vadd.f32 %v5060, %v5061
      %v5063 = vsel %vm742, %v5017, 0.0
      %v5064 = vadd.f32 %v5062, %v5063
      %v5065 = vsel %vm742, %v5018, 0.0
      %v5066 = vadd.f32 %v5064, %v5065
      %v5067 = vsel %vm742, %v5019, 0.0
      %v5068 = vadd.f32 %v5066, %v5067
      %v5069 = vsel %vm742, %v5020, 0.0
      %v5070 = vadd.f32 %v5068, %v5069
      %v5071 = vsel %vm742, %v5021, 0.0
      %v5072 = vadd.f32 %v5070, %v5071
      %v5073 = vsel %vm742, %v5022, 0.0
      %v5074 = vadd.f32 %v5072, %v5073
      %v5075 = vsel %vm742, %v5023, 0.0
      %v5076 = vadd.f32 %v5074, %v5075
      %v5077 = vsel %vm742, %v5024, 0.0
      %v5078 = vadd.f32 %v5076, %v5077
      %v5079 = vsel %vm742, %v5025, 0.0
      %v5080 = vadd.f32 %v5078, %v5079
      %v5081 = vsel %vm742, %v5026, 0.0
      %v5082 = vadd.f32 %v5080, %v5081
      %v5083 = vsel %vm742, %v5027, 0.0
      %v5084 = vadd.f32 %v5082, %v5083
      %v5085 = vsel %vm742, %v5028, 0.0
      %v5086 = vadd.f32 %v5084, %v5085
      %v5087 = vsel %vm742, %v5029, 0.0
      %v5088 = vadd.f32 %v5086, %v5087
      %v5089 = vsel %vm742, %v5030, 0.0
      %v5090 = vadd.f32 %v5088, %v5089
      %v5091 = vsel %vm742, %v5031, 0.0
      %v5092 = vadd.f32 %v5090, %v5091
      %v5093 = vsel %vm742, %v5032, 0.0
      %v5094 = vadd.f32 %v5092, %v5093
      %v5095 = vsel %vm742, %v5033, 0.0
      %v5096 = vadd.f32 %v5094, %v5095
      %v5097 = vrot.slane %v5096, 4
      %v5098 = vadd.f32 %v5096, %v5097
      %v5099 = vrot.slane %v5098, 2
      %v5100 = vadd.f32 %v5098, %v5099
      %v5101 = vrot.slane %v5100, 1
      %v5102 = vadd.f32 %v5100, %v5101
      %v5103 = vmul.f32 %v5002, %v5002
      %v5104 = vmul.f32 %v5003, %v5003
      %v5105 = vmul.f32 %v5004, %v5004
      %v5106 = vmul.f32 %v5005, %v5005
      %v5107 = vmul.f32 %v5006, %v5006
      %v5108 = vmul.f32 %v5007, %v5007
      %v5109 = vmul.f32 %v5008, %v5008
      %v5110 = vmul.f32 %v5009, %v5009
      %v5111 = vmul.f32 %v5010, %v5010
      %v5112 = vmul.f32 %v5011, %v5011
      %v5113 = vmul.f32 %v5012, %v5012
      %v5114 = vmul.f32 %v5013, %v5013
      %v5115 = vmul.f32 %v5014, %v5014
      %v5116 = vmul.f32 %v5015, %v5015
      %v5117 = vmul.f32 %v5016, %v5016
      %v5118 = vmul.f32 %v5017, %v5017
      %v5119 = vmul.f32 %v5018, %v5018
      %v5120 = vmul.f32 %v5019, %v5019
      %v5121 = vmul.f32 %v5020, %v5020
      %v5122 = vmul.f32 %v5021, %v5021
      %v5123 = vmul.f32 %v5022, %v5022
      %v5124 = vmul.f32 %v5023, %v5023
      %v5125 = vmul.f32 %v5024, %v5024
      %v5126 = vmul.f32 %v5025, %v5025
      %v5127 = vmul.f32 %v5026, %v5026
      %v5128 = vmul.f32 %v5027, %v5027
      %v5129 = vmul.f32 %v5028, %v5028
      %v5130 = vmul.f32 %v5029, %v5029
      %v5131 = vmul.f32 %v5030, %v5030
      %v5132 = vmul.f32 %v5031, %v5031
      %v5133 = vmul.f32 %v5032, %v5032
      %v5134 = vmul.f32 %v5033, %v5033
      %v5135 = vsel %vm742, %v5103, 0.0
      %v5136 = vsel %vm742, %v5104, 0.0
      %v5137 = vadd.f32 %v5135, %v5136
      %v5138 = vsel %vm742, %v5105, 0.0
      %v5139 = vadd.f32 %v5137, %v5138
      %v5140 = vsel %vm742, %v5106, 0.0
      %v5141 = vadd.f32 %v5139, %v5140
      %v5142 = vsel %vm742, %v5107, 0.0
      %v5143 = vadd.f32 %v5141, %v5142
      %v5144 = vsel %vm742, %v5108, 0.0
      %v5145 = vadd.f32 %v5143, %v5144
      %v5146 = vsel %vm742, %v5109, 0.0
      %v5147 = vadd.f32 %v5145, %v5146
      %v5148 = vsel %vm742, %v5110, 0.0
      %v5149 = vadd.f32 %v5147, %v5148
      %v5150 = vsel %vm742, %v5111, 0.0
      %v5151 = vadd.f32 %v5149, %v5150
      %v5152 = vsel %vm742, %v5112, 0.0
      %v5153 = vadd.f32 %v5151, %v5152
      %v5154 = vsel %vm742, %v5113, 0.0
      %v5155 = vadd.f32 %v5153, %v5154
      %v5156 = vsel %vm742, %v5114, 0.0
      %v5157 = vadd.f32 %v5155, %v5156
      %v5158 = vsel %vm742, %v5115, 0.0
      %v5159 = vadd.f32 %v5157, %v5158
      %v5160 = vsel %vm742, %v5116, 0.0
      %v5161 = vadd.f32 %v5159, %v5160
      %v5162 = vsel %vm742, %v5117, 0.0
      %v5163 = vadd.f32 %v5161, %v5162
      %v5164 = vsel %vm742, %v5118, 0.0
      %v5165 = vadd.f32 %v5163, %v5164
      %v5166 = vsel %vm742, %v5119, 0.0
      %v5167 = vadd.f32 %v5165, %v5166
      %v5168 = vsel %vm742, %v5120, 0.0
      %v5169 = vadd.f32 %v5167, %v5168
      %v5170 = vsel %vm742, %v5121, 0.0
      %v5171 = vadd.f32 %v5169, %v5170
      %v5172 = vsel %vm742, %v5122, 0.0
      %v5173 = vadd.f32 %v5171, %v5172
      %v5174 = vsel %vm742, %v5123, 0.0
      %v5175 = vadd.f32 %v5173, %v5174
      %v5176 = vsel %vm742, %v5124, 0.0
      %v5177 = vadd.f32 %v5175, %v5176
      %v5178 = vsel %vm742, %v5125, 0.0
      %v5179 = vadd.f32 %v5177, %v5178
      %v5180 = vsel %vm742, %v5126, 0.0
      %v5181 = vadd.f32 %v5179, %v5180
      %v5182 = vsel %vm742, %v5127, 0.0
      %v5183 = vadd.f32 %v5181, %v5182
      %v5184 = vsel %vm742, %v5128, 0.0
      %v5185 = vadd.f32 %v5183, %v5184
      %v5186 = vsel %vm742, %v5129, 0.0
      %v5187 = vadd.f32 %v5185, %v5186
      %v5188 = vsel %vm742, %v5130, 0.0
      %v5189 = vadd.f32 %v5187, %v5188
      %v5190 = vsel %vm742, %v5131, 0.0
      %v5191 = vadd.f32 %v5189, %v5190
      %v5192 = vsel %vm742, %v5132, 0.0
      %v5193 = vadd.f32 %v5191, %v5192
      %v5194 = vsel %vm742, %v5133, 0.0
      %v5195 = vadd.f32 %v5193, %v5194
      %v5196 = vsel %vm742, %v5134, 0.0
      %v5197 = vadd.f32 %v5195, %v5196
      %v5198 = vrot.slane %v5197, 4
      %v5199 = vadd.f32 %v5197, %v5198
      %v5200 = vrot.slane %v5199, 2
      %v5201 = vadd.f32 %v5199, %v5200
      %v5202 = vrot.slane %v5201, 1
      %v5203 = vadd.f32 %v5201, %v5202
      %vm5204 = vcmask 1040384
      %v5205 = vsel %vm5204, %v5102, %v5203
      %vm5206 = vcmask 517120
      %5207 = vst.msk [vmem:[%s212] sm:$0x3] %vm5206, %v5205
      %5208 = vxpose.xlu0.b32.start [1/16] %v5002, 128
      %5209 = vxpose.xlu0.b32.cont [2/16] %v5003, 128
      %5210 = vxpose.xlu0.b32.cont [3/16] %v5004, 128
      %5211 = vxpose.xlu0.b32.cont [4/16] %v5005, 128
      %5212 = vxpose.xlu0.b32.cont [5/16] %v5006, 128
      %5213 = vxpose.xlu0.b32.cont [6/16] %v5007, 128
      %5214 = vxpose.xlu0.b32.cont [7/16] %v5008, 128
      %5215 = vxpose.xlu0.b32.cont [8/16] %v5009, 128
      %5216 = vxpose.xlu0.b32.cont [9/16] %v5010, 128
      %5217 = vxpose.xlu0.b32.cont [10/16] %v5011, 128
      %5218 = vxpose.xlu0.b32.cont [11/16] %v5012, 128
      %5219 = vxpose.xlu0.b32.cont [12/16] %v5013, 128
      %5220 = vxpose.xlu0.b32.cont [13/16] %v5014, 128
      %5221 = vxpose.xlu0.b32.cont [14/16] %v5015, 128
      %5222 = vxpose.xlu0.b32.cont [15/16] %v5016, 128
      %5223 = vxpose.xlu0.b32.end [16/16] %v5017, 128
      %v5224 = vpop.trf.xlu0
      %v5225 = vpop.trf.xlu0
      %v5226 = vpop.trf.xlu0
      %v5227 = vpop.trf.xlu0
      %v5228 = vpop.trf.xlu0
      %v5229 = vpop.trf.xlu0
      %v5230 = vpop.trf.xlu0
      %v5231 = vpop.trf.xlu0
      %v5232 = vpop.trf.xlu0
      %v5233 = vpop.trf.xlu0
      %v5234 = vpop.trf.xlu0
      %v5235 = vpop.trf.xlu0
      %v5236 = vpop.trf.xlu0
      %v5237 = vpop.trf.xlu0
      %v5238 = vpop.trf.xlu0
      %v5239 = vpop.trf.xlu0
      %5240 = vxpose.xlu0.b32.start [1/16] %v5018, 128
      %5241 = vxpose.xlu0.b32.cont [2/16] %v5019, 128
      %5242 = vxpose.xlu0.b32.cont [3/16] %v5020, 128
      %5243 = vxpose.xlu0.b32.cont [4/16] %v5021, 128
      %5244 = vxpose.xlu0.b32.cont [5/16] %v5022, 128
      %5245 = vxpose.xlu0.b32.cont [6/16] %v5023, 128
      %5246 = vxpose.xlu0.b32.cont [7/16] %v5024, 128
      %5247 = vxpose.xlu0.b32.cont [8/16] %v5025, 128
      %5248 = vxpose.xlu0.b32.cont [9/16] %v5026, 128
      %5249 = vxpose.xlu0.b32.cont [10/16] %v5027, 128
      %5250 = vxpose.xlu0.b32.cont [11/16] %v5028, 128
      %5251 = vxpose.xlu0.b32.cont [12/16] %v5029, 128
      %5252 = vxpose.xlu0.b32.cont [13/16] %v5030, 128
      %5253 = vxpose.xlu0.b32.cont [14/16] %v5031, 128
      %5254 = vxpose.xlu0.b32.cont [15/16] %v5032, 128
      %5255 = vxpose.xlu0.b32.end [16/16] %v5033, 128
      %v5256 = vpop.trf.xlu0
      %v5257 = vpop.trf.xlu0
      %v5258 = vpop.trf.xlu0
      %v5259 = vpop.trf.xlu0
      %v5260 = vpop.trf.xlu0
      %v5261 = vpop.trf.xlu0
      %v5262 = vpop.trf.xlu0
      %v5263 = vpop.trf.xlu0
      %v5264 = vpop.trf.xlu0
      %v5265 = vpop.trf.xlu0
      %v5266 = vpop.trf.xlu0
      %v5267 = vpop.trf.xlu0
      %v5268 = vpop.trf.xlu0
      %v5269 = vpop.trf.xlu0
      %v5270 = vpop.trf.xlu0
      %v5271 = vpop.trf.xlu0
      %v5272 = vpack.c.bf16 %v5225, %v5224
      %v5273 = vpack.c.bf16 %v5257, %v5256
      %v5274 = vpack.c.bf16 %v5227, %v5226
      %v5275 = vpack.c.bf16 %v5259, %v5258
      %v5276 = vpack.c.bf16 %v5229, %v5228
      %v5277 = vpack.c.bf16 %v5261, %v5260
      %v5278 = vpack.c.bf16 %v5231, %v5230
      %v5279 = vpack.c.bf16 %v5263, %v5262
      %v5288 = vunpack.c.l.b16 %v5272
      %v5289 = vunpack.c.l.b16 %v5273
      %v5290 = vunpack.c.h.b16 %v5272
      %v5291 = vunpack.c.h.b16 %v5273
      %v5292 = vunpack.c.l.b16 %v5274
      %v5293 = vunpack.c.l.b16 %v5275
      %v5294 = vunpack.c.h.b16 %v5274
      %v5295 = vunpack.c.h.b16 %v5275
      %v5296 = vunpack.c.l.b16 %v5276
      %v5297 = vunpack.c.l.b16 %v5277
      %v5298 = vunpack.c.h.b16 %v5276
      %v5299 = vunpack.c.h.b16 %v5277
      %v5300 = vunpack.c.l.b16 %v5278
      %v5301 = vunpack.c.l.b16 %v5279
      %v5302 = vunpack.c.h.b16 %v5278
      %v5303 = vunpack.c.h.b16 %v5279
      %v5304 = vpack.c.b16 %v5289, %v5288
      %v5305 = vpack.c.b16 %v5291, %v5290
      %v5306 = vpack.c.b16 %v5293, %v5292
      %v5307 = vpack.c.b16 %v5295, %v5294
      %v5308 = vpack.c.b16 %v5297, %v5296
      %v5309 = vpack.c.b16 %v5299, %v5298
      %v5310 = vpack.c.b16 %v5301, %v5300
      %v5311 = vpack.c.b16 %v5303, %v5302
      %5320 = vst [vmem:[%s204] sm:$0xff] %v5304
      %5321 = vst [vmem:[%s204 + $0x8] sm:$0xff] %v5305
      %5322 = vst [vmem:[%s204 + $0x10] sm:$0xff] %v5306
      %5323 = vst [vmem:[%s204 + $0x18] sm:$0xff] %v5307
      %5324 = vst [vmem:[%s204 + $0x20] sm:$0xff] %v5308
      %5325 = vst [vmem:[%s204 + $0x28] sm:$0xff] %v5309
      %5326 = vst [vmem:[%s204 + $0x30] sm:$0xff] %v5310
      %5327 = vst [vmem:[%s204 + $0x38] sm:$0xff] %v5311
      %s5328 = smul.u32 2, %s20
      %p5329 = scmp.lt.s32.totalorder %s19, 1
      %s5330 = scalar_select %p5329, %s19, 1
      %p5331 = scmp.lt.s32.totalorder %s5328, 1
      %s5332 = scalar_select %p5331, %s5328, 1
      %s5333 = smul.addr %s5330, 16
      %s5334 = sadd.s32 %s5332, %s5333
      %s5335 = smul.addr %s5334, 4
      %s5336 = scalar_lea.vmem %s2, %s5335
      %p5337 = scmp.lt.s32.totalorder %s19, 1
      %s5338 = scalar_select %p5337, %s19, 1
      %p5339 = scmp.lt.s32.totalorder %s20, 0
      %s5340 = scalar_select %p5339, %s20, 0
      %s5341 = sadd.s32 %s5340, %s5338
      %s5342 = smul.addr %s5341, 2
      %s5343 = scalar_lea.vmem %s3, %s5342
      // Predicated region
      $region29: #{post_residual_convolution.2} parent=27 // pred_check
        %p5344 = pneg %p94
      $region30: #{post_residual_convolution.2} parent=27 // pred_check_branch
        %5346 = sbr.rel (%p5344) target = $region32
      $region31: #{post_residual_convolution.2} parent=27 // pred_region
        %s5347 = smul.u32 2, %s20
      $region32: #{post_residual_convolution.2} parent=27 // pred_fallthru
        _
      // Predicated region
      $region33: #{post_residual_convolution.2} parent=27 // pred_check
        %p5348 = pneg %p122
      $region34: #{post_residual_convolution.2} parent=27 // pred_check_branch
        %5350 = sbr.rel (%p5348) target = $region36
      $region35: #{post_residual_convolution.2} parent=27 // pred_region
        _
      $region36: #{post_residual_convolution.2} parent=27 // pred_fallthru
        _
    $region28: #{post_residual_convolution.2} parent=5 // pred_fallthru
      _
    %p5351 = scmp.le.s32.totalorder 2, %s10
    // Predicated region
    $region37: #{post_residual_convolution.2} parent=5 // pred_check
      %p5352 = pneg %p5351
    $region38: #{post_residual_convolution.2} parent=5 // pred_check_branch
      %5354 = sbr.rel (%p5352) target = $region40
    $region39: #{post_residual_convolution.2} parent=5 // pred_region
      %s5355 = ssub.s32 %s10, 2
      // Predicated region
      $region41: #{post_residual_convolution.2} parent=39 // pred_check
        %p5356 = pneg %p100
      $region42: #{post_residual_convolution.2} parent=39 // pred_check_branch
        %5358 = sbr.rel (%p5356) target = $region44
      $region43: #{post_residual_convolution.2} parent=39 // pred_region
        %s5359 = smul.u32 2, %s22
        %p5360 = scmp.lt.s32.totalorder %s21, 1
        %s5361 = scalar_select %p5360, %s21, 1
        %p5362 = scmp.lt.s32.totalorder %s5359, 1
        %s5363 = scalar_select %p5362, %s5359, 1
        %s5364 = smul.addr %s5361, 16
        %s5365 = sadd.s32 %s5363, %s5364
        %s5366 = smul.addr %s5365, 4
        %s5367 = scalar_lea.vmem %s2, %s5366
      $region44: #{post_residual_convolution.2} parent=39 // pred_fallthru
        _
      // Predicated region
      $region45: #{post_residual_convolution.2} parent=39 // pred_check
        %p5368 = pneg %p128
      $region46: #{post_residual_convolution.2} parent=39 // pred_check_branch
        %5370 = sbr.rel (%p5368) target = $region48
      $region47: #{post_residual_convolution.2} parent=39 // pred_region
        %p5371 = scmp.lt.s32.totalorder %s21, 1
        %s5372 = scalar_select %p5371, %s21, 1
        %p5373 = scmp.lt.s32.totalorder %s22, 0
        %s5374 = scalar_select %p5373, %s22, 0
        %s5375 = sadd.s32 %s5374, %s5372
        %s5376 = smul.addr %s5375, 2
        %s5377 = scalar_lea.vmem %s3, %s5376
      $region48: #{post_residual_convolution.2} parent=39 // pred_fallthru
        _
    $region40: #{post_residual_convolution.2} parent=5 // pred_fallthru
      _
  $region6: #{post_residual_convolution.2} parent=0 // loop_footer
    %s14 = sadd.s32 1, %s10
  $region7: #{post_residual_convolution.2} parent=0 // loop_footer_branch
    %9 = sbr.rel target = $region3
  $region8: #{post_residual_convolution.2} parent=0 // loop_exit
    _

</llo_original>
